<compile_context>
chip_gen: v6e
topology: v6e:2x2x1
jax: 0.10.0
libtpu: 0.0.40
codegen_flags: <defaults>
</compile_context>

<pallas_src>
import functools

import jax
import jax.numpy as jnp
import numpy as np
from jax import lax
from jax.experimental import pallas as pl
from jax.experimental.pallas import tpu as pltpu

# Safe on all of v5e / v6e (128 MiB physical) and v7x (64 MiB per TC).
_VMEM_LIMIT_BYTES = 48 * 1024 * 1024


def _round_up(x, m):
    return (x + m - 1) // m * m


def _pick_row_tile(h_out, w_row, target_rows):
    """Largest divisor TH of h_out with TH*w_row <= target_rows.
    w_row is already a multiple of 8, so any TH gives sublane-aligned tiles.
    Fallback TH=1 can still exceed the budget for huge W (accepted)."""
    cands = [d for d in range(1, h_out + 1) if h_out % d == 0]
    fit = [d for d in cands if d * w_row <= target_rows]
    return max(fit) if fit else 1


# ----------------------------------------------------------------------------
# Kernel 1: conv as shifted MXU matmuls (strip trick) + fused partial BN stats
# ----------------------------------------------------------------------------
def _conv_stats_kernel(x_ref, w_ref, mask_ref, y_ref, stats_ref, acc_ref, *,
                       tap_offsets, tile_rows):
    # x_ref:     (1, Mflat, XCh)        bf16  whole flattened padded image (batch n)
    # w_ref:     (n_taps, XCh, CoutT)   bf16  resident weights (one Cout tile)
    # mask_ref:  (tile_rows, 1)         f32   1.0 on valid output pixels
    # y_ref:     (1, tile_rows, CoutT)  bf16 out  conv output tile (lane-dense)
    # stats_ref: (1, 1, 2, CoutT)       f32 out   per-tile [sum, sum_sq]
    # acc_ref:   (tile_rows, CoutT)     f32 scratch accumulator
    row0 = pl.multiple_of(pl.program_id(2) * tile_rows, 8)

    for idx, off in enumerate(tap_offsets):
        start = row0 + off
        if off % 8 == 0:
            start = pl.multiple_of(start, 8)
        lhs = x_ref[0, pl.ds(start, tile_rows), :]            # (rows, XCh) bf16
        part = jnp.dot(lhs, w_ref[idx], preferred_element_type=jnp.float32)
        if idx == 0:
            acc_ref[...] = part         # first tap initializes the scratch
        else:
            acc_ref[...] += part        # in-place accumulate (MRB-friendly on v7x)

    acc = acc_ref[...]                                          # f32

    # Partial BatchNorm statistics over *valid* pixels only, from the f32 acc
    # (before the bf16 cast of y, so stats precision is unchanged).
    valid = mask_ref[...]                                       # (tile_rows, 1)
    yv = acc * valid
    stats_ref[0, 0, 0:1, :] = jnp.sum(yv, axis=0, keepdims=True)
    stats_ref[0, 0, 1:2, :] = jnp.sum(yv * acc, axis=0, keepdims=True)

    y_ref[0] = acc.astype(y_ref.dtype)                          # bf16 store


# ----------------------------------------------------------------------------
# Kernel 2: folded BatchNorm apply (+ ReLU):  out = max(y*scale + shift, 0)
# ----------------------------------------------------------------------------
def _bn_apply_kernel(y_ref, scale_ref, shift_ref, o_ref, *, relu):
    z = y_ref[...].astype(jnp.float32) * scale_ref[...] + shift_ref[...]
    if relu:
        z = jnp.maximum(z, 0.0)
    o_ref[...] = z.astype(o_ref.dtype)


# ----------------------------------------------------------------------------
# Channel-last core (no layout transposes inside the hot path)
# ----------------------------------------------------------------------------
def conv_block_forward_nhwc(x_nhwc, weight, bias, gamma, beta, *,
                            relu=True, eps=1e-5, target_rows=2048):
    """x_nhwc: (N, H, W, Cin); weight: (Cout, Cin, K, K) (PyTorch OIHW).
    Returns (N, Ho, Wo, Cout) float32.

    `bias` is accepted for API parity but unused: a per-channel constant is
    exactly cancelled by the training-mode BatchNorm mean subtraction.
    Sweep `target_rows` per TPU generation (v6e/v5e: up to ~4096; v7x: ~1024)."""
    del bias
    N, H, W, Cin = x_nhwc.shape
    Cout, _, K, _ = weight.shape
    pad = 1 if K == 3 else 0
    Ho, Wo = H + 2 * pad - K + 1, W + 2 * pad - K + 1
    Hp, Wp = H + 2 * pad, W + 2 * pad
    w_row = _round_up(Wp, 8)           # padded flat row stride (sublane-aligned taps)

    cin_p = _round_up(Cin, 8)          # sublane-align the contraction dim
    cout_p = _round_up(Cout, 128)      # lane-dense MXU N dim / stores
    cout_tile = 256 if cout_p % 256 == 0 else 128
    cout_tiles = cout_p // cout_tile

    fold_w = (K * cin_p) <= 128        # fold width taps into the contraction?

    if fold_w:
        # x_pad width w_row + K - 1 so every kj column shift stays in bounds.
        x_pad = jnp.pad(
            x_nhwc,
            ((0, 0), (pad, pad), (pad, pad + (w_row - Wp) + (K - 1)),
             (0, cin_p - Cin)))
        cols = [x_pad[:, :, kj:kj + w_row, :] for kj in range(K)]
        x_fold = jnp.concatenate(cols, axis=-1)          # (N, Hp, w_row, K*cin_p)
        xch = K * cin_p
        m_flat = Hp * w_row
        x_flat = x_fold.reshape(N, m_flat, xch).astype(jnp.bfloat16)
        tap_offsets = tuple(ki * w_row for ki in range(K))
        # weight (Cout, Cin, K, K) -> (K, K*cin_p, cout_p)
        w_k = weight.transpose(2, 3, 1, 0)               # (Kh, Kw, Cin, Cout)
        w_k = jnp.pad(w_k, ((0, 0), (0, 0), (0, cin_p - Cin), (0, cout_p - Cout)))
        w_mat = w_k.reshape(K, K * cin_p, cout_p).astype(jnp.bfloat16)
        kch, n_taps = K * cin_p, K
    else:
        # Original K*K strip scheme (MXU-optimal for large Cin); one extra
        # bottom row keeps the largest shifted window in-bounds.
        x_pad = jnp.pad(
            x_nhwc,
            ((0, 0), (pad, pad + 1), (pad, pad + (w_row - Wp)),
             (0, cin_p - Cin)))
        xch = cin_p
        m_flat = (Hp + 1) * w_row
        x_flat = x_pad.reshape(N, m_flat, xch).astype(jnp.bfloat16)
        tap_offsets = tuple(ki * w_row + kj for ki in range(K) for kj in range(K))
        w_mat = weight.transpose(2, 3, 1, 0).reshape(K * K, Cin, Cout)
        w_mat = jnp.pad(w_mat, ((0, 0), (0, cin_p - Cin), (0, cout_p - Cout)))
        w_mat = w_mat.astype(jnp.bfloat16)
        kch, n_taps = cin_p, K * K

    # --- row tiling over the flattened (Ho*w_row) output rows ---
    th = _pick_row_tile(Ho, w_row, target_rows)
    tile_rows = th * w_row
    num_row_tiles = Ho // th
    m_rows = Ho * w_row                # == num_row_tiles * tile_rows

    # valid-pixel mask for one row tile (pattern is periodic with w_row)
    mask = (jnp.arange(tile_rows) % w_row < Wo).astype(jnp.float32).reshape(tile_rows, 1)

    conv_kernel = functools.partial(
        _conv_stats_kernel, tap_offsets=tap_offsets, tile_rows=tile_rows)

    y, stats = pl.pallas_call(
        conv_kernel,
        out_shape=(
            jax.ShapeDtypeStruct((N, m_rows, cout_p), jnp.bfloat16),
            jax.ShapeDtypeStruct((N, num_row_tiles, 2, cout_p), jnp.float32),
        ),
        grid_spec=pltpu.PrefetchScalarGridSpec(
            num_scalar_prefetch=0,
            # Row tiles innermost so the (slow-changing) weight block only
            # re-DMAs when the Cout block changes.
            grid=(N, cout_tiles, num_row_tiles),
            in_specs=[
                # whole flattened padded image for batch n (changes only with n)
                pl.BlockSpec((1, m_flat, xch), lambda n, c, t: (n, 0, 0),
                             pipeline_mode=pl.Buffered(1)),
                # one Cout tile of the weights (changes only with c)
                pl.BlockSpec((n_taps, kch, cout_tile), lambda n, c, t: (0, 0, c),
                             pipeline_mode=pl.Buffered(1)),
                # per-tile valid mask, grid-constant
                pl.BlockSpec((tile_rows, 1), lambda n, c, t: (0, 0),
                             pipeline_mode=pl.Buffered(1)),
            ],
            out_specs=(
                pl.BlockSpec((1, tile_rows, cout_tile), lambda n, c, t: (n, t, c)),
                pl.BlockSpec((1, 1, 2, cout_tile), lambda n, c, t: (n, t, 0, c)),
            ),
            scratch_shapes=[pltpu.VMEM((tile_rows, cout_tile), jnp.float32)],
        ),
        compiler_params=pltpu.CompilerParams(
            dimension_semantics=("parallel", "parallel", "parallel"),
            vmem_limit_bytes=_VMEM_LIMIT_BYTES),
    )(x_flat, w_mat, mask)

    # --- O(Cout) fold in plain JAX: scale = g*rsqrt(var+eps), shift = b - mean*scale
    count = jnp.float32(N * Ho * Wo)
    s = jnp.sum(stats, axis=(0, 1))                       # (2, cout_p), f32 accum
    mean = s[0] / count
    var = jnp.maximum(s[1] / count - mean * mean, 0.0)    # biased (training) var
    gamma_p = jnp.pad(gamma.astype(jnp.float32), (0, cout_p - Cout),
                      constant_values=1.0)
    beta_p = jnp.pad(beta.astype(jnp.float32), (0, cout_p - Cout))
    inv = lax.rsqrt(var + eps)     # padded lanes: var=0 -> scale~rsqrt(eps); y=0 there
    scale_v = gamma_p * inv
    shift_v = beta_p - mean * scale_v
    scale = scale_v.reshape(1, 1, cout_p)
    shift = shift_v.reshape(1, 1, cout_p)

    # --- pass 2: tiled, lane-dense y*scale + shift (+ ReLU), in-place over y ---
    apply_kernel = functools.partial(_bn_apply_kernel, relu=relu)
    y_norm = pl.pallas_call(
        apply_kernel,
        out_shape=jax.ShapeDtypeStruct((N, m_rows, cout_p), jnp.bfloat16),
        grid=(N, cout_tiles, num_row_tiles),
        in_specs=[
            pl.BlockSpec((1, tile_rows, cout_tile), lambda n, c, t: (n, t, c)),
            pl.BlockSpec((1, 1, cout_tile), lambda n, c, t: (0, 0, c)),
            pl.BlockSpec((1, 1, cout_tile), lambda n, c, t: (0, 0, c)),
        ],
        out_specs=pl.BlockSpec((1, tile_rows, cout_tile), lambda n, c, t: (n, t, c)),
        input_output_aliases={0: 0},   # reuse y's HBM buffer for the output
        compiler_params=pltpu.CompilerParams(
            dimension_semantics=("parallel", "parallel", "parallel"),
            vmem_limit_bytes=_VMEM_LIMIT_BYTES),
    )(y, scale, shift)

    # Drop the junk padding columns / padded channels; upcast for the NCHW API.
    out = y_norm.reshape(N, Ho, w_row, cout_p)[:, :, :Wo, :Cout]
    return out.astype(jnp.float32)


# ----------------------------------------------------------------------------
# PyTorch-layout wrapper (NCHW in / NCHW out, matching the nn.Module spec)
# ----------------------------------------------------------------------------
def conv_block_forward(x_nchw, weight, bias, gamma, beta, *,
                       relu=True, target_rows=2048):
    out_nhwc = conv_block_forward_nhwc(
        jnp.transpose(x_nchw, (0, 2, 3, 1)), weight, bias, gamma, beta,
        relu=relu, target_rows=target_rows)
    return jnp.transpose(out_nhwc, (0, 3, 1, 2))


# ----------------------------------------------------------------------------
# Pure-JAX reference (PyTorch ConvBlock.forward, training-mode BN).
# Inputs are rounded to bf16 like the kernel path (both accumulate in f32).
# ----------------------------------------------------------------------------
def conv_block_reference(x_nchw, weight, bias, gamma, beta, *, relu=True):
    xb = x_nchw.astype(jnp.bfloat16).astype(jnp.float32)
    wb = weight.astype(jnp.bfloat16).astype(jnp.float32)
    K = weight.shape[-1]
    pad = 1 if K == 3 else 0
    y = lax.conv_general_dilated(
        xb, wb, window_strides=(1, 1), padding=((pad, pad), (pad, pad)),
        dimension_numbers=("NCHW", "OIHW", "NCHW"))
    y = y + bias.reshape(1, -1, 1, 1)
    mean = jnp.mean(y, axis=(0, 2, 3), keepdims=True)
    var = jnp.mean((y - mean) ** 2, axis=(0, 2, 3), keepdims=True)
    y = (y - mean) * lax.rsqrt(var + 1e-5)
    y = y * gamma.reshape(1, -1, 1, 1) + beta.reshape(1, -1, 1, 1)
    return jnp.maximum(y, 0.0) if relu else y


if __name__ == "__main__":
    # Small shapes: batch=2, in_channels=4, out_channels=8, spatial=16, kernel=3
    N, Cin, Cout, H, W, K = 2, 4, 8, 16, 16, 3

    key = jax.random.PRNGKey(0)
    kx, kw, kb = jax.random.split(key, 3)

    x = jax.random.normal(kx, (N, Cin, H, W), dtype=jnp.float32)

    # kaiming_normal_(mode='fan_out', nonlinearity='relu'): std = sqrt(2 / (Cout*K*K))
    fan_out = Cout * K * K
    w = jax.random.normal(kw, (Cout, Cin, K, K), dtype=jnp.float32) * jnp.sqrt(2.0 / fan_out)
    # conv bias: PyTorch default uniform(-1/sqrt(fan_in), 1/sqrt(fan_in))
    fan_in = Cin * K * K
    b = jax.random.uniform(kb, (Cout,), dtype=jnp.float32,
                           minval=-1.0 / np.sqrt(fan_in), maxval=1.0 / np.sqrt(fan_in))
    # BatchNorm affine params (PyTorch default: gamma=1, beta=0)
    gamma = jnp.ones((Cout,), dtype=jnp.float32)
    beta = jnp.zeros((Cout,), dtype=jnp.float32)

    ref = conv_block_reference(x, w, b, gamma, beta, relu=True)

    fwd = jax.jit(conv_block_forward, static_argnames=("relu", "target_rows"))

    # Single row tile (whole image in one grid step).
    out = jax.block_until_ready(fwd(x, w, b, gamma, beta, relu=True))
    np.testing.assert_allclose(np.asarray(out), np.asarray(ref), rtol=3e-2, atol=3e-2)

    # Multi row-tile path (dynamic row offsets, 4 tiles, aliased pass-2 output).
    out_tiled = jax.block_until_ready(
        fwd(x, w, b, gamma, beta, relu=True, target_rows=96))
    np.testing.assert_allclose(np.asarray(out_tiled), np.asarray(ref), rtol=3e-2, atol=3e-2)

    print("KERNEL_OK")
</pallas_src>

<mosaic_0001>
module attributes {stable_mosaic.version = 11 : i64} {
  func.func @_conv_stats_kernel(%arg0: i32, %arg1: i32, %arg2: i32, %arg3: memref<1x432x24xbf16, #tpu.memory_space<vmem>>, %arg4: memref<3x24x128xbf16, #tpu.memory_space<vmem>>, %arg5: memref<384x1xf32, #tpu.memory_space<vmem>>, %arg6: memref<1x384x128xbf16, #tpu.memory_space<vmem>>, %arg7: memref<1x1x2x128xf32, #tpu.memory_space<vmem>>, %arg8: memref<384x128xf32, #tpu.memory_space<vmem>>) attributes {dimension_semantics = [#tpu.dimension_semantics<parallel>, #tpu.dimension_semantics<parallel>, #tpu.dimension_semantics<parallel>], iteration_bounds = array<i64: 2, 1, 1>, scalar_prefetch = 0 : i64, scratch_operands = 1 : i64, tpu.core_type = #tpu.core_type<tc>, window_params = [{pipeline_mode = #tpu.pipeline_mode<synchronous>, transform_indices = @transform_0, window_bounds = array<i64: 1, 432, 24>}, {pipeline_mode = #tpu.pipeline_mode<synchronous>, transform_indices = @transform_1, window_bounds = array<i64: 3, 24, 128>}, {pipeline_mode = #tpu.pipeline_mode<synchronous>, transform_indices = @transform_2, window_bounds = array<i64: 384, 1>}, {transform_indices = @transform_3, window_bounds = array<i64: 1, 384, 128>}, {transform_indices = @transform_4, window_bounds = array<i64: 1, 1, 2, 128>}]} {
    %c384_i32 = arith.constant 384 : i32
    %0 = arith.muli %arg2, %c384_i32 : i32
    %1 = tpu.assume_multiple %0, 8 : i32
    %c0_i32 = arith.constant 0 : i32
    %2 = arith.addi %1, %c0_i32 : i32
    %3 = tpu.assume_multiple %2, 8 : i32
    %c0 = arith.constant 0 : index
    %4 = arith.index_cast %3 : i32 to index
    %c0_0 = arith.constant 0 : index
    %5 = vector.load %arg3[%c0, %4, %c0_0] : memref<1x432x24xbf16, #tpu.memory_space<vmem>>, vector<1x384x24xbf16>
    %6 = vector.shape_cast %5 : vector<1x384x24xbf16> to vector<384x24xbf16>
    %c0_1 = arith.constant 0 : index
    %c0_2 = arith.constant 0 : index
    %c0_3 = arith.constant 0 : index
    %7 = vector.load %arg4[%c0_1, %c0_2, %c0_3] : memref<3x24x128xbf16, #tpu.memory_space<vmem>>, vector<1x24x128xbf16>
    %8 = vector.shape_cast %7 : vector<1x24x128xbf16> to vector<24x128xbf16>
    %cst = arith.constant dense<0.000000e+00> : vector<384x128xf32>
    %9 = tpu.matmul %6, %8, %cst {dimension_numbers = #tpu.dot_dimension_numbers<[1], [0], [0], [1], [0, 0, 1, 1], [], []>} : vector<384x24xbf16>, vector<24x128xbf16>, vector<384x128xf32> -> vector<384x128xf32>
    %c0_4 = arith.constant 0 : index
    %c0_5 = arith.constant 0 : index
    %10 = vector.load %arg8[%c0_4, %c0_5] : memref<384x128xf32, #tpu.memory_space<vmem>>, vector<384x128xf32>
    tpu.vector_store %arg8[%c0_4, %c0_5], %9 {strides = array<i32>} : memref<384x128xf32, #tpu.memory_space<vmem>>, vector<384x128xf32>,
    %c24_i32 = arith.constant 24 : i32
    %11 = arith.addi %1, %c24_i32 : i32
    %12 = tpu.assume_multiple %11, 8 : i32
    %c0_6 = arith.constant 0 : index
    %13 = arith.index_cast %12 : i32 to index
    %c0_7 = arith.constant 0 : index
    %14 = vector.load %arg3[%c0_6, %13, %c0_7] : memref<1x432x24xbf16, #tpu.memory_space<vmem>>, vector<1x384x24xbf16>
    %15 = vector.shape_cast %14 : vector<1x384x24xbf16> to vector<384x24xbf16>
    %c1 = arith.constant 1 : index
    %c0_8 = arith.constant 0 : index
    %c0_9 = arith.constant 0 : index
    %16 = vector.load %arg4[%c1, %c0_8, %c0_9] : memref<3x24x128xbf16, #tpu.memory_space<vmem>>, vector<1x24x128xbf16>
    %17 = vector.shape_cast %16 : vector<1x24x128xbf16> to vector<24x128xbf16>
    %cst_10 = arith.constant dense<0.000000e+00> : vector<384x128xf32>
    %18 = tpu.matmul %15, %17, %cst_10 {dimension_numbers = #tpu.dot_dimension_numbers<[1], [0], [0], [1], [0, 0, 1, 1], [], []>} : vector<384x24xbf16>, vector<24x128xbf16>, vector<384x128xf32> -> vector<384x128xf32>
    %c0_11 = arith.constant 0 : index
    %c0_12 = arith.constant 0 : index
    %19 = vector.load %arg8[%c0_11, %c0_12] : memref<384x128xf32, #tpu.memory_space<vmem>>, vector<384x128xf32>
    %20 = arith.addf %19, %18 : vector<384x128xf32>
    %c0_13 = arith.constant 0 : index
    %c0_14 = arith.constant 0 : index
    %21 = vector.load %arg8[%c0_13, %c0_14] : memref<384x128xf32, #tpu.memory_space<vmem>>, vector<384x128xf32>
    tpu.vector_store %arg8[%c0_13, %c0_14], %20 {strides = array<i32>} : memref<384x128xf32, #tpu.memory_space<vmem>>, vector<384x128xf32>,
    %c48_i32 = arith.constant 48 : i32
    %22 = arith.addi %1, %c48_i32 : i32
    %23 = tpu.assume_multiple %22, 8 : i32
    %c0_15 = arith.constant 0 : index
    %24 = arith.index_cast %23 : i32 to index
    %c0_16 = arith.constant 0 : index
    %25 = vector.load %arg3[%c0_15, %24, %c0_16] : memref<1x432x24xbf16, #tpu.memory_space<vmem>>, vector<1x384x24xbf16>
    %26 = vector.shape_cast %25 : vector<1x384x24xbf16> to vector<384x24xbf16>
    %c2 = arith.constant 2 : index
    %c0_17 = arith.constant 0 : index
    %c0_18 = arith.constant 0 : index
    %27 = vector.load %arg4[%c2, %c0_17, %c0_18] : memref<3x24x128xbf16, #tpu.memory_space<vmem>>, vector<1x24x128xbf16>
    %28 = vector.shape_cast %27 : vector<1x24x128xbf16> to vector<24x128xbf16>
    %cst_19 = arith.constant dense<0.000000e+00> : vector<384x128xf32>
    %29 = tpu.matmul %26, %28, %cst_19 {dimension_numbers = #tpu.dot_dimension_numbers<[1], [0], [0], [1], [0, 0, 1, 1], [], []>} : vector<384x24xbf16>, vector<24x128xbf16>, vector<384x128xf32> -> vector<384x128xf32>
    %c0_20 = arith.constant 0 : index
    %c0_21 = arith.constant 0 : index
    %30 = vector.load %arg8[%c0_20, %c0_21] : memref<384x128xf32, #tpu.memory_space<vmem>>, vector<384x128xf32>
    %31 = arith.addf %30, %29 : vector<384x128xf32>
    %c0_22 = arith.constant 0 : index
    %c0_23 = arith.constant 0 : index
    %32 = vector.load %arg8[%c0_22, %c0_23] : memref<384x128xf32, #tpu.memory_space<vmem>>, vector<384x128xf32>
    tpu.vector_store %arg8[%c0_22, %c0_23], %31 {strides = array<i32>} : memref<384x128xf32, #tpu.memory_space<vmem>>, vector<384x128xf32>,
    %c0_24 = arith.constant 0 : index
    %c0_25 = arith.constant 0 : index
    %33 = vector.load %arg8[%c0_24, %c0_25] : memref<384x128xf32, #tpu.memory_space<vmem>>, vector<384x128xf32>
    %c0_26 = arith.constant 0 : index
    %c0_27 = arith.constant 0 : index
    %34 = vector.load %arg5[%c0_26, %c0_27] : memref<384x1xf32, #tpu.memory_space<vmem>>, vector<384x1xf32>
    %35 = vector.broadcast %34 : vector<384x1xf32> to vector<384x128xf32>
    %36 = arith.mulf %33, %35 : vector<384x128xf32>
    %cst_28 = arith.constant dense<0.000000e+00> : vector<128xf32>
    %37 = vector.multi_reduction <add>, %36, %cst_28 [0] : vector<384x128xf32> to vector<128xf32>
    %38 = vector.shape_cast %37 : vector<128xf32> to vector<1x128xf32>
    %c0_29 = arith.constant 0 : index
    %c0_30 = arith.constant 0 : index
    %c0_31 = arith.constant 0 : index
    %c0_32 = arith.constant 0 : index
    %39 = vector.load %arg7[%c0_29, %c0_30, %c0_31, %c0_32] : memref<1x1x2x128xf32, #tpu.memory_space<vmem>>, vector<1x1x1x128xf32>
    %40 = vector.shape_cast %39 : vector<1x1x1x128xf32> to vector<1x128xf32>
    %41 = vector.shape_cast %38 : vector<1x128xf32> to vector<1x1x1x128xf32>
    tpu.vector_store %arg7[%c0_29, %c0_30, %c0_31, %c0_32], %41 {strides = array<i32>} : memref<1x1x2x128xf32, #tpu.memory_space<vmem>>, vector<1x1x1x128xf32>,
    %42 = arith.mulf %36, %33 : vector<384x128xf32>
    %cst_33 = arith.constant dense<0.000000e+00> : vector<128xf32>
    %43 = vector.multi_reduction <add>, %42, %cst_33 [0] : vector<384x128xf32> to vector<128xf32>
    %44 = vector.shape_cast %43 : vector<128xf32> to vector<1x128xf32>
    %c0_34 = arith.constant 0 : index
    %c0_35 = arith.constant 0 : index
    %c1_36 = arith.constant 1 : index
    %c0_37 = arith.constant 0 : index
    %45 = vector.load %arg7[%c0_34, %c0_35, %c1_36, %c0_37] : memref<1x1x2x128xf32, #tpu.memory_space<vmem>>, vector<1x1x1x128xf32>
    %46 = vector.shape_cast %45 : vector<1x1x1x128xf32> to vector<1x128xf32>
    %47 = vector.shape_cast %44 : vector<1x128xf32> to vector<1x1x1x128xf32>
    tpu.vector_store %arg7[%c0_34, %c0_35, %c1_36, %c0_37], %47 {strides = array<i32>} : memref<1x1x2x128xf32, #tpu.memory_space<vmem>>, vector<1x1x1x128xf32>,
    %48 = arith.truncf %33 : vector<384x128xf32> to vector<384x128xbf16>
    %c0_38 = arith.constant 0 : index
    %c0_39 = arith.constant 0 : index
    %c0_40 = arith.constant 0 : index
    %49 = vector.load %arg6[%c0_38, %c0_39, %c0_40] : memref<1x384x128xbf16, #tpu.memory_space<vmem>>, vector<1x384x128xbf16>
    %50 = vector.shape_cast %49 : vector<1x384x128xbf16> to vector<384x128xbf16>
    %51 = vector.shape_cast %48 : vector<384x128xbf16> to vector<1x384x128xbf16>
    tpu.vector_store %arg6[%c0_38, %c0_39, %c0_40], %51 {strides = array<i32>} : memref<1x384x128xbf16, #tpu.memory_space<vmem>>, vector<1x384x128xbf16>,
    return
  }
  func.func @transform_0(%arg0: i32, %arg1: i32, %arg2: i32) -> (i32, i32, i32) {
    %c0_i32 = arith.constant 0 : i32
    %c0_i32_0 = arith.constant 0 : i32
    %c0_i32_1 = arith.constant 0 : i32
    return %arg0, %c0_i32, %c0_i32_0 : i32, i32, i32
  }
  func.func @transform_1(%arg0: i32, %arg1: i32, %arg2: i32) -> (i32, i32, i32) {
    %c0_i32 = arith.constant 0 : i32
    %c0_i32_0 = arith.constant 0 : i32
    %c0_i32_1 = arith.constant 0 : i32
    return %c0_i32, %c0_i32_0, %arg1 : i32, i32, i32
  }
  func.func @transform_2(%arg0: i32, %arg1: i32, %arg2: i32) -> (i32, i32) {
    %c0_i32 = arith.constant 0 : i32
    %c0_i32_0 = arith.constant 0 : i32
    %c0_i32_1 = arith.constant 0 : i32
    return %c0_i32, %c0_i32_0 : i32, i32
  }
  func.func @transform_3(%arg0: i32, %arg1: i32, %arg2: i32) -> (i32, i32, i32) {
    %c0_i32 = arith.constant 0 : i32
    return %arg0, %arg2, %arg1 : i32, i32, i32
  }
  func.func @transform_4(%arg0: i32, %arg1: i32, %arg2: i32) -> (i32, i32, i32, i32) {
    %c0_i32 = arith.constant 0 : i32
    %c0_i32_0 = arith.constant 0 : i32
    return %arg0, %arg2, %c0_i32, %arg1 : i32, i32, i32, i32
  }
}

module attributes {stable_mosaic.version = 11 : i64} {
  func.func @_bn_apply_kernel(%arg0: i32, %arg1: i32, %arg2: i32, %arg3: memref<1x384x128xbf16, #tpu.memory_space<vmem>>, %arg4: memref<1x1x128xf32, #tpu.memory_space<vmem>>, %arg5: memref<1x1x128xf32, #tpu.memory_space<vmem>>, %arg6: memref<1x384x128xbf16, #tpu.memory_space<vmem>>) attributes {dimension_semantics = [#tpu.dimension_semantics<parallel>, #tpu.dimension_semantics<parallel>, #tpu.dimension_semantics<parallel>], iteration_bounds = array<i64: 2, 1, 1>, scalar_prefetch = 0 : i64, scratch_operands = 0 : i64, tpu.core_type = #tpu.core_type<tc>, window_params = [{transform_indices = @transform_0, window_bounds = array<i64: 1, 384, 128>}, {transform_indices = @transform_1, window_bounds = array<i64: 1, 1, 128>}, {transform_indices = @transform_2, window_bounds = array<i64: 1, 1, 128>}, {transform_indices = @transform_3, window_bounds = array<i64: 1, 384, 128>}]} {
    %c0 = arith.constant 0 : index
    %c0_0 = arith.constant 0 : index
    %c0_1 = arith.constant 0 : index
    %0 = vector.load %arg3[%c0, %c0_0, %c0_1] : memref<1x384x128xbf16, #tpu.memory_space<vmem>>, vector<1x384x128xbf16>
    %1 = arith.extf %0 : vector<1x384x128xbf16> to vector<1x384x128xf32>
    %c0_2 = arith.constant 0 : index
    %c0_3 = arith.constant 0 : index
    %c0_4 = arith.constant 0 : index
    %2 = vector.load %arg4[%c0_2, %c0_3, %c0_4] : memref<1x1x128xf32, #tpu.memory_space<vmem>>, vector<1x1x128xf32>
    %3 = vector.broadcast %2 : vector<1x1x128xf32> to vector<1x384x128xf32>
    %4 = arith.mulf %1, %3 : vector<1x384x128xf32>
    %c0_5 = arith.constant 0 : index
    %c0_6 = arith.constant 0 : index
    %c0_7 = arith.constant 0 : index
    %5 = vector.load %arg5[%c0_5, %c0_6, %c0_7] : memref<1x1x128xf32, #tpu.memory_space<vmem>>, vector<1x1x128xf32>
    %6 = vector.broadcast %5 : vector<1x1x128xf32> to vector<1x384x128xf32>
    %7 = arith.addf %4, %6 : vector<1x384x128xf32>
    %cst = arith.constant 0.000000e+00 : f32
    %8 = vector.broadcast %cst : f32 to vector<1x384x128xf32>
    %9 = arith.maximumf %7, %8 : vector<1x384x128xf32>
    %10 = arith.truncf %9 : vector<1x384x128xf32> to vector<1x384x128xbf16>
    %c0_8 = arith.constant 0 : index
    %c0_9 = arith.constant 0 : index
    %c0_10 = arith.constant 0 : index
    %11 = vector.load %arg6[%c0_8, %c0_9, %c0_10] : memref<1x384x128xbf16, #tpu.memory_space<vmem>>, vector<1x384x128xbf16>
    tpu.vector_store %arg6[%c0_8, %c0_9, %c0_10], %10 {strides = array<i32>} : memref<1x384x128xbf16, #tpu.memory_space<vmem>>, vector<1x384x128xbf16>,
    return
  }
  func.func @transform_0(%arg0: i32, %arg1: i32, %arg2: i32) -> (i32, i32, i32) {
    %c0_i32 = arith.constant 0 : i32
    return %arg0, %arg2, %arg1 : i32, i32, i32
  }
  func.func @transform_1(%arg0: i32, %arg1: i32, %arg2: i32) -> (i32, i32, i32) {
    %c0_i32 = arith.constant 0 : i32
    %c0_i32_0 = arith.constant 0 : i32
    %c0_i32_1 = arith.constant 0 : i32
    return %c0_i32, %c0_i32_0, %arg1 : i32, i32, i32
  }
  func.func @transform_2(%arg0: i32, %arg1: i32, %arg2: i32) -> (i32, i32, i32) {
    %c0_i32 = arith.constant 0 : i32
    %c0_i32_0 = arith.constant 0 : i32
    %c0_i32_1 = arith.constant 0 : i32
    return %c0_i32, %c0_i32_0, %arg1 : i32, i32, i32
  }
  func.func @transform_3(%arg0: i32, %arg1: i32, %arg2: i32) -> (i32, i32, i32) {
    %c0_i32 = arith.constant 0 : i32
    return %arg0, %arg2, %arg1 : i32, i32, i32
  }
}

</mosaic_0001>

<llo_original>
// kernel: conv_block_forward.3
$region0: #{conv_block_forward.3}
  #allocation0 [shape = 'u32[]', space=smem, size = 0x4, offset = 0x4, fixed_abs, tag = 'smem constant byte address 0x4 - core index']
  #allocation1 [shape = 'u32[144,128]{1,0:T(1,128)}', space=vmem, size = 0x12000, scoped, tag = 'internal scratch']
  %s0 = inlined_call_operand.vmem [shape: bf16[2,384,128], index: 0, kind: input, shape index: {}, may-alias: {0,3}]
  %s1 = inlined_call_operand.vmem [shape: f32[1,1,128], index: 1, kind: input, shape index: {}]
  %s2 = inlined_call_operand.vmem [shape: f32[1,1,128], index: 2, kind: input, shape index: {}]
  %s3 = inlined_call_operand.vmem [shape: bf16[2,384,128], index: 3, kind: output, shape index: {}, may-alias: {0,3}]
  %s4 = sld [smem:[#allocation0]]
  $region45: #{conv_block_forward.3} parent=0
    _
  %s6 = ssub.s32 1, %s4
  %s7 = scalar_select 0, %s6, %s4
  loop: start=0, step=1, limit=4
  $region2: #{conv_block_forward.3} parent=0 // loop_pre_header
    _
  $region3: #{conv_block_forward.3} parent=0 // loop_header
    %s9 = sphi 0, %s13
    %p10 = scmp.ge.s32.totalorder %s9, 4
    %s16 = sphi 0, %s35
    %s17 = sphi 0, %s31
    %s18 = sphi 0, %s27
    %s19 = sphi 0, %s16
    %s20 = sphi 0, %s17
    %s21 = sphi 0, %s18
    %s22 = sphi 0, %s19
    %s23 = sphi 0, %s20
    %s24 = sphi 0, %s21
    %s42 = sphi 0, %s44
    %s45 = sphi 0, %s42
    %s46 = sphi 0, %s45
    %s62 = sphi 0, %s46
    %s68 = sphi 0, %s70
    %s71 = sphi 0, %s68
    %s72 = sphi 0, %s71
    %s88 = sphi 0, %s72
    %s94 = sphi 0, %s96
    %s97 = sphi 0, %s94
    %s98 = sphi 0, %s97
    %s114 = sphi 0, %s98
    %s124 = sphi 0, %s126
    %s127 = sphi 0, %s124
    %s128 = sphi 0, %s127
    %s144 = sphi 0, %s128
  $region4: #{conv_block_forward.3} parent=0 // loop_header_branch
    %12 = sbr.rel (%p10) target = $region8
  $region5: #{conv_block_forward.3} parent=0 // loop_body
    %s14 = ssub.s32 %s9, 1
    %s15 = ssub.s32 %s9, 2
    %s25 = sadd.s32 1, %s18
    %p26 = scmp.ge.s32.totalorder %s25, 1
    %s27 = scalar_select %p26, 0, %s25
    %s28 = sadd.s32 1, %s17
    %s29 = scalar_select %p26, %s28, %s17
    %p30 = scmp.ge.s32.totalorder %s29, 1
    %s31 = scalar_select %p30, 0, %s29
    %s32 = sadd.s32 1, %s16
    %s33 = scalar_select %p30, %s32, %s16
    %p34 = scmp.ge.s32.totalorder %s33, 2
    %s35 = scalar_select %p34, 0, %s33
    %s36 = ssub.s32 %s16, %s35
    %s37 = ssub.s32 %s18, %s27
    %s38 = sor.u32 %s36, %s37
    %s39 = ssub.s32 %s17, %s31
    %s40 = sor.u32 %s38, %s39
    %p41 = scmp.eq.s32.totalorder %s40, 0
    %s43 = sadd.s32 %s42, 1
    %s44 = scalar_select %p41, %s42, %s43
    %p47 = pneg %p41
    %p48 = scmp.eq.s32.totalorder %s9, 1
    %p49 = por %p47, %p48
    %p50 = scmp.ne.s32.totalorder %s42, %s45
    %p51 = scmp.eq.s32.totalorder %s9, 0
    %p52 = por %p50, %p51
    %p53 = scmp.ne.s32.totalorder %s42, %s45
    %p54 = scmp.eq.s32.totalorder %s14, 1
    %p55 = por %p53, %p54
    %p56 = scmp.ne.s32.totalorder %s45, %s46
    %p57 = scmp.eq.s32.totalorder %s14, 0
    %p58 = por %p56, %p57
    %p59 = scmp.ne.s32.totalorder %s45, %s46
    %p60 = scmp.eq.s32.totalorder %s15, 1
    %p61 = por %p59, %p60
    %p63 = scmp.ne.s32.totalorder %s46, %s62
    %p64 = scmp.eq.s32.totalorder %s15, 0
    %p65 = por %p63, %p64
    %s66 = ssub.s32 %s17, %s31
    %p67 = scmp.eq.s32.totalorder %s66, 0
    %s69 = sadd.s32 %s68, 1
    %s70 = scalar_select %p67, %s68, %s69
    %p73 = pneg %p67
    %p74 = scmp.eq.s32.totalorder %s9, 1
    %p75 = por %p73, %p74
    %p76 = scmp.ne.s32.totalorder %s68, %s71
    %p77 = scmp.eq.s32.totalorder %s9, 0
    %p78 = por %p76, %p77
    %p79 = scmp.ne.s32.totalorder %s68, %s71
    %p80 = scmp.eq.s32.totalorder %s14, 1
    %p81 = por %p79, %p80
    %p82 = scmp.ne.s32.totalorder %s71, %s72
    %p83 = scmp.eq.s32.totalorder %s14, 0
    %p84 = por %p82, %p83
    %p85 = scmp.ne.s32.totalorder %s71, %s72
    %p86 = scmp.eq.s32.totalorder %s15, 1
    %p87 = por %p85, %p86
    %p89 = scmp.ne.s32.totalorder %s72, %s88
    %p90 = scmp.eq.s32.totalorder %s15, 0
    %p91 = por %p89, %p90
    %s92 = ssub.s32 %s17, %s31
    %p93 = scmp.eq.s32.totalorder %s92, 0
    %s95 = sadd.s32 %s94, 1
    %s96 = scalar_select %p93, %s94, %s95
    %p99 = pneg %p93
    %p100 = scmp.eq.s32.totalorder %s9, 1
    %p101 = por %p99, %p100
    %p102 = scmp.ne.s32.totalorder %s94, %s97
    %p103 = scmp.eq.s32.totalorder %s9, 0
    %p104 = por %p102, %p103
    %p105 = scmp.ne.s32.totalorder %s94, %s97
    %p106 = scmp.eq.s32.totalorder %s14, 1
    %p107 = por %p105, %p106
    %p108 = scmp.ne.s32.totalorder %s97, %s98
    %p109 = scmp.eq.s32.totalorder %s14, 0
    %p110 = por %p108, %p109
    %p111 = scmp.ne.s32.totalorder %s97, %s98
    %p112 = scmp.eq.s32.totalorder %s15, 1
    %p113 = por %p111, %p112
    %p115 = scmp.ne.s32.totalorder %s98, %s114
    %p116 = scmp.eq.s32.totalorder %s15, 0
    %p117 = por %p115, %p116
    %s118 = ssub.s32 %s16, %s35
    %s119 = ssub.s32 %s18, %s27
    %s120 = sor.u32 %s118, %s119
    %s121 = ssub.s32 %s17, %s31
    %s122 = sor.u32 %s120, %s121
    %p123 = scmp.eq.s32.totalorder %s122, 0
    %s125 = sadd.s32 %s124, 1
    %s126 = scalar_select %p123, %s124, %s125
    %p129 = pneg %p123
    %p130 = scmp.eq.s32.totalorder %s9, 1
    %p131 = por %p129, %p130
    %p132 = scmp.ne.s32.totalorder %s124, %s127
    %p133 = scmp.eq.s32.totalorder %s9, 0
    %p134 = por %p132, %p133
    %p135 = scmp.ne.s32.totalorder %s124, %s127
    %p136 = scmp.eq.s32.totalorder %s14, 1
    %p137 = por %p135, %p136
    %p138 = scmp.ne.s32.totalorder %s127, %s128
    %p139 = scmp.eq.s32.totalorder %s14, 0
    %p140 = por %p138, %p139
    %p141 = scmp.ne.s32.totalorder %s127, %s128
    %p142 = scmp.eq.s32.totalorder %s15, 1
    %p143 = por %p141, %p142
    %p145 = scmp.ne.s32.totalorder %s128, %s144
    %p146 = scmp.eq.s32.totalorder %s15, 0
    %p147 = por %p145, %p146
    %p148 = scmp.le.s32.totalorder 1, %s9
    %p149 = scmp.lt.s32.totalorder %s9, 3
    %p150 = pnand %p148, %p149
    %p151 = pneg %p150
    // Predicated region
    $region9: #{conv_block_forward.3} parent=5 // pred_check
      _
    $region10: #{conv_block_forward.3} parent=5 // pred_check_branch
      %153 = sbr.rel (%p150) target = $region12
    $region11: #{conv_block_forward.3} parent=5 // pred_region
      %s154 = ssub.s32 %s9, 1
      // Predicated region
      $region13: #{conv_block_forward.3} parent=11 // pred_check
        %p155 = pneg %p84
      $region14: #{conv_block_forward.3} parent=11 // pred_check_branch
        %157 = sbr.rel (%p155) target = $region16
      $region15: #{conv_block_forward.3} parent=11 // pred_region
        %p158 = scmp.lt.s32.totalorder %s20, 0
        %s159 = scalar_select %p158, %s20, 0
        %s160 = scalar_lea.vmem %s1, %s159
      $region16: #{conv_block_forward.3} parent=11 // pred_fallthru
        _
      // Predicated region
      $region17: #{conv_block_forward.3} parent=11 // pred_check
        %p161 = pneg %p110
      $region18: #{conv_block_forward.3} parent=11 // pred_check_branch
        %163 = sbr.rel (%p161) target = $region20
      $region19: #{conv_block_forward.3} parent=11 // pred_region
        %p164 = scmp.lt.s32.totalorder %s20, 0
        %s165 = scalar_select %p164, %s20, 0
        %s166 = scalar_lea.vmem %s2, %s165
      $region20: #{conv_block_forward.3} parent=11 // pred_fallthru
        _
    $region12: #{conv_block_forward.3} parent=5 // pred_fallthru
      _
    %p167 = scmp.lt.s32.totalorder %s9, 2
    // Predicated region
    $region21: #{conv_block_forward.3} parent=5 // pred_check
      %p168 = pneg %p167
    $region22: #{conv_block_forward.3} parent=5 // pred_check_branch
      %170 = sbr.rel (%p168) target = $region24
    $region23: #{conv_block_forward.3} parent=5 // pred_region
      // Predicated region
      $region25: #{conv_block_forward.3} parent=23 // pred_check
        %p171 = pneg %p52
      $region26: #{conv_block_forward.3} parent=23 // pred_check_branch
        %173 = sbr.rel (%p171) target = $region28
      $region27: #{conv_block_forward.3} parent=23 // pred_region
        %s174 = smul.u32 48, %s18
        %p175 = scmp.lt.s32.totalorder %s16, 1
        %s176 = scalar_select %p175, %s16, 1
        %p177 = scmp.lt.s32.totalorder %s174, 47
        %s178 = scalar_select %p177, %s174, 47
        %p179 = scmp.lt.s32.totalorder %s17, 0
        %s180 = scalar_select %p179, %s17, 0
        %s181 = sadd.s32 %s180, %s178
        %s182 = smul.addr %s176, 48
        %s183 = sadd.s32 %s181, %s182
        %s184 = smul.addr %s183, 4
        %s185 = scalar_lea.vmem %s0, %s184
        %s186 = smul.u32 48, %s18
      $region28: #{conv_block_forward.3} parent=23 // pred_fallthru
        _
    $region24: #{conv_block_forward.3} parent=5 // pred_fallthru
      _
    %p187 = scmp.le.s32.totalorder 1, %s9
    %p188 = scmp.lt.s32.totalorder %s9, 3
    %p189 = pnand %p187, %p188
    %p190 = pneg %p189
    // Predicated region
    $region29: #{conv_block_forward.3} parent=5 // pred_check
      _
    $region30: #{conv_block_forward.3} parent=5 // pred_check_branch
      %192 = sbr.rel (%p189) target = $region32
    $region31: #{conv_block_forward.3} parent=5 // pred_region
      %s193 = ssub.s32 %s9, 1
      %s194 = smul.u32 48, %s21
      %p195 = scmp.lt.s32.totalorder %s19, 1
      %s196 = scalar_select %p195, %s19, 1
      %p197 = scmp.lt.s32.totalorder %s194, 47
      %s198 = scalar_select %p197, %s194, 47
      %p199 = scmp.lt.s32.totalorder %s20, 0
      %s200 = scalar_select %p199, %s20, 0
      %s201 = sadd.s32 %s200, %s198
      %s202 = smul.addr %s196, 48
      %s203 = sadd.s32 %s201, %s202
      %s204 = smul.addr %s203, 4
      %s205 = scalar_lea.vmem %s0, %s204
      %p206 = pneg %p58
      %p207 = pneg %p55
      %p208 = scmp.lt.s32.totalorder %s20, 0
      %s209 = scalar_select %p208, %s20, 0
      %s210 = scalar_lea.vmem %s1, %s209
      %p211 = pneg %p84
      %p212 = pneg %p81
      %p213 = scmp.lt.s32.totalorder %s20, 0
      %s214 = scalar_select %p213, %s20, 0
      %s215 = scalar_lea.vmem %s2, %s214
      %p216 = pneg %p110
      %p217 = pneg %p107
      %p218 = pneg %p140
      %p219 = pneg %p137
      %s220 = smul.u32 48, %s21
      %p221 = scmp.lt.s32.totalorder %s19, 1
      %s222 = scalar_select %p221, %s19, 1
      %p223 = scmp.lt.s32.totalorder %s220, 47
      %s224 = scalar_select %p223, %s220, 47
      %p225 = scmp.lt.s32.totalorder %s20, 0
      %s226 = scalar_select %p225, %s20, 0
      %s227 = sadd.s32 %s226, %s224
      %s228 = smul.addr %s222, 48
      %s229 = sadd.s32 %s227, %s228
      %s230 = smul.addr %s229, 4
      %s231 = scalar_lea.vmem %s3, %s230
      %s232 = smul.u32 48, %s21
      %p233 = scmp.lt.s32.totalorder %s19, 1
      %s234 = scalar_select %p233, %s19, 1
      %p235 = scmp.lt.s32.totalorder %s232, 47
      %s236 = scalar_select %p235, %s232, 47
      %p237 = scmp.lt.s32.totalorder %s20, 0
      %s238 = scalar_select %p237, %s20, 0
      %s239 = sadd.s32 %s238, %s236
      %s240 = smul.addr %s234, 48
      %s241 = sadd.s32 %s239, %s240
      %s242 = smul.addr %s241, 4
      %s243 = scalar_lea.vmem %s0, %s242
      %s244 = smul.u32 48, %s21
      %p245 = scmp.lt.s32.totalorder %s20, 0
      %s246 = scalar_select %p245, %s20, 0
      %s247 = scalar_lea.vmem %s1, %s246
      %p248 = scmp.lt.s32.totalorder %s20, 0
      %s249 = scalar_select %p248, %s20, 0
      %s250 = scalar_lea.vmem %s2, %s249
      %s251 = smul.u32 48, %s21
      %p252 = scmp.lt.s32.totalorder %s19, 1
      %s253 = scalar_select %p252, %s19, 1
      %p254 = scmp.lt.s32.totalorder %s251, 47
      %s255 = scalar_select %p254, %s251, 47
      %p256 = scmp.lt.s32.totalorder %s20, 0
      %s257 = scalar_select %p256, %s20, 0
      %s258 = sadd.s32 %s257, %s255
      %s259 = smul.addr %s253, 48
      %s260 = sadd.s32 %s258, %s259
      %s261 = smul.addr %s260, 4
      %s262 = scalar_lea.vmem %s3, %s261
      %s263 = smul.u32 48, %s21
      %v264 = vld [vmem:[%s243] sm:$0xf]
      %v265 = vld [vmem:[%s243 + $0x4] sm:$0xf]
      %v266 = vld [vmem:[%s243 + $0x8] sm:$0xf]
      %v267 = vld [vmem:[%s243 + $0xc] sm:$0xf]
      %v268 = vld [vmem:[%s243 + $0x10] sm:$0xf]
      %v269 = vld [vmem:[%s243 + $0x14] sm:$0xf]
      %v270 = vld [vmem:[%s243 + $0x18] sm:$0xf]
      %v271 = vld [vmem:[%s243 + $0x1c] sm:$0xf]
      %v272 = vld [vmem:[%s243 + $0x20] sm:$0xf]
      %v273 = vld [vmem:[%s243 + $0x24] sm:$0xf]
      %v274 = vld [vmem:[%s243 + $0x28] sm:$0xf]
      %v275 = vld [vmem:[%s243 + $0x2c] sm:$0xf]
      %v276 = vld [vmem:[%s243 + $0x30] sm:$0xf]
      %v277 = vld [vmem:[%s243 + $0x34] sm:$0xf]
      %v278 = vld [vmem:[%s243 + $0x38] sm:$0xf]
      %v279 = vld [vmem:[%s243 + $0x3c] sm:$0xf]
      %v280 = vld [vmem:[%s243 + $0x40] sm:$0xf]
      %v281 = vld [vmem:[%s243 + $0x44] sm:$0xf]
      %v282 = vld [vmem:[%s243 + $0x48] sm:$0xf]
      %v283 = vld [vmem:[%s243 + $0x4c] sm:$0xf]
      %v284 = vld [vmem:[%s243 + $0x50] sm:$0xf]
      %v285 = vld [vmem:[%s243 + $0x54] sm:$0xf]
      %v286 = vld [vmem:[%s243 + $0x58] sm:$0xf]
      %v287 = vld [vmem:[%s243 + $0x5c] sm:$0xf]
      %v288 = vld [vmem:[%s243 + $0x60] sm:$0xf]
      %v289 = vld [vmem:[%s243 + $0x64] sm:$0xf]
      %v290 = vld [vmem:[%s243 + $0x68] sm:$0xf]
      %v291 = vld [vmem:[%s243 + $0x6c] sm:$0xf]
      %v292 = vld [vmem:[%s243 + $0x70] sm:$0xf]
      %v293 = vld [vmem:[%s243 + $0x74] sm:$0xf]
      %v294 = vld [vmem:[%s243 + $0x78] sm:$0xf]
      %v295 = vld [vmem:[%s243 + $0x7c] sm:$0xf]
      %v296 = vld [vmem:[%s243 + $0x80] sm:$0xf]
      %v297 = vld [vmem:[%s243 + $0x84] sm:$0xf]
      %v298 = vld [vmem:[%s243 + $0x88] sm:$0xf]
      %v299 = vld [vmem:[%s243 + $0x8c] sm:$0xf]
      %v300 = vld [vmem:[%s243 + $0x90] sm:$0xf]
      %v301 = vld [vmem:[%s243 + $0x94] sm:$0xf]
      %v302 = vld [vmem:[%s243 + $0x98] sm:$0xf]
      %v303 = vld [vmem:[%s243 + $0x9c] sm:$0xf]
      %v304 = vld [vmem:[%s243 + $0xa0] sm:$0xf]
      %v305 = vld [vmem:[%s243 + $0xa4] sm:$0xf]
      %v306 = vld [vmem:[%s243 + $0xa8] sm:$0xf]
      %v307 = vld [vmem:[%s243 + $0xac] sm:$0xf]
      %v308 = vld [vmem:[%s243 + $0xb0] sm:$0xf]
      %v309 = vld [vmem:[%s243 + $0xb4] sm:$0xf]
      %v310 = vld [vmem:[%s243 + $0xb8] sm:$0xf]
      %v311 = vld [vmem:[%s243 + $0xbc] sm:$0xf]
      %v312 = vunpack.c.l.bf16 %v264
      %v313 = vunpack.c.l.bf16 %v265
      %v314 = vunpack.c.l.bf16 %v266
      %v315 = vunpack.c.l.bf16 %v267
      %v316 = vunpack.c.l.bf16 %v268
      %v317 = vunpack.c.l.bf16 %v269
      %v318 = vunpack.c.l.bf16 %v270
      %v319 = vunpack.c.l.bf16 %v271
      %v320 = vunpack.c.l.bf16 %v272
      %v321 = vunpack.c.l.bf16 %v273
      %v322 = vunpack.c.l.bf16 %v274
      %v323 = vunpack.c.l.bf16 %v275
      %v324 = vunpack.c.l.bf16 %v276
      %v325 = vunpack.c.l.bf16 %v277
      %v326 = vunpack.c.l.bf16 %v278
      %v327 = vunpack.c.l.bf16 %v279
      %v328 = vunpack.c.l.bf16 %v280
      %v329 = vunpack.c.l.bf16 %v281
      %v330 = vunpack.c.l.bf16 %v282
      %v331 = vunpack.c.l.bf16 %v283
      %v332 = vunpack.c.l.bf16 %v284
      %v333 = vunpack.c.l.bf16 %v285
      %v334 = vunpack.c.l.bf16 %v286
      %v335 = vunpack.c.l.bf16 %v287
      %v336 = vunpack.c.l.bf16 %v288
      %v337 = vunpack.c.l.bf16 %v289
      %v338 = vunpack.c.l.bf16 %v290
      %v339 = vunpack.c.l.bf16 %v291
      %v340 = vunpack.c.l.bf16 %v292
      %v341 = vunpack.c.l.bf16 %v293
      %v342 = vunpack.c.l.bf16 %v294
      %v343 = vunpack.c.l.bf16 %v295
      %v344 = vunpack.c.l.bf16 %v296
      %v345 = vunpack.c.l.bf16 %v297
      %v346 = vunpack.c.l.bf16 %v298
      %v347 = vunpack.c.l.bf16 %v299
      %v348 = vunpack.c.l.bf16 %v300
      %v349 = vunpack.c.l.bf16 %v301
      %v350 = vunpack.c.l.bf16 %v302
      %v351 = vunpack.c.l.bf16 %v303
      %v352 = vunpack.c.l.bf16 %v304
      %v353 = vunpack.c.l.bf16 %v305
      %v354 = vunpack.c.l.bf16 %v306
      %v355 = vunpack.c.l.bf16 %v307
      %v356 = vunpack.c.l.bf16 %v308
      %v357 = vunpack.c.l.bf16 %v309
      %v358 = vunpack.c.l.bf16 %v310
      %v359 = vunpack.c.l.bf16 %v311
      %v360 = vld [vmem:[%s247] sm:$0x1]
      %v362 = vlaneseq
      %v363 = vshrl.u32 %v362, 7
      %v364 = vsub.s32 0, %v363
      %v365 = vrot.slane %v360, %v364
      %v367 = vmul.f32 %v312, %v365
      %v368 = vmul.f32 %v313, %v365
      %v369 = vmul.f32 %v314, %v365
      %v370 = vmul.f32 %v315, %v365
      %v371 = vmul.f32 %v316, %v365
      %v372 = vmul.f32 %v317, %v365
      %v373 = vmul.f32 %v318, %v365
      %v374 = vmul.f32 %v319, %v365
      %v375 = vmul.f32 %v320, %v365
      %v376 = vmul.f32 %v321, %v365
      %v377 = vmul.f32 %v322, %v365
      %v378 = vmul.f32 %v323, %v365
      %v379 = vmul.f32 %v324, %v365
      %v380 = vmul.f32 %v325, %v365
      %v381 = vmul.f32 %v326, %v365
      %v382 = vmul.f32 %v327, %v365
      %v383 = vmul.f32 %v328, %v365
      %v384 = vmul.f32 %v329, %v365
      %v385 = vmul.f32 %v330, %v365
      %v386 = vmul.f32 %v331, %v365
      %v387 = vmul.f32 %v332, %v365
      %v388 = vmul.f32 %v333, %v365
      %v389 = vmul.f32 %v334, %v365
      %v390 = vmul.f32 %v335, %v365
      %v391 = vmul.f32 %v336, %v365
      %v392 = vmul.f32 %v337, %v365
      %v393 = vmul.f32 %v338, %v365
      %v394 = vmul.f32 %v339, %v365
      %v395 = vmul.f32 %v340, %v365
      %v396 = vmul.f32 %v341, %v365
      %v397 = vmul.f32 %v342, %v365
      %v398 = vmul.f32 %v343, %v365
      %v399 = vmul.f32 %v344, %v365
      %v400 = vmul.f32 %v345, %v365
      %v401 = vmul.f32 %v346, %v365
      %v402 = vmul.f32 %v347, %v365
      %v403 = vmul.f32 %v348, %v365
      %v404 = vmul.f32 %v349, %v365
      %v405 = vmul.f32 %v350, %v365
      %v406 = vmul.f32 %v351, %v365
      %v407 = vmul.f32 %v352, %v365
      %v408 = vmul.f32 %v353, %v365
      %v409 = vmul.f32 %v354, %v365
      %v410 = vmul.f32 %v355, %v365
      %v411 = vmul.f32 %v356, %v365
      %v412 = vmul.f32 %v357, %v365
      %v413 = vmul.f32 %v358, %v365
      %v414 = vmul.f32 %v359, %v365
      %v415 = vld [vmem:[%s250] sm:$0x1]
      %v417 = vlaneseq
      %v418 = vshrl.u32 %v417, 7
      %v419 = vsub.s32 0, %v418
      %v420 = vrot.slane %v415, %v419
      %v422 = vadd.f32 %v367, %v420
      %v423 = vadd.f32 %v368, %v420
      %v424 = vadd.f32 %v369, %v420
      %v425 = vadd.f32 %v370, %v420
      %v426 = vadd.f32 %v371, %v420
      %v427 = vadd.f32 %v372, %v420
      %v428 = vadd.f32 %v373, %v420
      %v429 = vadd.f32 %v374, %v420
      %v430 = vadd.f32 %v375, %v420
      %v431 = vadd.f32 %v376, %v420
      %v432 = vadd.f32 %v377, %v420
      %v433 = vadd.f32 %v378, %v420
      %v434 = vadd.f32 %v379, %v420
      %v435 = vadd.f32 %v380, %v420
      %v436 = vadd.f32 %v381, %v420
      %v437 = vadd.f32 %v382, %v420
      %v438 = vadd.f32 %v383, %v420
      %v439 = vadd.f32 %v384, %v420
      %v440 = vadd.f32 %v385, %v420
      %v441 = vadd.f32 %v386, %v420
      %v442 = vadd.f32 %v387, %v420
      %v443 = vadd.f32 %v388, %v420
      %v444 = vadd.f32 %v389, %v420
      %v445 = vadd.f32 %v390, %v420
      %v446 = vadd.f32 %v391, %v420
      %v447 = vadd.f32 %v392, %v420
      %v448 = vadd.f32 %v393, %v420
      %v449 = vadd.f32 %v394, %v420
      %v450 = vadd.f32 %v395, %v420
      %v451 = vadd.f32 %v396, %v420
      %v452 = vadd.f32 %v397, %v420
      %v453 = vadd.f32 %v398, %v420
      %v454 = vadd.f32 %v399, %v420
      %v455 = vadd.f32 %v400, %v420
      %v456 = vadd.f32 %v401, %v420
      %v457 = vadd.f32 %v402, %v420
      %v458 = vadd.f32 %v403, %v420
      %v459 = vadd.f32 %v404, %v420
      %v460 = vadd.f32 %v405, %v420
      %v461 = vadd.f32 %v406, %v420
      %v462 = vadd.f32 %v407, %v420
      %v463 = vadd.f32 %v408, %v420
      %v464 = vadd.f32 %v409, %v420
      %v465 = vadd.f32 %v410, %v420
      %v466 = vadd.f32 %v411, %v420
      %v467 = vadd.f32 %v412, %v420
      %v468 = vadd.f32 %v413, %v420
      %v469 = vadd.f32 %v414, %v420
      %v470 = vmax.f32 %v422, 0.0
      %v471 = vmax.f32 %v423, 0.0
      %v472 = vmax.f32 %v424, 0.0
      %v473 = vmax.f32 %v425, 0.0
      %v474 = vmax.f32 %v426, 0.0
      %v475 = vmax.f32 %v427, 0.0
      %v476 = vmax.f32 %v428, 0.0
      %v477 = vmax.f32 %v429, 0.0
      %v478 = vmax.f32 %v430, 0.0
      %v479 = vmax.f32 %v431, 0.0
      %v480 = vmax.f32 %v432, 0.0
      %v481 = vmax.f32 %v433, 0.0
      %v482 = vmax.f32 %v434, 0.0
      %v483 = vmax.f32 %v435, 0.0
      %v484 = vmax.f32 %v436, 0.0
      %v485 = vmax.f32 %v437, 0.0
      %v486 = vmax.f32 %v438, 0.0
      %v487 = vmax.f32 %v439, 0.0
      %v488 = vmax.f32 %v440, 0.0
      %v489 = vmax.f32 %v441, 0.0
      %v490 = vmax.f32 %v442, 0.0
      %v491 = vmax.f32 %v443, 0.0
      %v492 = vmax.f32 %v444, 0.0
      %v493 = vmax.f32 %v445, 0.0
      %v494 = vmax.f32 %v446, 0.0
      %v495 = vmax.f32 %v447, 0.0
      %v496 = vmax.f32 %v448, 0.0
      %v497 = vmax.f32 %v449, 0.0
      %v498 = vmax.f32 %v450, 0.0
      %v499 = vmax.f32 %v451, 0.0
      %v500 = vmax.f32 %v452, 0.0
      %v501 = vmax.f32 %v453, 0.0
      %v502 = vmax.f32 %v454, 0.0
      %v503 = vmax.f32 %v455, 0.0
      %v504 = vmax.f32 %v456, 0.0
      %v505 = vmax.f32 %v457, 0.0
      %v506 = vmax.f32 %v458, 0.0
      %v507 = vmax.f32 %v459, 0.0
      %v508 = vmax.f32 %v460, 0.0
      %v509 = vmax.f32 %v461, 0.0
      %v510 = vmax.f32 %v462, 0.0
      %v511 = vmax.f32 %v463, 0.0
      %v512 = vmax.f32 %v464, 0.0
      %v513 = vmax.f32 %v465, 0.0
      %v514 = vmax.f32 %v466, 0.0
      %v515 = vmax.f32 %v467, 0.0
      %v516 = vmax.f32 %v468, 0.0
      %v517 = vmax.f32 %v469, 0.0
      %v518 = vpack.c.bf16 %v471, %v470
      %v519 = vpack.c.bf16 %v473, %v472
      %v520 = vpack.c.bf16 %v475, %v474
      %v521 = vpack.c.bf16 %v477, %v476
      %v522 = vpack.c.bf16 %v479, %v478
      %v523 = vpack.c.bf16 %v481, %v480
      %v524 = vpack.c.bf16 %v483, %v482
      %v525 = vpack.c.bf16 %v485, %v484
      %v526 = vpack.c.bf16 %v487, %v486
      %v527 = vpack.c.bf16 %v489, %v488
      %v528 = vpack.c.bf16 %v491, %v490
      %v529 = vpack.c.bf16 %v493, %v492
      %v530 = vpack.c.bf16 %v495, %v494
      %v531 = vpack.c.bf16 %v497, %v496
      %v532 = vpack.c.bf16 %v499, %v498
      %v533 = vpack.c.bf16 %v501, %v500
      %v534 = vpack.c.bf16 %v503, %v502
      %v535 = vpack.c.bf16 %v505, %v504
      %v536 = vpack.c.bf16 %v507, %v506
      %v537 = vpack.c.bf16 %v509, %v508
      %v538 = vpack.c.bf16 %v511, %v510
      %v539 = vpack.c.bf16 %v513, %v512
      %v540 = vpack.c.bf16 %v515, %v514
      %v541 = vpack.c.bf16 %v517, %v516
      %v566 = vunpack.c.l.b16 %v518
      %v567 = vunpack.c.h.b16 %v518
      %v568 = vunpack.c.l.b16 %v519
      %v569 = vunpack.c.h.b16 %v519
      %v570 = vunpack.c.l.b16 %v520
      %v571 = vunpack.c.h.b16 %v520
      %v572 = vunpack.c.l.b16 %v521
      %v573 = vunpack.c.h.b16 %v521
      %v574 = vunpack.c.l.b16 %v522
      %v575 = vunpack.c.h.b16 %v522
      %v576 = vunpack.c.l.b16 %v523
      %v577 = vunpack.c.h.b16 %v523
      %v578 = vunpack.c.l.b16 %v524
      %v579 = vunpack.c.h.b16 %v524
      %v580 = vunpack.c.l.b16 %v525
      %v581 = vunpack.c.h.b16 %v525
      %v582 = vunpack.c.l.b16 %v526
      %v583 = vunpack.c.h.b16 %v526
      %v584 = vunpack.c.l.b16 %v527
      %v585 = vunpack.c.h.b16 %v527
      %v586 = vunpack.c.l.b16 %v528
      %v587 = vunpack.c.h.b16 %v528
      %v588 = vunpack.c.l.b16 %v529
      %v589 = vunpack.c.h.b16 %v529
      %v590 = vunpack.c.l.b16 %v530
      %v591 = vunpack.c.h.b16 %v530
      %v592 = vunpack.c.l.b16 %v531
      %v593 = vunpack.c.h.b16 %v531
      %v594 = vunpack.c.l.b16 %v532
      %v595 = vunpack.c.h.b16 %v532
      %v596 = vunpack.c.l.b16 %v533
      %v597 = vunpack.c.h.b16 %v533
      %v598 = vunpack.c.l.b16 %v534
      %v599 = vunpack.c.h.b16 %v534
      %v600 = vunpack.c.l.b16 %v535
      %v601 = vunpack.c.h.b16 %v535
      %v602 = vunpack.c.l.b16 %v536
      %v603 = vunpack.c.h.b16 %v536
      %v604 = vunpack.c.l.b16 %v537
      %v605 = vunpack.c.h.b16 %v537
      %v606 = vunpack.c.l.b16 %v538
      %v607 = vunpack.c.h.b16 %v538
      %v608 = vunpack.c.l.b16 %v539
      %v609 = vunpack.c.h.b16 %v539
      %v610 = vunpack.c.l.b16 %v540
      %v611 = vunpack.c.h.b16 %v540
      %v612 = vunpack.c.l.b16 %v541
      %v613 = vunpack.c.h.b16 %v541
      %v614 = vpack.c.b16 %v566, %v566
      %v615 = vpack.c.b16 %v567, %v567
      %v616 = vpack.c.b16 %v568, %v568
      %v617 = vpack.c.b16 %v569, %v569
      %v618 = vpack.c.b16 %v570, %v570
      %v619 = vpack.c.b16 %v571, %v571
      %v620 = vpack.c.b16 %v572, %v572
      %v621 = vpack.c.b16 %v573, %v573
      %v622 = vpack.c.b16 %v574, %v574
      %v623 = vpack.c.b16 %v575, %v575
      %v624 = vpack.c.b16 %v576, %v576
      %v625 = vpack.c.b16 %v577, %v577
      %v626 = vpack.c.b16 %v578, %v578
      %v627 = vpack.c.b16 %v579, %v579
      %v628 = vpack.c.b16 %v580, %v580
      %v629 = vpack.c.b16 %v581, %v581
      %v630 = vpack.c.b16 %v582, %v582
      %v631 = vpack.c.b16 %v583, %v583
      %v632 = vpack.c.b16 %v584, %v584
      %v633 = vpack.c.b16 %v585, %v585
      %v634 = vpack.c.b16 %v586, %v586
      %v635 = vpack.c.b16 %v587, %v587
      %v636 = vpack.c.b16 %v588, %v588
      %v637 = vpack.c.b16 %v589, %v589
      %v638 = vpack.c.b16 %v590, %v590
      %v639 = vpack.c.b16 %v591, %v591
      %v640 = vpack.c.b16 %v592, %v592
      %v641 = vpack.c.b16 %v593, %v593
      %v642 = vpack.c.b16 %v594, %v594
      %v643 = vpack.c.b16 %v595, %v595
      %v644 = vpack.c.b16 %v596, %v596
      %v645 = vpack.c.b16 %v597, %v597
      %v646 = vpack.c.b16 %v598, %v598
      %v647 = vpack.c.b16 %v599, %v599
      %v648 = vpack.c.b16 %v600, %v600
      %v649 = vpack.c.b16 %v601, %v601
      %v650 = vpack.c.b16 %v602, %v602
      %v651 = vpack.c.b16 %v603, %v603
      %v652 = vpack.c.b16 %v604, %v604
      %v653 = vpack.c.b16 %v605, %v605
      %v654 = vpack.c.b16 %v606, %v606
      %v655 = vpack.c.b16 %v607, %v607
      %v656 = vpack.c.b16 %v608, %v608
      %v657 = vpack.c.b16 %v609, %v609
      %v658 = vpack.c.b16 %v610, %v610
      %v659 = vpack.c.b16 %v611, %v611
      %v660 = vpack.c.b16 %v612, %v612
      %v661 = vpack.c.b16 %v613, %v613
      %710 = vst [vmem:[%s262] sm:$0xf] %v614
      %711 = vst [vmem:[%s262 + $0x4] sm:$0xf] %v615
      %712 = vst [vmem:[%s262 + $0x8] sm:$0xf] %v616
      %713 = vst [vmem:[%s262 + $0xc] sm:$0xf] %v617
      %714 = vst [vmem:[%s262 + $0x10] sm:$0xf] %v618
      %715 = vst [vmem:[%s262 + $0x14] sm:$0xf] %v619
      %716 = vst [vmem:[%s262 + $0x18] sm:$0xf] %v620
      %717 = vst [vmem:[%s262 + $0x1c] sm:$0xf] %v621
      %718 = vst [vmem:[%s262 + $0x20] sm:$0xf] %v622
      %719 = vst [vmem:[%s262 + $0x24] sm:$0xf] %v623
      %720 = vst [vmem:[%s262 + $0x28] sm:$0xf] %v624
      %721 = vst [vmem:[%s262 + $0x2c] sm:$0xf] %v625
      %722 = vst [vmem:[%s262 + $0x30] sm:$0xf] %v626
      %723 = vst [vmem:[%s262 + $0x34] sm:$0xf] %v627
      %724 = vst [vmem:[%s262 + $0x38] sm:$0xf] %v628
      %725 = vst [vmem:[%s262 + $0x3c] sm:$0xf] %v629
      %726 = vst [vmem:[%s262 + $0x40] sm:$0xf] %v630
      %727 = vst [vmem:[%s262 + $0x44] sm:$0xf] %v631
      %728 = vst [vmem:[%s262 + $0x48] sm:$0xf] %v632
      %729 = vst [vmem:[%s262 + $0x4c] sm:$0xf] %v633
      %730 = vst [vmem:[%s262 + $0x50] sm:$0xf] %v634
      %731 = vst [vmem:[%s262 + $0x54] sm:$0xf] %v635
      %732 = vst [vmem:[%s262 + $0x58] sm:$0xf] %v636
      %733 = vst [vmem:[%s262 + $0x5c] sm:$0xf] %v637
      %734 = vst [vmem:[%s262 + $0x60] sm:$0xf] %v638
      %735 = vst [vmem:[%s262 + $0x64] sm:$0xf] %v639
      %736 = vst [vmem:[%s262 + $0x68] sm:$0xf] %v640
      %737 = vst [vmem:[%s262 + $0x6c] sm:$0xf] %v641
      %738 = vst [vmem:[%s262 + $0x70] sm:$0xf] %v642
      %739 = vst [vmem:[%s262 + $0x74] sm:$0xf] %v643
      %740 = vst [vmem:[%s262 + $0x78] sm:$0xf] %v644
      %741 = vst [vmem:[%s262 + $0x7c] sm:$0xf] %v645
      %742 = vst [vmem:[%s262 + $0x80] sm:$0xf] %v646
      %743 = vst [vmem:[%s262 + $0x84] sm:$0xf] %v647
      %744 = vst [vmem:[%s262 + $0x88] sm:$0xf] %v648
      %745 = vst [vmem:[%s262 + $0x8c] sm:$0xf] %v649
      %746 = vst [vmem:[%s262 + $0x90] sm:$0xf] %v650
      %747 = vst [vmem:[%s262 + $0x94] sm:$0xf] %v651
      %748 = vst [vmem:[%s262 + $0x98] sm:$0xf] %v652
      %749 = vst [vmem:[%s262 + $0x9c] sm:$0xf] %v653
      %750 = vst [vmem:[%s262 + $0xa0] sm:$0xf] %v654
      %751 = vst [vmem:[%s262 + $0xa4] sm:$0xf] %v655
      %752 = vst [vmem:[%s262 + $0xa8] sm:$0xf] %v656
      %753 = vst [vmem:[%s262 + $0xac] sm:$0xf] %v657
      %754 = vst [vmem:[%s262 + $0xb0] sm:$0xf] %v658
      %755 = vst [vmem:[%s262 + $0xb4] sm:$0xf] %v659
      %756 = vst [vmem:[%s262 + $0xb8] sm:$0xf] %v660
      %757 = vst [vmem:[%s262 + $0xbc] sm:$0xf] %v661
      %s758 = smul.u32 48, %s21
      %p759 = scmp.lt.s32.totalorder %s19, 1
      %s760 = scalar_select %p759, %s19, 1
      %p761 = scmp.lt.s32.totalorder %s758, 47
      %s762 = scalar_select %p761, %s758, 47
      %p763 = scmp.lt.s32.totalorder %s20, 0
      %s764 = scalar_select %p763, %s20, 0
      %s765 = sadd.s32 %s764, %s762
      %s766 = smul.addr %s760, 48
      %s767 = sadd.s32 %s765, %s766
      %s768 = smul.addr %s767, 4
      %s769 = scalar_lea.vmem %s3, %s768
      // Predicated region
      $region33: #{conv_block_forward.3} parent=31 // pred_check
        %p770 = pneg %p137
      $region34: #{conv_block_forward.3} parent=31 // pred_check_branch
        %772 = sbr.rel (%p770) target = $region36
      $region35: #{conv_block_forward.3} parent=31 // pred_region
        %s773 = smul.u32 48, %s21
      $region36: #{conv_block_forward.3} parent=31 // pred_fallthru
        _
    $region32: #{conv_block_forward.3} parent=5 // pred_fallthru
      _
    %p774 = scmp.le.s32.totalorder 2, %s9
    // Predicated region
    $region37: #{conv_block_forward.3} parent=5 // pred_check
      %p775 = pneg %p774
    $region38: #{conv_block_forward.3} parent=5 // pred_check_branch
      %777 = sbr.rel (%p775) target = $region40
    $region39: #{conv_block_forward.3} parent=5 // pred_region
      %s778 = ssub.s32 %s9, 2
      // Predicated region
      $region41: #{conv_block_forward.3} parent=39 // pred_check
        %p779 = pneg %p143
      $region42: #{conv_block_forward.3} parent=39 // pred_check_branch
        %781 = sbr.rel (%p779) target = $region44
      $region43: #{conv_block_forward.3} parent=39 // pred_region
        %s782 = smul.u32 48, %s24
        %p783 = scmp.lt.s32.totalorder %s22, 1
        %s784 = scalar_select %p783, %s22, 1
        %p785 = scmp.lt.s32.totalorder %s782, 47
        %s786 = scalar_select %p785, %s782, 47
        %p787 = scmp.lt.s32.totalorder %s23, 0
        %s788 = scalar_select %p787, %s23, 0
        %s789 = sadd.s32 %s788, %s786
        %s790 = smul.addr %s784, 48
        %s791 = sadd.s32 %s789, %s790
        %s792 = smul.addr %s791, 4
        %s793 = scalar_lea.vmem %s3, %s792
      $region44: #{conv_block_forward.3} parent=39 // pred_fallthru
        _
    $region40: #{conv_block_forward.3} parent=5 // pred_fallthru
      _
  $region6: #{conv_block_forward.3} parent=0 // loop_footer
    %s13 = sadd.s32 1, %s9
  $region7: #{conv_block_forward.3} parent=0 // loop_footer_branch
    %8 = sbr.rel target = $region3
  $region8: #{conv_block_forward.3} parent=0 // loop_exit
    _

// kernel: conv_block_forward.2
$region0: #{conv_block_forward.2}
  #allocation0 [shape = 'u32[]', space=smem, size = 0x4, offset = 0x4, fixed_abs, tag = 'smem constant byte address 0x4 - core index']
  #allocation1 [shape = 'u32[144,128]{1,0:T(1,128)}', space=vmem, size = 0x12000, scoped, tag = 'internal scratch']
  #allocation2 [shape = 'f32[384,128]{1,0:T(8,128)}', space=vmem, size = 0x30000, scoped, tag = 'scratch operand']
  %s0 = inlined_call_operand.vmem [shape: bf16[2,432,24], index: 0, kind: input, shape index: {}]
  %s1 = inlined_call_operand.vmem [shape: bf16[3,24,128], index: 1, kind: input, shape index: {}]
  %s2 = inlined_call_operand.vmem [shape: f32[384,1], index: 2, kind: input, shape index: {}]
  %s3 = inlined_call_operand.vmem [shape: bf16[2,384,128], index: 3, kind: output, shape index: {0}]
  %s4 = inlined_call_operand.vmem [shape: f32[2,1,2,128], index: 4, kind: output, shape index: {1}]
  %5 = xla_tuple %s3, %s4
  %s6 = sld [smem:[#allocation0]]
  $region53: #{conv_block_forward.2} parent=0
    _
  %s8 = ssub.s32 1, %s6
  %s9 = scalar_select 0, %s8, %s6
  loop: start=0, step=1, limit=4
  $region2: #{conv_block_forward.2} parent=0 // loop_pre_header
    _
  $region3: #{conv_block_forward.2} parent=0 // loop_header
    %s11 = sphi 0, %s15
    %p12 = scmp.ge.s32.totalorder %s11, 4
    %s18 = sphi 0, %s37
    %s19 = sphi 0, %s33
    %s20 = sphi 0, %s29
    %s21 = sphi 0, %s18
    %s22 = sphi 0, %s19
    %s23 = sphi 0, %s20
    %s24 = sphi 0, %s21
    %s25 = sphi 0, %s22
    %s26 = sphi 0, %s23
    %s40 = sphi 0, %s42
    %s43 = sphi 0, %s40
    %s44 = sphi 0, %s43
    %s60 = sphi 0, %s44
    %s66 = sphi 0, %s68
    %s69 = sphi 0, %s66
    %s70 = sphi 0, %s69
    %s86 = sphi 0, %s70
    %s90 = sphi 0, %s90
    %s92 = sphi 0, %s90
    %s93 = sphi 0, %s92
    %s107 = sphi 0, %s93
    %s117 = sphi 0, %s119
    %s120 = sphi 0, %s117
    %s121 = sphi 0, %s120
    %s137 = sphi 0, %s121
    %s147 = sphi 0, %s149
    %s150 = sphi 0, %s147
    %s151 = sphi 0, %s150
    %s167 = sphi 0, %s151
  $region4: #{conv_block_forward.2} parent=0 // loop_header_branch
    %14 = sbr.rel (%p12) target = $region8
  $region5: #{conv_block_forward.2} parent=0 // loop_body
    %s16 = ssub.s32 %s11, 1
    %s17 = ssub.s32 %s11, 2
    %s27 = sadd.s32 1, %s20
    %p28 = scmp.ge.s32.totalorder %s27, 1
    %s29 = scalar_select %p28, 0, %s27
    %s30 = sadd.s32 1, %s19
    %s31 = scalar_select %p28, %s30, %s19
    %p32 = scmp.ge.s32.totalorder %s31, 1
    %s33 = scalar_select %p32, 0, %s31
    %s34 = sadd.s32 1, %s18
    %s35 = scalar_select %p32, %s34, %s18
    %p36 = scmp.ge.s32.totalorder %s35, 2
    %s37 = scalar_select %p36, 0, %s35
    %s38 = ssub.s32 %s18, %s37
    %p39 = scmp.eq.s32.totalorder %s38, 0
    %s41 = sadd.s32 %s40, 1
    %s42 = scalar_select %p39, %s40, %s41
    %p45 = pneg %p39
    %p46 = scmp.eq.s32.totalorder %s11, 1
    %p47 = por %p45, %p46
    %p48 = scmp.ne.s32.totalorder %s40, %s43
    %p49 = scmp.eq.s32.totalorder %s11, 0
    %p50 = por %p48, %p49
    %p51 = scmp.ne.s32.totalorder %s40, %s43
    %p52 = scmp.eq.s32.totalorder %s16, 1
    %p53 = por %p51, %p52
    %p54 = scmp.ne.s32.totalorder %s43, %s44
    %p55 = scmp.eq.s32.totalorder %s16, 0
    %p56 = por %p54, %p55
    %p57 = scmp.ne.s32.totalorder %s43, %s44
    %p58 = scmp.eq.s32.totalorder %s17, 1
    %p59 = por %p57, %p58
    %p61 = scmp.ne.s32.totalorder %s44, %s60
    %p62 = scmp.eq.s32.totalorder %s17, 0
    %p63 = por %p61, %p62
    %s64 = ssub.s32 %s19, %s33
    %p65 = scmp.eq.s32.totalorder %s64, 0
    %s67 = sadd.s32 %s66, 1
    %s68 = scalar_select %p65, %s66, %s67
    %p71 = pneg %p65
    %p72 = scmp.eq.s32.totalorder %s11, 1
    %p73 = por %p71, %p72
    %p74 = scmp.ne.s32.totalorder %s66, %s69
    %p75 = scmp.eq.s32.totalorder %s11, 0
    %p76 = por %p74, %p75
    %p77 = scmp.ne.s32.totalorder %s66, %s69
    %p78 = scmp.eq.s32.totalorder %s16, 1
    %p79 = por %p77, %p78
    %p80 = scmp.ne.s32.totalorder %s69, %s70
    %p81 = scmp.eq.s32.totalorder %s16, 0
    %p82 = por %p80, %p81
    %p83 = scmp.ne.s32.totalorder %s69, %s70
    %p84 = scmp.eq.s32.totalorder %s17, 1
    %p85 = por %p83, %p84
    %p87 = scmp.ne.s32.totalorder %s70, %s86
    %p88 = scmp.eq.s32.totalorder %s17, 0
    %p89 = por %p87, %p88
    %s91 = sadd.s32 %s90, 1
    %p94 = scmp.eq.s32.totalorder %s11, 1
    %p95 = scmp.ne.s32.totalorder %s90, %s92
    %p96 = scmp.eq.s32.totalorder %s11, 0
    %p97 = por %p95, %p96
    %p98 = scmp.ne.s32.totalorder %s90, %s92
    %p99 = scmp.eq.s32.totalorder %s16, 1
    %p100 = por %p98, %p99
    %p101 = scmp.ne.s32.totalorder %s92, %s93
    %p102 = scmp.eq.s32.totalorder %s16, 0
    %p103 = por %p101, %p102
    %p104 = scmp.ne.s32.totalorder %s92, %s93
    %p105 = scmp.eq.s32.totalorder %s17, 1
    %p106 = por %p104, %p105
    %p108 = scmp.ne.s32.totalorder %s93, %s107
    %p109 = scmp.eq.s32.totalorder %s17, 0
    %p110 = por %p108, %p109
    %s111 = ssub.s32 %s18, %s37
    %s112 = ssub.s32 %s20, %s29
    %s113 = sor.u32 %s111, %s112
    %s114 = ssub.s32 %s19, %s33
    %s115 = sor.u32 %s113, %s114
    %p116 = scmp.eq.s32.totalorder %s115, 0
    %s118 = sadd.s32 %s117, 1
    %s119 = scalar_select %p116, %s117, %s118
    %p122 = pneg %p116
    %p123 = scmp.eq.s32.totalorder %s11, 1
    %p124 = por %p122, %p123
    %p125 = scmp.ne.s32.totalorder %s117, %s120
    %p126 = scmp.eq.s32.totalorder %s11, 0
    %p127 = por %p125, %p126
    %p128 = scmp.ne.s32.totalorder %s117, %s120
    %p129 = scmp.eq.s32.totalorder %s16, 1
    %p130 = por %p128, %p129
    %p131 = scmp.ne.s32.totalorder %s120, %s121
    %p132 = scmp.eq.s32.totalorder %s16, 0
    %p133 = por %p131, %p132
    %p134 = scmp.ne.s32.totalorder %s120, %s121
    %p135 = scmp.eq.s32.totalorder %s17, 1
    %p136 = por %p134, %p135
    %p138 = scmp.ne.s32.totalorder %s121, %s137
    %p139 = scmp.eq.s32.totalorder %s17, 0
    %p140 = por %p138, %p139
    %s141 = ssub.s32 %s18, %s37
    %s142 = ssub.s32 %s20, %s29
    %s143 = sor.u32 %s141, %s142
    %s144 = ssub.s32 %s19, %s33
    %s145 = sor.u32 %s143, %s144
    %p146 = scmp.eq.s32.totalorder %s145, 0
    %s148 = sadd.s32 %s147, 1
    %s149 = scalar_select %p146, %s147, %s148
    %p152 = pneg %p146
    %p153 = scmp.eq.s32.totalorder %s11, 1
    %p154 = por %p152, %p153
    %p155 = scmp.ne.s32.totalorder %s147, %s150
    %p156 = scmp.eq.s32.totalorder %s11, 0
    %p157 = por %p155, %p156
    %p158 = scmp.ne.s32.totalorder %s147, %s150
    %p159 = scmp.eq.s32.totalorder %s16, 1
    %p160 = por %p158, %p159
    %p161 = scmp.ne.s32.totalorder %s150, %s151
    %p162 = scmp.eq.s32.totalorder %s16, 0
    %p163 = por %p161, %p162
    %p164 = scmp.ne.s32.totalorder %s150, %s151
    %p165 = scmp.eq.s32.totalorder %s17, 1
    %p166 = por %p164, %p165
    %p168 = scmp.ne.s32.totalorder %s151, %s167
    %p169 = scmp.eq.s32.totalorder %s17, 0
    %p170 = por %p168, %p169
    %p171 = scmp.le.s32.totalorder 1, %s11
    %p172 = scmp.lt.s32.totalorder %s11, 3
    %p173 = pnand %p171, %p172
    %p174 = pneg %p173
    // Predicated region
    $region9: #{conv_block_forward.2} parent=5 // pred_check
      _
    $region10: #{conv_block_forward.2} parent=5 // pred_check_branch
      %176 = sbr.rel (%p173) target = $region12
    $region11: #{conv_block_forward.2} parent=5 // pred_region
      %s177 = ssub.s32 %s11, 1
      // Predicated region
      $region13: #{conv_block_forward.2} parent=11 // pred_check
        %p178 = pneg %p56
      $region14: #{conv_block_forward.2} parent=11 // pred_check_branch
        %180 = sbr.rel (%p178) target = $region16
      $region15: #{conv_block_forward.2} parent=11 // pred_region
        %p181 = scmp.lt.s32.totalorder %s21, 1
        %s182 = scalar_select %p181, %s21, 1
        %s183 = smul.addr %s182, 54
        %s184 = smul.addr %s183, 4
        %s185 = scalar_lea.vmem %s0, %s184
      $region16: #{conv_block_forward.2} parent=11 // pred_fallthru
        _
      // Predicated region
      $region17: #{conv_block_forward.2} parent=11 // pred_check
        %p186 = pneg %p82
      $region18: #{conv_block_forward.2} parent=11 // pred_check_branch
        %188 = sbr.rel (%p186) target = $region20
      $region19: #{conv_block_forward.2} parent=11 // pred_region
        %p189 = scmp.lt.s32.totalorder %s22, 0
        %s190 = scalar_select %p189, %s22, 0
        %s191 = smul.addr %s190, 4
        %s192 = scalar_lea.vmem %s1, %s191
      $region20: #{conv_block_forward.2} parent=11 // pred_fallthru
        _
      // Predicated region
      $region21: #{conv_block_forward.2} parent=11 // pred_check
        %p193 = pneg %p103
      $region22: #{conv_block_forward.2} parent=11 // pred_check_branch
        %195 = sbr.rel (%p193) target = $region24
      $region23: #{conv_block_forward.2} parent=11 // pred_region
        _
      $region24: #{conv_block_forward.2} parent=11 // pred_fallthru
        _
    $region12: #{conv_block_forward.2} parent=5 // pred_fallthru
      _
    %p196 = scmp.lt.s32.totalorder %s11, 2
    // Predicated region
    $region25: #{conv_block_forward.2} parent=5 // pred_check
      %p197 = pneg %p196
    $region26: #{conv_block_forward.2} parent=5 // pred_check_branch
      %199 = sbr.rel (%p197) target = $region28
    $region27: #{conv_block_forward.2} parent=5 // pred_region
      _
    $region28: #{conv_block_forward.2} parent=5 // pred_fallthru
      _
    %p200 = scmp.le.s32.totalorder 1, %s11
    %p201 = scmp.lt.s32.totalorder %s11, 3
    %p202 = pnand %p200, %p201
    %p203 = pneg %p202
    // Predicated region
    $region29: #{conv_block_forward.2} parent=5 // pred_check
      _
    $region30: #{conv_block_forward.2} parent=5 // pred_check_branch
      %205 = sbr.rel (%p202) target = $region32
    $region31: #{conv_block_forward.2} parent=5 // pred_region
      %s206 = ssub.s32 %s11, 1
      %p207 = scmp.lt.s32.totalorder %s21, 1
      %s208 = scalar_select %p207, %s21, 1
      %s209 = smul.addr %s208, 54
      %s210 = smul.addr %s209, 4
      %s211 = scalar_lea.vmem %s0, %s210
      %p212 = pneg %p56
      %p213 = pneg %p53
      %p214 = scmp.lt.s32.totalorder %s22, 0
      %s215 = scalar_select %p214, %s22, 0
      %s216 = smul.addr %s215, 4
      %s217 = scalar_lea.vmem %s1, %s216
      %p218 = pneg %p82
      %p219 = pneg %p79
      %p220 = pneg %p103
      %p221 = pneg %p100
      %p222 = pneg %p133
      %p223 = pneg %p130
      %s224 = smul.u32 48, %s23
      %p225 = scmp.lt.s32.totalorder %s21, 1
      %s226 = scalar_select %p225, %s21, 1
      %p227 = scmp.lt.s32.totalorder %s224, 47
      %s228 = scalar_select %p227, %s224, 47
      %p229 = scmp.lt.s32.totalorder %s22, 0
      %s230 = scalar_select %p229, %s22, 0
      %s231 = sadd.s32 %s230, %s228
      %s232 = smul.addr %s226, 48
      %s233 = sadd.s32 %s231, %s232
      %s234 = smul.addr %s233, 4
      %s235 = scalar_lea.vmem %s3, %s234
      %p236 = pneg %p163
      %p237 = pneg %p160
      %p238 = scmp.lt.s32.totalorder %s21, 1
      %s239 = scalar_select %p238, %s21, 1
      %p240 = scmp.lt.s32.totalorder %s23, 0
      %s241 = scalar_select %p240, %s23, 0
      %p242 = scmp.lt.s32.totalorder %s22, 0
      %s243 = scalar_select %p242, %s22, 0
      %s244 = sadd.s32 %s243, %s241
      %s245 = sadd.s32 %s244, %s239
      %s246 = smul.addr %s245, 2
      %s247 = scalar_lea.vmem %s4, %s246
      %p248 = scmp.lt.s32.totalorder %s21, 1
      %s249 = scalar_select %p248, %s21, 1
      %s250 = smul.addr %s249, 54
      %s251 = smul.addr %s250, 4
      %s252 = scalar_lea.vmem %s0, %s251
      %p253 = scmp.lt.s32.totalorder %s22, 0
      %s254 = scalar_select %p253, %s22, 0
      %s255 = smul.addr %s254, 4
      %s256 = scalar_lea.vmem %s1, %s255
      %s257 = smul.u32 48, %s23
      %p258 = scmp.lt.s32.totalorder %s21, 1
      %s259 = scalar_select %p258, %s21, 1
      %p260 = scmp.lt.s32.totalorder %s257, 47
      %s261 = scalar_select %p260, %s257, 47
      %p262 = scmp.lt.s32.totalorder %s22, 0
      %s263 = scalar_select %p262, %s22, 0
      %s264 = sadd.s32 %s263, %s261
      %s265 = smul.addr %s259, 48
      %s266 = sadd.s32 %s264, %s265
      %s267 = smul.addr %s266, 4
      %s268 = scalar_lea.vmem %s3, %s267
      %s269 = smul.u32 48, %s23
      %p270 = scmp.lt.s32.totalorder %s21, 1
      %s271 = scalar_select %p270, %s21, 1
      %p272 = scmp.lt.s32.totalorder %s23, 0
      %s273 = scalar_select %p272, %s23, 0
      %p274 = scmp.lt.s32.totalorder %s22, 0
      %s275 = scalar_select %p274, %s22, 0
      %s276 = sadd.s32 %s275, %s273
      %s277 = sadd.s32 %s276, %s271
      %s278 = smul.addr %s277, 2
      %s279 = scalar_lea.vmem %s4, %s278
      %s281 = smul.u32 %s23, 384
      %s282 = sshra.s32 %s281, 3
      %s283 = sand.u32 %s281, 7
      %s284 = smul.addr %s282, 4
      %s285 = scalar_lea.vmem %s252, %s284
      %v286 = vld [vmem:[%s285] sm:$0xf]
      %v287 = vld [vmem:[%s285 + $0x4] sm:$0xf]
      %v288 = vld [vmem:[%s285 + $0x8] sm:$0xf]
      %v289 = vld [vmem:[%s285 + $0xc] sm:$0xf]
      %v290 = vld [vmem:[%s285 + $0x10] sm:$0xf]
      %v291 = vld [vmem:[%s285 + $0x14] sm:$0xf]
      %v292 = vld [vmem:[%s285 + $0x18] sm:$0xf]
      %v293 = vld [vmem:[%s285 + $0x1c] sm:$0xf]
      %v294 = vld [vmem:[%s285 + $0x20] sm:$0xf]
      %v295 = vld [vmem:[%s285 + $0x24] sm:$0xf]
      %v296 = vld [vmem:[%s285 + $0x28] sm:$0xf]
      %v297 = vld [vmem:[%s285 + $0x2c] sm:$0xf]
      %v298 = vld [vmem:[%s285 + $0x30] sm:$0xf]
      %v299 = vld [vmem:[%s285 + $0x34] sm:$0xf]
      %v300 = vld [vmem:[%s285 + $0x38] sm:$0xf]
      %v301 = vld [vmem:[%s285 + $0x3c] sm:$0xf]
      %v302 = vld [vmem:[%s285 + $0x40] sm:$0xf]
      %v303 = vld [vmem:[%s285 + $0x44] sm:$0xf]
      %v304 = vld [vmem:[%s285 + $0x48] sm:$0xf]
      %v305 = vld [vmem:[%s285 + $0x4c] sm:$0xf]
      %v306 = vld [vmem:[%s285 + $0x50] sm:$0xf]
      %v307 = vld [vmem:[%s285 + $0x54] sm:$0xf]
      %v308 = vld [vmem:[%s285 + $0x58] sm:$0xf]
      %v309 = vld [vmem:[%s285 + $0x5c] sm:$0xf]
      %v310 = vld [vmem:[%s285 + $0x60] sm:$0xf]
      %v311 = vld [vmem:[%s285 + $0x64] sm:$0xf]
      %v312 = vld [vmem:[%s285 + $0x68] sm:$0xf]
      %v313 = vld [vmem:[%s285 + $0x6c] sm:$0xf]
      %v314 = vld [vmem:[%s285 + $0x70] sm:$0xf]
      %v315 = vld [vmem:[%s285 + $0x74] sm:$0xf]
      %v316 = vld [vmem:[%s285 + $0x78] sm:$0xf]
      %v317 = vld [vmem:[%s285 + $0x7c] sm:$0xf]
      %v318 = vld [vmem:[%s285 + $0x80] sm:$0xf]
      %v319 = vld [vmem:[%s285 + $0x84] sm:$0xf]
      %v320 = vld [vmem:[%s285 + $0x88] sm:$0xf]
      %v321 = vld [vmem:[%s285 + $0x8c] sm:$0xf]
      %v322 = vld [vmem:[%s285 + $0x90] sm:$0xf]
      %v323 = vld [vmem:[%s285 + $0x94] sm:$0xf]
      %v324 = vld [vmem:[%s285 + $0x98] sm:$0xf]
      %v325 = vld [vmem:[%s285 + $0x9c] sm:$0xf]
      %v326 = vld [vmem:[%s285 + $0xa0] sm:$0xf]
      %v327 = vld [vmem:[%s285 + $0xa4] sm:$0xf]
      %v328 = vld [vmem:[%s285 + $0xa8] sm:$0xf]
      %v329 = vld [vmem:[%s285 + $0xac] sm:$0xf]
      %v330 = vld [vmem:[%s285 + $0xb0] sm:$0xf]
      %v331 = vld [vmem:[%s285 + $0xb4] sm:$0xf]
      %v332 = vld [vmem:[%s285 + $0xb8] sm:$0xf]
      %v333 = vld [vmem:[%s285 + $0xbc] sm:$0xf]
      %v334 = vld [vmem:[%s256] sm:$0xf]
      %v335 = vld [vmem:[%s256 + $0x4] sm:$0xf]
      %v336 = vld [vmem:[%s256 + $0x8] sm:$0xf]
      %v385 = vunpack.c.l.b16 %v286
      %v386 = vunpack.c.l.b16 %v287
      %v387 = vunpack.c.l.b16 %v288
      %v388 = vunpack.c.l.b16 %v289
      %v389 = vunpack.c.l.b16 %v290
      %v390 = vunpack.c.l.b16 %v291
      %v391 = vunpack.c.l.b16 %v292
      %v392 = vunpack.c.l.b16 %v293
      %v393 = vunpack.c.l.b16 %v294
      %v394 = vunpack.c.l.b16 %v295
      %v395 = vunpack.c.l.b16 %v296
      %v396 = vunpack.c.l.b16 %v297
      %v397 = vunpack.c.l.b16 %v298
      %v398 = vunpack.c.l.b16 %v299
      %v399 = vunpack.c.l.b16 %v300
      %v400 = vunpack.c.l.b16 %v301
      %v401 = vunpack.c.l.b16 %v302
      %v402 = vunpack.c.l.b16 %v303
      %v403 = vunpack.c.l.b16 %v304
      %v404 = vunpack.c.l.b16 %v305
      %v405 = vunpack.c.l.b16 %v306
      %v406 = vunpack.c.l.b16 %v307
      %v407 = vunpack.c.l.b16 %v308
      %v408 = vunpack.c.l.b16 %v309
      %v409 = vunpack.c.l.b16 %v310
      %v410 = vunpack.c.l.b16 %v311
      %v411 = vunpack.c.l.b16 %v312
      %v412 = vunpack.c.l.b16 %v313
      %v413 = vunpack.c.l.b16 %v314
      %v414 = vunpack.c.l.b16 %v315
      %v415 = vunpack.c.l.b16 %v316
      %v416 = vunpack.c.l.b16 %v317
      %v417 = vunpack.c.l.b16 %v318
      %v418 = vunpack.c.l.b16 %v319
      %v419 = vunpack.c.l.b16 %v320
      %v420 = vunpack.c.l.b16 %v321
      %v421 = vunpack.c.l.b16 %v322
      %v422 = vunpack.c.l.b16 %v323
      %v423 = vunpack.c.l.b16 %v324
      %v424 = vunpack.c.l.b16 %v325
      %v425 = vunpack.c.l.b16 %v326
      %v426 = vunpack.c.l.b16 %v327
      %v427 = vunpack.c.l.b16 %v328
      %v428 = vunpack.c.l.b16 %v329
      %v429 = vunpack.c.l.b16 %v330
      %v430 = vunpack.c.l.b16 %v331
      %v431 = vunpack.c.l.b16 %v332
      %v432 = vunpack.c.l.b16 %v333
      %v433 = vpack.c.b16 %v386, %v385
      %v434 = vpack.c.b16 %v388, %v387
      %v435 = vpack.c.b16 %v390, %v389
      %v436 = vpack.c.b16 %v392, %v391
      %v437 = vpack.c.b16 %v394, %v393
      %v438 = vpack.c.b16 %v396, %v395
      %v439 = vpack.c.b16 %v398, %v397
      %v440 = vpack.c.b16 %v400, %v399
      %v441 = vpack.c.b16 %v402, %v401
      %v442 = vpack.c.b16 %v404, %v403
      %v443 = vpack.c.b16 %v406, %v405
      %v444 = vpack.c.b16 %v408, %v407
      %v445 = vpack.c.b16 %v410, %v409
      %v446 = vpack.c.b16 %v412, %v411
      %v447 = vpack.c.b16 %v414, %v413
      %v448 = vpack.c.b16 %v416, %v415
      %v449 = vpack.c.b16 %v418, %v417
      %v450 = vpack.c.b16 %v420, %v419
      %v451 = vpack.c.b16 %v422, %v421
      %v452 = vpack.c.b16 %v424, %v423
      %v453 = vpack.c.b16 %v426, %v425
      %v454 = vpack.c.b16 %v428, %v427
      %v455 = vpack.c.b16 %v430, %v429
      %v456 = vpack.c.b16 %v432, %v431
      %v460 = vunpack.c.l.b16 %v334
      %v461 = vunpack.c.l.b16 %v335
      %v462 = vunpack.c.l.b16 %v336
      %v463 = vpack.c.b16 %v461, %v460
      %v464 = vpack.c.b16 %v462, %v462
      %vm466 = vcmask 195584
      %v468 = vsel %vm466, %v433, 0
      %v471 = vsel %vm466, %v434, 0
      %v474 = vsel %vm466, %v435, 0
      %v477 = vsel %vm466, %v436, 0
      %v480 = vsel %vm466, %v437, 0
      %v483 = vsel %vm466, %v438, 0
      %v486 = vsel %vm466, %v439, 0
      %v489 = vsel %vm466, %v440, 0
      %v492 = vsel %vm466, %v441, 0
      %v495 = vsel %vm466, %v442, 0
      %v498 = vsel %vm466, %v443, 0
      %v501 = vsel %vm466, %v444, 0
      %v504 = vsel %vm466, %v445, 0
      %v507 = vsel %vm466, %v446, 0
      %v510 = vsel %vm466, %v447, 0
      %v513 = vsel %vm466, %v448, 0
      %v516 = vsel %vm466, %v449, 0
      %v519 = vsel %vm466, %v450, 0
      %v522 = vsel %vm466, %v451, 0
      %v525 = vsel %vm466, %v452, 0
      %v528 = vsel %vm466, %v453, 0
      %v531 = vsel %vm466, %v454, 0
      %v534 = vsel %vm466, %v455, 0
      %v537 = vsel %vm466, %v456, 0
      %vm539 = vcmask 1043456
      %v541 = vsel %vm539, %v464, 0
      %543 = vmatprep.subr.bf16.mxu0 0
      %544 = vmatpush1.bf16.msra.mxu0 0
      %545 = vmatprep.subr.bf16.mxu0 0
      %546 = vmatpush1.bf16.msra.mxu0 0
      %547 = vmatprep.subr.bf16.mxu0 0
      %548 = vmatpush1.bf16.msra.mxu0 0
      %549 = vmatprep.subr.bf16.mxu0 0
      %550 = vmatpush1.bf16.msra.mxu0 0
      %551 = vmatprep.subr.bf16.mxu0 0
      %552 = vmatpush1.bf16.msra.mxu0 0
      %553 = vmatprep.subr.bf16.mxu0 0
      %554 = vmatpush1.bf16.msra.mxu0 0
      %555 = vmatprep.subr.bf16.mxu0 0
      %556 = vmatpush1.bf16.msra.mxu0 %v541
      %557 = vmatprep.subr.bf16.mxu0 0
      %558 = vmatpush1.bf16.msra.mxu0 %v463
      %559 = vmatprep.subr.bf16.mxu0 0
      %560 = vmatpush2.bf16.msra.mxu0 0
      %561 = vmatprep.subr.bf16.mxu0 0
      %562 = vmatpush2.bf16.msra.mxu0 0
      %563 = vmatprep.subr.bf16.mxu0 0
      %564 = vmatpush2.bf16.msra.mxu0 0
      %565 = vmatprep.subr.bf16.mxu0 0
      %566 = vmatpush2.bf16.msra.mxu0 0
      %567 = vmatprep.subr.bf16.mxu0 0
      %568 = vmatpush2.bf16.msra.mxu0 0
      %569 = vmatprep.subr.bf16.mxu0 0
      %570 = vmatpush2.bf16.msra.mxu0 0
      %571 = vmatprep.subr.bf16.mxu0 0
      %572 = vmatpush2.bf16.msra.mxu0 0
      %573 = vmatprep.subr.bf16.mxu0 0
      %574 = vmatpush2.bf16.msra.mxu0 0
      %575 = vmatprep.mubr.bf16.mxu0 0
      %576 = vmatmul.mubr.bf16.gmra.mxu0 %v468
      %v577 = vpop.f32.mrf.mxu0
      %v578 = vadd.f32 0.0, %v577
      %v579 = vpop.f32.mrf.mxu0
      %v580 = vpop.f32.mrf.mxu0
      %v581 = vadd.f32 0.0, %v580
      %v582 = vpop.f32.mrf.mxu0
      %583 = vmatprep.mubr.bf16.mxu0 0
      %584 = vmatmul.mubr.bf16.gmra.mxu0 %v471
      %v585 = vpop.f32.mrf.mxu0
      %v586 = vadd.f32 0.0, %v585
      %v587 = vpop.f32.mrf.mxu0
      %v588 = vpop.f32.mrf.mxu0
      %v589 = vadd.f32 0.0, %v588
      %v590 = vpop.f32.mrf.mxu0
      %591 = vmatprep.mubr.bf16.mxu0 0
      %592 = vmatmul.mubr.bf16.gmra.mxu0 %v474
      %v593 = vpop.f32.mrf.mxu0
      %v594 = vadd.f32 0.0, %v593
      %v595 = vpop.f32.mrf.mxu0
      %v596 = vpop.f32.mrf.mxu0
      %v597 = vadd.f32 0.0, %v596
      %v598 = vpop.f32.mrf.mxu0
      %599 = vmatprep.mubr.bf16.mxu0 0
      %600 = vmatmul.mubr.bf16.gmra.mxu0 %v477
      %v601 = vpop.f32.mrf.mxu0
      %v602 = vadd.f32 0.0, %v601
      %v603 = vpop.f32.mrf.mxu0
      %v604 = vpop.f32.mrf.mxu0
      %v605 = vadd.f32 0.0, %v604
      %v606 = vpop.f32.mrf.mxu0
      %607 = vmatprep.mubr.bf16.mxu0 0
      %608 = vmatmul.mubr.bf16.gmra.mxu0 %v480
      %v609 = vpop.f32.mrf.mxu0
      %v610 = vadd.f32 0.0, %v609
      %v611 = vpop.f32.mrf.mxu0
      %v612 = vpop.f32.mrf.mxu0
      %v613 = vadd.f32 0.0, %v612
      %v614 = vpop.f32.mrf.mxu0
      %615 = vmatprep.mubr.bf16.mxu0 0
      %616 = vmatmul.mubr.bf16.gmra.mxu0 %v483
      %v617 = vpop.f32.mrf.mxu0
      %v618 = vadd.f32 0.0, %v617
      %v619 = vpop.f32.mrf.mxu0
      %v620 = vpop.f32.mrf.mxu0
      %v621 = vadd.f32 0.0, %v620
      %v622 = vpop.f32.mrf.mxu0
      %623 = vmatprep.mubr.bf16.mxu0 0
      %624 = vmatmul.mubr.bf16.gmra.mxu0 %v486
      %v625 = vpop.f32.mrf.mxu0
      %v626 = vadd.f32 0.0, %v625
      %v627 = vpop.f32.mrf.mxu0
      %v628 = vpop.f32.mrf.mxu0
      %v629 = vadd.f32 0.0, %v628
      %v630 = vpop.f32.mrf.mxu0
      %631 = vmatprep.mubr.bf16.mxu0 0
      %632 = vmatmul.mubr.bf16.gmra.mxu0 %v489
      %v633 = vpop.f32.mrf.mxu0
      %v634 = vadd.f32 0.0, %v633
      %v635 = vpop.f32.mrf.mxu0
      %v636 = vpop.f32.mrf.mxu0
      %v637 = vadd.f32 0.0, %v636
      %v638 = vpop.f32.mrf.mxu0
      %639 = vmatprep.mubr.bf16.mxu0 0
      %640 = vmatmul.mubr.bf16.gmra.mxu0 %v492
      %v641 = vpop.f32.mrf.mxu0
      %v642 = vadd.f32 0.0, %v641
      %v643 = vpop.f32.mrf.mxu0
      %v644 = vpop.f32.mrf.mxu0
      %v645 = vadd.f32 0.0, %v644
      %v646 = vpop.f32.mrf.mxu0
      %647 = vmatprep.mubr.bf16.mxu0 0
      %648 = vmatmul.mubr.bf16.gmra.mxu0 %v495
      %v649 = vpop.f32.mrf.mxu0
      %v650 = vadd.f32 0.0, %v649
      %v651 = vpop.f32.mrf.mxu0
      %v652 = vpop.f32.mrf.mxu0
      %v653 = vadd.f32 0.0, %v652
      %v654 = vpop.f32.mrf.mxu0
      %655 = vmatprep.mubr.bf16.mxu0 0
      %656 = vmatmul.mubr.bf16.gmra.mxu0 %v498
      %v657 = vpop.f32.mrf.mxu0
      %v658 = vadd.f32 0.0, %v657
      %v659 = vpop.f32.mrf.mxu0
      %v660 = vpop.f32.mrf.mxu0
      %v661 = vadd.f32 0.0, %v660
      %v662 = vpop.f32.mrf.mxu0
      %663 = vmatprep.mubr.bf16.mxu0 0
      %664 = vmatmul.mubr.bf16.gmra.mxu0 %v501
      %v665 = vpop.f32.mrf.mxu0
      %v666 = vadd.f32 0.0, %v665
      %v667 = vpop.f32.mrf.mxu0
      %v668 = vpop.f32.mrf.mxu0
      %v669 = vadd.f32 0.0, %v668
      %v670 = vpop.f32.mrf.mxu0
      %671 = vmatprep.mubr.bf16.mxu0 0
      %672 = vmatmul.mubr.bf16.gmra.mxu0 %v504
      %v673 = vpop.f32.mrf.mxu0
      %v674 = vadd.f32 0.0, %v673
      %v675 = vpop.f32.mrf.mxu0
      %v676 = vpop.f32.mrf.mxu0
      %v677 = vadd.f32 0.0, %v676
      %v678 = vpop.f32.mrf.mxu0
      %679 = vmatprep.mubr.bf16.mxu0 0
      %680 = vmatmul.mubr.bf16.gmra.mxu0 %v507
      %v681 = vpop.f32.mrf.mxu0
      %v682 = vadd.f32 0.0, %v681
      %v683 = vpop.f32.mrf.mxu0
      %v684 = vpop.f32.mrf.mxu0
      %v685 = vadd.f32 0.0, %v684
      %v686 = vpop.f32.mrf.mxu0
      %687 = vmatprep.mubr.bf16.mxu0 0
      %688 = vmatmul.mubr.bf16.gmra.mxu0 %v510
      %v689 = vpop.f32.mrf.mxu0
      %v690 = vadd.f32 0.0, %v689
      %v691 = vpop.f32.mrf.mxu0
      %v692 = vpop.f32.mrf.mxu0
      %v693 = vadd.f32 0.0, %v692
      %v694 = vpop.f32.mrf.mxu0
      %695 = vmatprep.mubr.bf16.mxu0 0
      %696 = vmatmul.mubr.bf16.gmra.mxu0 %v513
      %v697 = vpop.f32.mrf.mxu0
      %v698 = vadd.f32 0.0, %v697
      %v699 = vpop.f32.mrf.mxu0
      %v700 = vpop.f32.mrf.mxu0
      %v701 = vadd.f32 0.0, %v700
      %v702 = vpop.f32.mrf.mxu0
      %703 = vmatprep.mubr.bf16.mxu0 0
      %704 = vmatmul.mubr.bf16.gmra.mxu0 %v516
      %v705 = vpop.f32.mrf.mxu0
      %v706 = vadd.f32 0.0, %v705
      %v707 = vpop.f32.mrf.mxu0
      %v708 = vpop.f32.mrf.mxu0
      %v709 = vadd.f32 0.0, %v708
      %v710 = vpop.f32.mrf.mxu0
      %711 = vmatprep.mubr.bf16.mxu0 0
      %712 = vmatmul.mubr.bf16.gmra.mxu0 %v519
      %v713 = vpop.f32.mrf.mxu0
      %v714 = vadd.f32 0.0, %v713
      %v715 = vpop.f32.mrf.mxu0
      %v716 = vpop.f32.mrf.mxu0
      %v717 = vadd.f32 0.0, %v716
      %v718 = vpop.f32.mrf.mxu0
      %719 = vmatprep.mubr.bf16.mxu0 0
      %720 = vmatmul.mubr.bf16.gmra.mxu0 %v522
      %v721 = vpop.f32.mrf.mxu0
      %v722 = vadd.f32 0.0, %v721
      %v723 = vpop.f32.mrf.mxu0
      %v724 = vpop.f32.mrf.mxu0
      %v725 = vadd.f32 0.0, %v724
      %v726 = vpop.f32.mrf.mxu0
      %727 = vmatprep.mubr.bf16.mxu0 0
      %728 = vmatmul.mubr.bf16.gmra.mxu0 %v525
      %v729 = vpop.f32.mrf.mxu0
      %v730 = vadd.f32 0.0, %v729
      %v731 = vpop.f32.mrf.mxu0
      %v732 = vpop.f32.mrf.mxu0
      %v733 = vadd.f32 0.0, %v732
      %v734 = vpop.f32.mrf.mxu0
      %735 = vmatprep.mubr.bf16.mxu0 0
      %736 = vmatmul.mubr.bf16.gmra.mxu0 %v528
      %v737 = vpop.f32.mrf.mxu0
      %v738 = vadd.f32 0.0, %v737
      %v739 = vpop.f32.mrf.mxu0
      %v740 = vpop.f32.mrf.mxu0
      %v741 = vadd.f32 0.0, %v740
      %v742 = vpop.f32.mrf.mxu0
      %743 = vmatprep.mubr.bf16.mxu0 0
      %744 = vmatmul.mubr.bf16.gmra.mxu0 %v531
      %v745 = vpop.f32.mrf.mxu0
      %v746 = vadd.f32 0.0, %v745
      %v747 = vpop.f32.mrf.mxu0
      %v748 = vpop.f32.mrf.mxu0
      %v749 = vadd.f32 0.0, %v748
      %v750 = vpop.f32.mrf.mxu0
      %751 = vmatprep.mubr.bf16.mxu0 0
      %752 = vmatmul.mubr.bf16.gmra.mxu0 %v534
      %v753 = vpop.f32.mrf.mxu0
      %v754 = vadd.f32 0.0, %v753
      %v755 = vpop.f32.mrf.mxu0
      %v756 = vpop.f32.mrf.mxu0
      %v757 = vadd.f32 0.0, %v756
      %v758 = vpop.f32.mrf.mxu0
      %759 = vmatprep.mubr.bf16.mxu0 0
      %760 = vmatmul.mubr.bf16.gmra.mxu0 %v537
      %v761 = vpop.f32.mrf.mxu0
      %v762 = vadd.f32 0.0, %v761
      %v763 = vpop.f32.mrf.mxu0
      %v764 = vpop.f32.mrf.mxu0
      %v765 = vadd.f32 0.0, %v764
      %v766 = vpop.f32.mrf.mxu0
      %767 = vdwg.mxu0
      %768 = vst [vmem:[#allocation2] sm:$0xff] %v578
      %769 = vst [vmem:[#allocation2 + $0x8] sm:$0xff] %v581
      %770 = vst [vmem:[#allocation2 + $0x10] sm:$0xff] %v586
      %771 = vst [vmem:[#allocation2 + $0x18] sm:$0xff] %v589
      %772 = vst [vmem:[#allocation2 + $0x20] sm:$0xff] %v594
      %773 = vst [vmem:[#allocation2 + $0x28] sm:$0xff] %v597
      %774 = vst [vmem:[#allocation2 + $0x30] sm:$0xff] %v602
      %775 = vst [vmem:[#allocation2 + $0x38] sm:$0xff] %v605
      %776 = vst [vmem:[#allocation2 + $0x40] sm:$0xff] %v610
      %777 = vst [vmem:[#allocation2 + $0x48] sm:$0xff] %v613
      %778 = vst [vmem:[#allocation2 + $0x50] sm:$0xff] %v618
      %779 = vst [vmem:[#allocation2 + $0x58] sm:$0xff] %v621
      %780 = vst [vmem:[#allocation2 + $0x60] sm:$0xff] %v626
      %781 = vst [vmem:[#allocation2 + $0x68] sm:$0xff] %v629
      %782 = vst [vmem:[#allocation2 + $0x70] sm:$0xff] %v634
      %783 = vst [vmem:[#allocation2 + $0x78] sm:$0xff] %v637
      %784 = vst [vmem:[#allocation2 + $0x80] sm:$0xff] %v642
      %785 = vst [vmem:[#allocation2 + $0x88] sm:$0xff] %v645
      %786 = vst [vmem:[#allocation2 + $0x90] sm:$0xff] %v650
      %787 = vst [vmem:[#allocation2 + $0x98] sm:$0xff] %v653
      %788 = vst [vmem:[#allocation2 + $0xa0] sm:$0xff] %v658
      %789 = vst [vmem:[#allocation2 + $0xa8] sm:$0xff] %v661
      %790 = vst [vmem:[#allocation2 + $0xb0] sm:$0xff] %v666
      %791 = vst [vmem:[#allocation2 + $0xb8] sm:$0xff] %v669
      %792 = vst [vmem:[#allocation2 + $0xc0] sm:$0xff] %v674
      %793 = vst [vmem:[#allocation2 + $0xc8] sm:$0xff] %v677
      %794 = vst [vmem:[#allocation2 + $0xd0] sm:$0xff] %v682
      %795 = vst [vmem:[#allocation2 + $0xd8] sm:$0xff] %v685
      %796 = vst [vmem:[#allocation2 + $0xe0] sm:$0xff] %v690
      %797 = vst [vmem:[#allocation2 + $0xe8] sm:$0xff] %v693
      %798 = vst [vmem:[#allocation2 + $0xf0] sm:$0xff] %v698
      %799 = vst [vmem:[#allocation2 + $0xf8] sm:$0xff] %v701
      %800 = vst [vmem:[#allocation2 + $0x100] sm:$0xff] %v706
      %801 = vst [vmem:[#allocation2 + $0x108] sm:$0xff] %v709
      %802 = vst [vmem:[#allocation2 + $0x110] sm:$0xff] %v714
      %803 = vst [vmem:[#allocation2 + $0x118] sm:$0xff] %v717
      %804 = vst [vmem:[#allocation2 + $0x120] sm:$0xff] %v722
      %805 = vst [vmem:[#allocation2 + $0x128] sm:$0xff] %v725
      %806 = vst [vmem:[#allocation2 + $0x130] sm:$0xff] %v730
      %807 = vst [vmem:[#allocation2 + $0x138] sm:$0xff] %v733
      %808 = vst [vmem:[#allocation2 + $0x140] sm:$0xff] %v738
      %809 = vst [vmem:[#allocation2 + $0x148] sm:$0xff] %v741
      %810 = vst [vmem:[#allocation2 + $0x150] sm:$0xff] %v746
      %811 = vst [vmem:[#allocation2 + $0x158] sm:$0xff] %v749
      %812 = vst [vmem:[#allocation2 + $0x160] sm:$0xff] %v754
      %813 = vst [vmem:[#allocation2 + $0x168] sm:$0xff] %v757
      %814 = vst [vmem:[#allocation2 + $0x170] sm:$0xff] %v762
      %815 = vst [vmem:[#allocation2 + $0x178] sm:$0xff] %v765
      %s816 = sadd.s32 %s281, 24
      %s817 = sshra.s32 %s816, 3
      %s818 = sand.u32 %s816, 7
      %s819 = smul.addr %s817, 4
      %s820 = scalar_lea.vmem %s252, %s819
      %v821 = vld [vmem:[%s820] sm:$0xf]
      %v822 = vld [vmem:[%s820 + $0x4] sm:$0xf]
      %v823 = vld [vmem:[%s820 + $0x8] sm:$0xf]
      %v824 = vld [vmem:[%s820 + $0xc] sm:$0xf]
      %v825 = vld [vmem:[%s820 + $0x10] sm:$0xf]
      %v826 = vld [vmem:[%s820 + $0x14] sm:$0xf]
      %v827 = vld [vmem:[%s820 + $0x18] sm:$0xf]
      %v828 = vld [vmem:[%s820 + $0x1c] sm:$0xf]
      %v829 = vld [vmem:[%s820 + $0x20] sm:$0xf]
      %v830 = vld [vmem:[%s820 + $0x24] sm:$0xf]
      %v831 = vld [vmem:[%s820 + $0x28] sm:$0xf]
      %v832 = vld [vmem:[%s820 + $0x2c] sm:$0xf]
      %v833 = vld [vmem:[%s820 + $0x30] sm:$0xf]
      %v834 = vld [vmem:[%s820 + $0x34] sm:$0xf]
      %v835 = vld [vmem:[%s820 + $0x38] sm:$0xf]
      %v836 = vld [vmem:[%s820 + $0x3c] sm:$0xf]
      %v837 = vld [vmem:[%s820 + $0x40] sm:$0xf]
      %v838 = vld [vmem:[%s820 + $0x44] sm:$0xf]
      %v839 = vld [vmem:[%s820 + $0x48] sm:$0xf]
      %v840 = vld [vmem:[%s820 + $0x4c] sm:$0xf]
      %v841 = vld [vmem:[%s820 + $0x50] sm:$0xf]
      %v842 = vld [vmem:[%s820 + $0x54] sm:$0xf]
      %v843 = vld [vmem:[%s820 + $0x58] sm:$0xf]
      %v844 = vld [vmem:[%s820 + $0x5c] sm:$0xf]
      %v845 = vld [vmem:[%s820 + $0x60] sm:$0xf]
      %v846 = vld [vmem:[%s820 + $0x64] sm:$0xf]
      %v847 = vld [vmem:[%s820 + $0x68] sm:$0xf]
      %v848 = vld [vmem:[%s820 + $0x6c] sm:$0xf]
      %v849 = vld [vmem:[%s820 + $0x70] sm:$0xf]
      %v850 = vld [vmem:[%s820 + $0x74] sm:$0xf]
      %v851 = vld [vmem:[%s820 + $0x78] sm:$0xf]
      %v852 = vld [vmem:[%s820 + $0x7c] sm:$0xf]
      %v853 = vld [vmem:[%s820 + $0x80] sm:$0xf]
      %v854 = vld [vmem:[%s820 + $0x84] sm:$0xf]
      %v855 = vld [vmem:[%s820 + $0x88] sm:$0xf]
      %v856 = vld [vmem:[%s820 + $0x8c] sm:$0xf]
      %v857 = vld [vmem:[%s820 + $0x90] sm:$0xf]
      %v858 = vld [vmem:[%s820 + $0x94] sm:$0xf]
      %v859 = vld [vmem:[%s820 + $0x98] sm:$0xf]
      %v860 = vld [vmem:[%s820 + $0x9c] sm:$0xf]
      %v861 = vld [vmem:[%s820 + $0xa0] sm:$0xf]
      %v862 = vld [vmem:[%s820 + $0xa4] sm:$0xf]
      %v863 = vld [vmem:[%s820 + $0xa8] sm:$0xf]
      %v864 = vld [vmem:[%s820 + $0xac] sm:$0xf]
      %v865 = vld [vmem:[%s820 + $0xb0] sm:$0xf]
      %v866 = vld [vmem:[%s820 + $0xb4] sm:$0xf]
      %v867 = vld [vmem:[%s820 + $0xb8] sm:$0xf]
      %v868 = vld [vmem:[%s820 + $0xbc] sm:$0xf]
      %s869 = scalar_lea.vmem %s256, 12
      %v870 = vld [vmem:[%s869] sm:$0xf]
      %v871 = vld [vmem:[%s869 + $0x4] sm:$0xf]
      %v872 = vld [vmem:[%s869 + $0x8] sm:$0xf]
      %v921 = vunpack.c.l.b16 %v821
      %v922 = vunpack.c.l.b16 %v822
      %v923 = vunpack.c.l.b16 %v823
      %v924 = vunpack.c.l.b16 %v824
      %v925 = vunpack.c.l.b16 %v825
      %v926 = vunpack.c.l.b16 %v826
      %v927 = vunpack.c.l.b16 %v827
      %v928 = vunpack.c.l.b16 %v828
      %v929 = vunpack.c.l.b16 %v829
      %v930 = vunpack.c.l.b16 %v830
      %v931 = vunpack.c.l.b16 %v831
      %v932 = vunpack.c.l.b16 %v832
      %v933 = vunpack.c.l.b16 %v833
      %v934 = vunpack.c.l.b16 %v834
      %v935 = vunpack.c.l.b16 %v835
      %v936 = vunpack.c.l.b16 %v836
      %v937 = vunpack.c.l.b16 %v837
      %v938 = vunpack.c.l.b16 %v838
      %v939 = vunpack.c.l.b16 %v839
      %v940 = vunpack.c.l.b16 %v840
      %v941 = vunpack.c.l.b16 %v841
      %v942 = vunpack.c.l.b16 %v842
      %v943 = vunpack.c.l.b16 %v843
      %v944 = vunpack.c.l.b16 %v844
      %v945 = vunpack.c.l.b16 %v845
      %v946 = vunpack.c.l.b16 %v846
      %v947 = vunpack.c.l.b16 %v847
      %v948 = vunpack.c.l.b16 %v848
      %v949 = vunpack.c.l.b16 %v849
      %v950 = vunpack.c.l.b16 %v850
      %v951 = vunpack.c.l.b16 %v851
      %v952 = vunpack.c.l.b16 %v852
      %v953 = vunpack.c.l.b16 %v853
      %v954 = vunpack.c.l.b16 %v854
      %v955 = vunpack.c.l.b16 %v855
      %v956 = vunpack.c.l.b16 %v856
      %v957 = vunpack.c.l.b16 %v857
      %v958 = vunpack.c.l.b16 %v858
      %v959 = vunpack.c.l.b16 %v859
      %v960 = vunpack.c.l.b16 %v860
      %v961 = vunpack.c.l.b16 %v861
      %v962 = vunpack.c.l.b16 %v862
      %v963 = vunpack.c.l.b16 %v863
      %v964 = vunpack.c.l.b16 %v864
      %v965 = vunpack.c.l.b16 %v865
      %v966 = vunpack.c.l.b16 %v866
      %v967 = vunpack.c.l.b16 %v867
      %v968 = vunpack.c.l.b16 %v868
      %v969 = vpack.c.b16 %v922, %v921
      %v970 = vpack.c.b16 %v924, %v923
      %v971 = vpack.c.b16 %v926, %v925
      %v972 = vpack.c.b16 %v928, %v927
      %v973 = vpack.c.b16 %v930, %v929
      %v974 = vpack.c.b16 %v932, %v931
      %v975 = vpack.c.b16 %v934, %v933
      %v976 = vpack.c.b16 %v936, %v935
      %v977 = vpack.c.b16 %v938, %v937
      %v978 = vpack.c.b16 %v940, %v939
      %v979 = vpack.c.b16 %v942, %v941
      %v980 = vpack.c.b16 %v944, %v943
      %v981 = vpack.c.b16 %v946, %v945
      %v982 = vpack.c.b16 %v948, %v947
      %v983 = vpack.c.b16 %v950, %v949
      %v984 = vpack.c.b16 %v952, %v951
      %v985 = vpack.c.b16 %v954, %v953
      %v986 = vpack.c.b16 %v956, %v955
      %v987 = vpack.c.b16 %v958, %v957
      %v988 = vpack.c.b16 %v960, %v959
      %v989 = vpack.c.b16 %v962, %v961
      %v990 = vpack.c.b16 %v964, %v963
      %v991 = vpack.c.b16 %v966, %v965
      %v992 = vpack.c.b16 %v968, %v967
      %v996 = vunpack.c.l.b16 %v870
      %v997 = vunpack.c.l.b16 %v871
      %v998 = vunpack.c.l.b16 %v872
      %v999 = vpack.c.b16 %v997, %v996
      %v1000 = vpack.c.b16 %v998, %v998
      %v1003 = vsel %vm466, %v969, 0
      %v1006 = vsel %vm466, %v970, 0
      %v1009 = vsel %vm466, %v971, 0
      %v1012 = vsel %vm466, %v972, 0
      %v1015 = vsel %vm466, %v973, 0
      %v1018 = vsel %vm466, %v974, 0
      %v1021 = vsel %vm466, %v975, 0
      %v1024 = vsel %vm466, %v976, 0
      %v1027 = vsel %vm466, %v977, 0
      %v1030 = vsel %vm466, %v978, 0
      %v1033 = vsel %vm466, %v979, 0
      %v1036 = vsel %vm466, %v980, 0
      %v1039 = vsel %vm466, %v981, 0
      %v1042 = vsel %vm466, %v982, 0
      %v1045 = vsel %vm466, %v983, 0
      %v1048 = vsel %vm466, %v984, 0
      %v1051 = vsel %vm466, %v985, 0
      %v1054 = vsel %vm466, %v986, 0
      %v1057 = vsel %vm466, %v987, 0
      %v1060 = vsel %vm466, %v988, 0
      %v1063 = vsel %vm466, %v989, 0
      %v1066 = vsel %vm466, %v990, 0
      %v1069 = vsel %vm466, %v991, 0
      %v1072 = vsel %vm466, %v992, 0
      %v1075 = vsel %vm539, %v1000, 0
      %1077 = vmatprep.subr.bf16.mxu0 0
      %1078 = vmatpush1.bf16.msra.mxu0 0
      %1079 = vmatprep.subr.bf16.mxu0 0
      %1080 = vmatpush1.bf16.msra.mxu0 0
      %1081 = vmatprep.subr.bf16.mxu0 0
      %1082 = vmatpush1.bf16.msra.mxu0 0
      %1083 = vmatprep.subr.bf16.mxu0 0
      %1084 = vmatpush1.bf16.msra.mxu0 0
      %1085 = vmatprep.subr.bf16.mxu0 0
      %1086 = vmatpush1.bf16.msra.mxu0 0
      %1087 = vmatprep.subr.bf16.mxu0 0
      %1088 = vmatpush1.bf16.msra.mxu0 0
      %1089 = vmatprep.subr.bf16.mxu0 0
      %1090 = vmatpush1.bf16.msra.mxu0 %v1075
      %1091 = vmatprep.subr.bf16.mxu0 0
      %1092 = vmatpush1.bf16.msra.mxu0 %v999
      %1093 = vmatprep.subr.bf16.mxu0 0
      %1094 = vmatpush2.bf16.msra.mxu0 0
      %1095 = vmatprep.subr.bf16.mxu0 0
      %1096 = vmatpush2.bf16.msra.mxu0 0
      %1097 = vmatprep.subr.bf16.mxu0 0
      %1098 = vmatpush2.bf16.msra.mxu0 0
      %1099 = vmatprep.subr.bf16.mxu0 0
      %1100 = vmatpush2.bf16.msra.mxu0 0
      %1101 = vmatprep.subr.bf16.mxu0 0
      %1102 = vmatpush2.bf16.msra.mxu0 0
      %1103 = vmatprep.subr.bf16.mxu0 0
      %1104 = vmatpush2.bf16.msra.mxu0 0
      %1105 = vmatprep.subr.bf16.mxu0 0
      %1106 = vmatpush2.bf16.msra.mxu0 0
      %1107 = vmatprep.subr.bf16.mxu0 0
      %1108 = vmatpush2.bf16.msra.mxu0 0
      %1109 = vmatprep.mubr.bf16.mxu0 0
      %1110 = vmatmul.mubr.bf16.gmra.mxu0 %v1003
      %v1111 = vpop.f32.mrf.mxu0
      %v1112 = vadd.f32 0.0, %v1111
      %v1113 = vpop.f32.mrf.mxu0
      %v1114 = vpop.f32.mrf.mxu0
      %v1115 = vadd.f32 0.0, %v1114
      %v1116 = vpop.f32.mrf.mxu0
      %1117 = vmatprep.mubr.bf16.mxu0 0
      %1118 = vmatmul.mubr.bf16.gmra.mxu0 %v1006
      %v1119 = vpop.f32.mrf.mxu0
      %v1120 = vadd.f32 0.0, %v1119
      %v1121 = vpop.f32.mrf.mxu0
      %v1122 = vpop.f32.mrf.mxu0
      %v1123 = vadd.f32 0.0, %v1122
      %v1124 = vpop.f32.mrf.mxu0
      %1125 = vmatprep.mubr.bf16.mxu0 0
      %1126 = vmatmul.mubr.bf16.gmra.mxu0 %v1009
      %v1127 = vpop.f32.mrf.mxu0
      %v1128 = vadd.f32 0.0, %v1127
      %v1129 = vpop.f32.mrf.mxu0
      %v1130 = vpop.f32.mrf.mxu0
      %v1131 = vadd.f32 0.0, %v1130
      %v1132 = vpop.f32.mrf.mxu0
      %1133 = vmatprep.mubr.bf16.mxu0 0
      %1134 = vmatmul.mubr.bf16.gmra.mxu0 %v1012
      %v1135 = vpop.f32.mrf.mxu0
      %v1136 = vadd.f32 0.0, %v1135
      %v1137 = vpop.f32.mrf.mxu0
      %v1138 = vpop.f32.mrf.mxu0
      %v1139 = vadd.f32 0.0, %v1138
      %v1140 = vpop.f32.mrf.mxu0
      %1141 = vmatprep.mubr.bf16.mxu0 0
      %1142 = vmatmul.mubr.bf16.gmra.mxu0 %v1015
      %v1143 = vpop.f32.mrf.mxu0
      %v1144 = vadd.f32 0.0, %v1143
      %v1145 = vpop.f32.mrf.mxu0
      %v1146 = vpop.f32.mrf.mxu0
      %v1147 = vadd.f32 0.0, %v1146
      %v1148 = vpop.f32.mrf.mxu0
      %1149 = vmatprep.mubr.bf16.mxu0 0
      %1150 = vmatmul.mubr.bf16.gmra.mxu0 %v1018
      %v1151 = vpop.f32.mrf.mxu0
      %v1152 = vadd.f32 0.0, %v1151
      %v1153 = vpop.f32.mrf.mxu0
      %v1154 = vpop.f32.mrf.mxu0
      %v1155 = vadd.f32 0.0, %v1154
      %v1156 = vpop.f32.mrf.mxu0
      %1157 = vmatprep.mubr.bf16.mxu0 0
      %1158 = vmatmul.mubr.bf16.gmra.mxu0 %v1021
      %v1159 = vpop.f32.mrf.mxu0
      %v1160 = vadd.f32 0.0, %v1159
      %v1161 = vpop.f32.mrf.mxu0
      %v1162 = vpop.f32.mrf.mxu0
      %v1163 = vadd.f32 0.0, %v1162
      %v1164 = vpop.f32.mrf.mxu0
      %1165 = vmatprep.mubr.bf16.mxu0 0
      %1166 = vmatmul.mubr.bf16.gmra.mxu0 %v1024
      %v1167 = vpop.f32.mrf.mxu0
      %v1168 = vadd.f32 0.0, %v1167
      %v1169 = vpop.f32.mrf.mxu0
      %v1170 = vpop.f32.mrf.mxu0
      %v1171 = vadd.f32 0.0, %v1170
      %v1172 = vpop.f32.mrf.mxu0
      %1173 = vmatprep.mubr.bf16.mxu0 0
      %1174 = vmatmul.mubr.bf16.gmra.mxu0 %v1027
      %v1175 = vpop.f32.mrf.mxu0
      %v1176 = vadd.f32 0.0, %v1175
      %v1177 = vpop.f32.mrf.mxu0
      %v1178 = vpop.f32.mrf.mxu0
      %v1179 = vadd.f32 0.0, %v1178
      %v1180 = vpop.f32.mrf.mxu0
      %1181 = vmatprep.mubr.bf16.mxu0 0
      %1182 = vmatmul.mubr.bf16.gmra.mxu0 %v1030
      %v1183 = vpop.f32.mrf.mxu0
      %v1184 = vadd.f32 0.0, %v1183
      %v1185 = vpop.f32.mrf.mxu0
      %v1186 = vpop.f32.mrf.mxu0
      %v1187 = vadd.f32 0.0, %v1186
      %v1188 = vpop.f32.mrf.mxu0
      %1189 = vmatprep.mubr.bf16.mxu0 0
      %1190 = vmatmul.mubr.bf16.gmra.mxu0 %v1033
      %v1191 = vpop.f32.mrf.mxu0
      %v1192 = vadd.f32 0.0, %v1191
      %v1193 = vpop.f32.mrf.mxu0
      %v1194 = vpop.f32.mrf.mxu0
      %v1195 = vadd.f32 0.0, %v1194
      %v1196 = vpop.f32.mrf.mxu0
      %1197 = vmatprep.mubr.bf16.mxu0 0
      %1198 = vmatmul.mubr.bf16.gmra.mxu0 %v1036
      %v1199 = vpop.f32.mrf.mxu0
      %v1200 = vadd.f32 0.0, %v1199
      %v1201 = vpop.f32.mrf.mxu0
      %v1202 = vpop.f32.mrf.mxu0
      %v1203 = vadd.f32 0.0, %v1202
      %v1204 = vpop.f32.mrf.mxu0
      %1205 = vmatprep.mubr.bf16.mxu0 0
      %1206 = vmatmul.mubr.bf16.gmra.mxu0 %v1039
      %v1207 = vpop.f32.mrf.mxu0
      %v1208 = vadd.f32 0.0, %v1207
      %v1209 = vpop.f32.mrf.mxu0
      %v1210 = vpop.f32.mrf.mxu0
      %v1211 = vadd.f32 0.0, %v1210
      %v1212 = vpop.f32.mrf.mxu0
      %1213 = vmatprep.mubr.bf16.mxu0 0
      %1214 = vmatmul.mubr.bf16.gmra.mxu0 %v1042
      %v1215 = vpop.f32.mrf.mxu0
      %v1216 = vadd.f32 0.0, %v1215
      %v1217 = vpop.f32.mrf.mxu0
      %v1218 = vpop.f32.mrf.mxu0
      %v1219 = vadd.f32 0.0, %v1218
      %v1220 = vpop.f32.mrf.mxu0
      %1221 = vmatprep.mubr.bf16.mxu0 0
      %1222 = vmatmul.mubr.bf16.gmra.mxu0 %v1045
      %v1223 = vpop.f32.mrf.mxu0
      %v1224 = vadd.f32 0.0, %v1223
      %v1225 = vpop.f32.mrf.mxu0
      %v1226 = vpop.f32.mrf.mxu0
      %v1227 = vadd.f32 0.0, %v1226
      %v1228 = vpop.f32.mrf.mxu0
      %1229 = vmatprep.mubr.bf16.mxu0 0
      %1230 = vmatmul.mubr.bf16.gmra.mxu0 %v1048
      %v1231 = vpop.f32.mrf.mxu0
      %v1232 = vadd.f32 0.0, %v1231
      %v1233 = vpop.f32.mrf.mxu0
      %v1234 = vpop.f32.mrf.mxu0
      %v1235 = vadd.f32 0.0, %v1234
      %v1236 = vpop.f32.mrf.mxu0
      %1237 = vmatprep.mubr.bf16.mxu0 0
      %1238 = vmatmul.mubr.bf16.gmra.mxu0 %v1051
      %v1239 = vpop.f32.mrf.mxu0
      %v1240 = vadd.f32 0.0, %v1239
      %v1241 = vpop.f32.mrf.mxu0
      %v1242 = vpop.f32.mrf.mxu0
      %v1243 = vadd.f32 0.0, %v1242
      %v1244 = vpop.f32.mrf.mxu0
      %1245 = vmatprep.mubr.bf16.mxu0 0
      %1246 = vmatmul.mubr.bf16.gmra.mxu0 %v1054
      %v1247 = vpop.f32.mrf.mxu0
      %v1248 = vadd.f32 0.0, %v1247
      %v1249 = vpop.f32.mrf.mxu0
      %v1250 = vpop.f32.mrf.mxu0
      %v1251 = vadd.f32 0.0, %v1250
      %v1252 = vpop.f32.mrf.mxu0
      %1253 = vmatprep.mubr.bf16.mxu0 0
      %1254 = vmatmul.mubr.bf16.gmra.mxu0 %v1057
      %v1255 = vpop.f32.mrf.mxu0
      %v1256 = vadd.f32 0.0, %v1255
      %v1257 = vpop.f32.mrf.mxu0
      %v1258 = vpop.f32.mrf.mxu0
      %v1259 = vadd.f32 0.0, %v1258
      %v1260 = vpop.f32.mrf.mxu0
      %1261 = vmatprep.mubr.bf16.mxu0 0
      %1262 = vmatmul.mubr.bf16.gmra.mxu0 %v1060
      %v1263 = vpop.f32.mrf.mxu0
      %v1264 = vadd.f32 0.0, %v1263
      %v1265 = vpop.f32.mrf.mxu0
      %v1266 = vpop.f32.mrf.mxu0
      %v1267 = vadd.f32 0.0, %v1266
      %v1268 = vpop.f32.mrf.mxu0
      %1269 = vmatprep.mubr.bf16.mxu0 0
      %1270 = vmatmul.mubr.bf16.gmra.mxu0 %v1063
      %v1271 = vpop.f32.mrf.mxu0
      %v1272 = vadd.f32 0.0, %v1271
      %v1273 = vpop.f32.mrf.mxu0
      %v1274 = vpop.f32.mrf.mxu0
      %v1275 = vadd.f32 0.0, %v1274
      %v1276 = vpop.f32.mrf.mxu0
      %1277 = vmatprep.mubr.bf16.mxu0 0
      %1278 = vmatmul.mubr.bf16.gmra.mxu0 %v1066
      %v1279 = vpop.f32.mrf.mxu0
      %v1280 = vadd.f32 0.0, %v1279
      %v1281 = vpop.f32.mrf.mxu0
      %v1282 = vpop.f32.mrf.mxu0
      %v1283 = vadd.f32 0.0, %v1282
      %v1284 = vpop.f32.mrf.mxu0
      %1285 = vmatprep.mubr.bf16.mxu0 0
      %1286 = vmatmul.mubr.bf16.gmra.mxu0 %v1069
      %v1287 = vpop.f32.mrf.mxu0
      %v1288 = vadd.f32 0.0, %v1287
      %v1289 = vpop.f32.mrf.mxu0
      %v1290 = vpop.f32.mrf.mxu0
      %v1291 = vadd.f32 0.0, %v1290
      %v1292 = vpop.f32.mrf.mxu0
      %1293 = vmatprep.mubr.bf16.mxu0 0
      %1294 = vmatmul.mubr.bf16.gmra.mxu0 %v1072
      %v1295 = vpop.f32.mrf.mxu0
      %v1296 = vadd.f32 0.0, %v1295
      %v1297 = vpop.f32.mrf.mxu0
      %v1298 = vpop.f32.mrf.mxu0
      %v1299 = vadd.f32 0.0, %v1298
      %v1300 = vpop.f32.mrf.mxu0
      %1301 = vdwg.mxu0
      %v1302 = vld [vmem:[#allocation2] sm:$0xff]
      %v1303 = vld [vmem:[#allocation2 + $0x8] sm:$0xff]
      %v1304 = vld [vmem:[#allocation2 + $0x10] sm:$0xff]
      %v1305 = vld [vmem:[#allocation2 + $0x18] sm:$0xff]
      %v1306 = vld [vmem:[#allocation2 + $0x20] sm:$0xff]
      %v1307 = vld [vmem:[#allocation2 + $0x28] sm:$0xff]
      %v1308 = vld [vmem:[#allocation2 + $0x30] sm:$0xff]
      %v1309 = vld [vmem:[#allocation2 + $0x38] sm:$0xff]
      %v1310 = vld [vmem:[#allocation2 + $0x40] sm:$0xff]
      %v1311 = vld [vmem:[#allocation2 + $0x48] sm:$0xff]
      %v1312 = vld [vmem:[#allocation2 + $0x50] sm:$0xff]
      %v1313 = vld [vmem:[#allocation2 + $0x58] sm:$0xff]
      %v1314 = vld [vmem:[#allocation2 + $0x60] sm:$0xff]
      %v1315 = vld [vmem:[#allocation2 + $0x68] sm:$0xff]
      %v1316 = vld [vmem:[#allocation2 + $0x70] sm:$0xff]
      %v1317 = vld [vmem:[#allocation2 + $0x78] sm:$0xff]
      %v1318 = vld [vmem:[#allocation2 + $0x80] sm:$0xff]
      %v1319 = vld [vmem:[#allocation2 + $0x88] sm:$0xff]
      %v1320 = vld [vmem:[#allocation2 + $0x90] sm:$0xff]
      %v1321 = vld [vmem:[#allocation2 + $0x98] sm:$0xff]
      %v1322 = vld [vmem:[#allocation2 + $0xa0] sm:$0xff]
      %v1323 = vld [vmem:[#allocation2 + $0xa8] sm:$0xff]
      %v1324 = vld [vmem:[#allocation2 + $0xb0] sm:$0xff]
      %v1325 = vld [vmem:[#allocation2 + $0xb8] sm:$0xff]
      %v1326 = vld [vmem:[#allocation2 + $0xc0] sm:$0xff]
      %v1327 = vld [vmem:[#allocation2 + $0xc8] sm:$0xff]
      %v1328 = vld [vmem:[#allocation2 + $0xd0] sm:$0xff]
      %v1329 = vld [vmem:[#allocation2 + $0xd8] sm:$0xff]
      %v1330 = vld [vmem:[#allocation2 + $0xe0] sm:$0xff]
      %v1331 = vld [vmem:[#allocation2 + $0xe8] sm:$0xff]
      %v1332 = vld [vmem:[#allocation2 + $0xf0] sm:$0xff]
      %v1333 = vld [vmem:[#allocation2 + $0xf8] sm:$0xff]
      %v1334 = vld [vmem:[#allocation2 + $0x100] sm:$0xff]
      %v1335 = vld [vmem:[#allocation2 + $0x108] sm:$0xff]
      %v1336 = vld [vmem:[#allocation2 + $0x110] sm:$0xff]
      %v1337 = vld [vmem:[#allocation2 + $0x118] sm:$0xff]
      %v1338 = vld [vmem:[#allocation2 + $0x120] sm:$0xff]
      %v1339 = vld [vmem:[#allocation2 + $0x128] sm:$0xff]
      %v1340 = vld [vmem:[#allocation2 + $0x130] sm:$0xff]
      %v1341 = vld [vmem:[#allocation2 + $0x138] sm:$0xff]
      %v1342 = vld [vmem:[#allocation2 + $0x140] sm:$0xff]
      %v1343 = vld [vmem:[#allocation2 + $0x148] sm:$0xff]
      %v1344 = vld [vmem:[#allocation2 + $0x150] sm:$0xff]
      %v1345 = vld [vmem:[#allocation2 + $0x158] sm:$0xff]
      %v1346 = vld [vmem:[#allocation2 + $0x160] sm:$0xff]
      %v1347 = vld [vmem:[#allocation2 + $0x168] sm:$0xff]
      %v1348 = vld [vmem:[#allocation2 + $0x170] sm:$0xff]
      %v1349 = vld [vmem:[#allocation2 + $0x178] sm:$0xff]
      %v1350 = vadd.f32 %v1302, %v1112
      %v1351 = vadd.f32 %v1303, %v1115
      %v1352 = vadd.f32 %v1304, %v1120
      %v1353 = vadd.f32 %v1305, %v1123
      %v1354 = vadd.f32 %v1306, %v1128
      %v1355 = vadd.f32 %v1307, %v1131
      %v1356 = vadd.f32 %v1308, %v1136
      %v1357 = vadd.f32 %v1309, %v1139
      %v1358 = vadd.f32 %v1310, %v1144
      %v1359 = vadd.f32 %v1311, %v1147
      %v1360 = vadd.f32 %v1312, %v1152
      %v1361 = vadd.f32 %v1313, %v1155
      %v1362 = vadd.f32 %v1314, %v1160
      %v1363 = vadd.f32 %v1315, %v1163
      %v1364 = vadd.f32 %v1316, %v1168
      %v1365 = vadd.f32 %v1317, %v1171
      %v1366 = vadd.f32 %v1318, %v1176
      %v1367 = vadd.f32 %v1319, %v1179
      %v1368 = vadd.f32 %v1320, %v1184
      %v1369 = vadd.f32 %v1321, %v1187
      %v1370 = vadd.f32 %v1322, %v1192
      %v1371 = vadd.f32 %v1323, %v1195
      %v1372 = vadd.f32 %v1324, %v1200
      %v1373 = vadd.f32 %v1325, %v1203
      %v1374 = vadd.f32 %v1326, %v1208
      %v1375 = vadd.f32 %v1327, %v1211
      %v1376 = vadd.f32 %v1328, %v1216
      %v1377 = vadd.f32 %v1329, %v1219
      %v1378 = vadd.f32 %v1330, %v1224
      %v1379 = vadd.f32 %v1331, %v1227
      %v1380 = vadd.f32 %v1332, %v1232
      %v1381 = vadd.f32 %v1333, %v1235
      %v1382 = vadd.f32 %v1334, %v1240
      %v1383 = vadd.f32 %v1335, %v1243
      %v1384 = vadd.f32 %v1336, %v1248
      %v1385 = vadd.f32 %v1337, %v1251
      %v1386 = vadd.f32 %v1338, %v1256
      %v1387 = vadd.f32 %v1339, %v1259
      %v1388 = vadd.f32 %v1340, %v1264
      %v1389 = vadd.f32 %v1341, %v1267
      %v1390 = vadd.f32 %v1342, %v1272
      %v1391 = vadd.f32 %v1343, %v1275
      %v1392 = vadd.f32 %v1344, %v1280
      %v1393 = vadd.f32 %v1345, %v1283
      %v1394 = vadd.f32 %v1346, %v1288
      %v1395 = vadd.f32 %v1347, %v1291
      %v1396 = vadd.f32 %v1348, %v1296
      %v1397 = vadd.f32 %v1349, %v1299
      %1398 = vst [vmem:[#allocation2] sm:$0xff] %v1350
      %1399 = vst [vmem:[#allocation2 + $0x8] sm:$0xff] %v1351
      %1400 = vst [vmem:[#allocation2 + $0x10] sm:$0xff] %v1352
      %1401 = vst [vmem:[#allocation2 + $0x18] sm:$0xff] %v1353
      %1402 = vst [vmem:[#allocation2 + $0x20] sm:$0xff] %v1354
      %1403 = vst [vmem:[#allocation2 + $0x28] sm:$0xff] %v1355
      %1404 = vst [vmem:[#allocation2 + $0x30] sm:$0xff] %v1356
      %1405 = vst [vmem:[#allocation2 + $0x38] sm:$0xff] %v1357
      %1406 = vst [vmem:[#allocation2 + $0x40] sm:$0xff] %v1358
      %1407 = vst [vmem:[#allocation2 + $0x48] sm:$0xff] %v1359
      %1408 = vst [vmem:[#allocation2 + $0x50] sm:$0xff] %v1360
      %1409 = vst [vmem:[#allocation2 + $0x58] sm:$0xff] %v1361
      %1410 = vst [vmem:[#allocation2 + $0x60] sm:$0xff] %v1362
      %1411 = vst [vmem:[#allocation2 + $0x68] sm:$0xff] %v1363
      %1412 = vst [vmem:[#allocation2 + $0x70] sm:$0xff] %v1364
      %1413 = vst [vmem:[#allocation2 + $0x78] sm:$0xff] %v1365
      %1414 = vst [vmem:[#allocation2 + $0x80] sm:$0xff] %v1366
      %1415 = vst [vmem:[#allocation2 + $0x88] sm:$0xff] %v1367
      %1416 = vst [vmem:[#allocation2 + $0x90] sm:$0xff] %v1368
      %1417 = vst [vmem:[#allocation2 + $0x98] sm:$0xff] %v1369
      %1418 = vst [vmem:[#allocation2 + $0xa0] sm:$0xff] %v1370
      %1419 = vst [vmem:[#allocation2 + $0xa8] sm:$0xff] %v1371
      %1420 = vst [vmem:[#allocation2 + $0xb0] sm:$0xff] %v1372
      %1421 = vst [vmem:[#allocation2 + $0xb8] sm:$0xff] %v1373
      %1422 = vst [vmem:[#allocation2 + $0xc0] sm:$0xff] %v1374
      %1423 = vst [vmem:[#allocation2 + $0xc8] sm:$0xff] %v1375
      %1424 = vst [vmem:[#allocation2 + $0xd0] sm:$0xff] %v1376
      %1425 = vst [vmem:[#allocation2 + $0xd8] sm:$0xff] %v1377
      %1426 = vst [vmem:[#allocation2 + $0xe0] sm:$0xff] %v1378
      %1427 = vst [vmem:[#allocation2 + $0xe8] sm:$0xff] %v1379
      %1428 = vst [vmem:[#allocation2 + $0xf0] sm:$0xff] %v1380
      %1429 = vst [vmem:[#allocation2 + $0xf8] sm:$0xff] %v1381
      %1430 = vst [vmem:[#allocation2 + $0x100] sm:$0xff] %v1382
      %1431 = vst [vmem:[#allocation2 + $0x108] sm:$0xff] %v1383
      %1432 = vst [vmem:[#allocation2 + $0x110] sm:$0xff] %v1384
      %1433 = vst [vmem:[#allocation2 + $0x118] sm:$0xff] %v1385
      %1434 = vst [vmem:[#allocation2 + $0x120] sm:$0xff] %v1386
      %1435 = vst [vmem:[#allocation2 + $0x128] sm:$0xff] %v1387
      %1436 = vst [vmem:[#allocation2 + $0x130] sm:$0xff] %v1388
      %1437 = vst [vmem:[#allocation2 + $0x138] sm:$0xff] %v1389
      %1438 = vst [vmem:[#allocation2 + $0x140] sm:$0xff] %v1390
      %1439 = vst [vmem:[#allocation2 + $0x148] sm:$0xff] %v1391
      %1440 = vst [vmem:[#allocation2 + $0x150] sm:$0xff] %v1392
      %1441 = vst [vmem:[#allocation2 + $0x158] sm:$0xff] %v1393
      %1442 = vst [vmem:[#allocation2 + $0x160] sm:$0xff] %v1394
      %1443 = vst [vmem:[#allocation2 + $0x168] sm:$0xff] %v1395
      %1444 = vst [vmem:[#allocation2 + $0x170] sm:$0xff] %v1396
      %1445 = vst [vmem:[#allocation2 + $0x178] sm:$0xff] %v1397
      %s1446 = sadd.s32 %s281, 48
      %s1447 = sshra.s32 %s1446, 3
      %s1448 = sand.u32 %s1446, 7
      %s1449 = smul.addr %s1447, 4
      %s1450 = scalar_lea.vmem %s252, %s1449
      %v1451 = vld [vmem:[%s1450] sm:$0xf]
      %v1452 = vld [vmem:[%s1450 + $0x4] sm:$0xf]
      %v1453 = vld [vmem:[%s1450 + $0x8] sm:$0xf]
      %v1454 = vld [vmem:[%s1450 + $0xc] sm:$0xf]
      %v1455 = vld [vmem:[%s1450 + $0x10] sm:$0xf]
      %v1456 = vld [vmem:[%s1450 + $0x14] sm:$0xf]
      %v1457 = vld [vmem:[%s1450 + $0x18] sm:$0xf]
      %v1458 = vld [vmem:[%s1450 + $0x1c] sm:$0xf]
      %v1459 = vld [vmem:[%s1450 + $0x20] sm:$0xf]
      %v1460 = vld [vmem:[%s1450 + $0x24] sm:$0xf]
      %v1461 = vld [vmem:[%s1450 + $0x28] sm:$0xf]
      %v1462 = vld [vmem:[%s1450 + $0x2c] sm:$0xf]
      %v1463 = vld [vmem:[%s1450 + $0x30] sm:$0xf]
      %v1464 = vld [vmem:[%s1450 + $0x34] sm:$0xf]
      %v1465 = vld [vmem:[%s1450 + $0x38] sm:$0xf]
      %v1466 = vld [vmem:[%s1450 + $0x3c] sm:$0xf]
      %v1467 = vld [vmem:[%s1450 + $0x40] sm:$0xf]
      %v1468 = vld [vmem:[%s1450 + $0x44] sm:$0xf]
      %v1469 = vld [vmem:[%s1450 + $0x48] sm:$0xf]
      %v1470 = vld [vmem:[%s1450 + $0x4c] sm:$0xf]
      %v1471 = vld [vmem:[%s1450 + $0x50] sm:$0xf]
      %v1472 = vld [vmem:[%s1450 + $0x54] sm:$0xf]
      %v1473 = vld [vmem:[%s1450 + $0x58] sm:$0xf]
      %v1474 = vld [vmem:[%s1450 + $0x5c] sm:$0xf]
      %v1475 = vld [vmem:[%s1450 + $0x60] sm:$0xf]
      %v1476 = vld [vmem:[%s1450 + $0x64] sm:$0xf]
      %v1477 = vld [vmem:[%s1450 + $0x68] sm:$0xf]
      %v1478 = vld [vmem:[%s1450 + $0x6c] sm:$0xf]
      %v1479 = vld [vmem:[%s1450 + $0x70] sm:$0xf]
      %v1480 = vld [vmem:[%s1450 + $0x74] sm:$0xf]
      %v1481 = vld [vmem:[%s1450 + $0x78] sm:$0xf]
      %v1482 = vld [vmem:[%s1450 + $0x7c] sm:$0xf]
      %v1483 = vld [vmem:[%s1450 + $0x80] sm:$0xf]
      %v1484 = vld [vmem:[%s1450 + $0x84] sm:$0xf]
      %v1485 = vld [vmem:[%s1450 + $0x88] sm:$0xf]
      %v1486 = vld [vmem:[%s1450 + $0x8c] sm:$0xf]
      %v1487 = vld [vmem:[%s1450 + $0x90] sm:$0xf]
      %v1488 = vld [vmem:[%s1450 + $0x94] sm:$0xf]
      %v1489 = vld [vmem:[%s1450 + $0x98] sm:$0xf]
      %v1490 = vld [vmem:[%s1450 + $0x9c] sm:$0xf]
      %v1491 = vld [vmem:[%s1450 + $0xa0] sm:$0xf]
      %v1492 = vld [vmem:[%s1450 + $0xa4] sm:$0xf]
      %v1493 = vld [vmem:[%s1450 + $0xa8] sm:$0xf]
      %v1494 = vld [vmem:[%s1450 + $0xac] sm:$0xf]
      %v1495 = vld [vmem:[%s1450 + $0xb0] sm:$0xf]
      %v1496 = vld [vmem:[%s1450 + $0xb4] sm:$0xf]
      %v1497 = vld [vmem:[%s1450 + $0xb8] sm:$0xf]
      %v1498 = vld [vmem:[%s1450 + $0xbc] sm:$0xf]
      %s1499 = scalar_lea.vmem %s256, 24
      %v1500 = vld [vmem:[%s1499] sm:$0xf]
      %v1501 = vld [vmem:[%s1499 + $0x4] sm:$0xf]
      %v1502 = vld [vmem:[%s1499 + $0x8] sm:$0xf]
      %v1551 = vunpack.c.l.b16 %v1451
      %v1552 = vunpack.c.l.b16 %v1452
      %v1553 = vunpack.c.l.b16 %v1453
      %v1554 = vunpack.c.l.b16 %v1454
      %v1555 = vunpack.c.l.b16 %v1455
      %v1556 = vunpack.c.l.b16 %v1456
      %v1557 = vunpack.c.l.b16 %v1457
      %v1558 = vunpack.c.l.b16 %v1458
      %v1559 = vunpack.c.l.b16 %v1459
      %v1560 = vunpack.c.l.b16 %v1460
      %v1561 = vunpack.c.l.b16 %v1461
      %v1562 = vunpack.c.l.b16 %v1462
      %v1563 = vunpack.c.l.b16 %v1463
      %v1564 = vunpack.c.l.b16 %v1464
      %v1565 = vunpack.c.l.b16 %v1465
      %v1566 = vunpack.c.l.b16 %v1466
      %v1567 = vunpack.c.l.b16 %v1467
      %v1568 = vunpack.c.l.b16 %v1468
      %v1569 = vunpack.c.l.b16 %v1469
      %v1570 = vunpack.c.l.b16 %v1470
      %v1571 = vunpack.c.l.b16 %v1471
      %v1572 = vunpack.c.l.b16 %v1472
      %v1573 = vunpack.c.l.b16 %v1473
      %v1574 = vunpack.c.l.b16 %v1474
      %v1575 = vunpack.c.l.b16 %v1475
      %v1576 = vunpack.c.l.b16 %v1476
      %v1577 = vunpack.c.l.b16 %v1477
      %v1578 = vunpack.c.l.b16 %v1478
      %v1579 = vunpack.c.l.b16 %v1479
      %v1580 = vunpack.c.l.b16 %v1480
      %v1581 = vunpack.c.l.b16 %v1481
      %v1582 = vunpack.c.l.b16 %v1482
      %v1583 = vunpack.c.l.b16 %v1483
      %v1584 = vunpack.c.l.b16 %v1484
      %v1585 = vunpack.c.l.b16 %v1485
      %v1586 = vunpack.c.l.b16 %v1486
      %v1587 = vunpack.c.l.b16 %v1487
      %v1588 = vunpack.c.l.b16 %v1488
      %v1589 = vunpack.c.l.b16 %v1489
      %v1590 = vunpack.c.l.b16 %v1490
      %v1591 = vunpack.c.l.b16 %v1491
      %v1592 = vunpack.c.l.b16 %v1492
      %v1593 = vunpack.c.l.b16 %v1493
      %v1594 = vunpack.c.l.b16 %v1494
      %v1595 = vunpack.c.l.b16 %v1495
      %v1596 = vunpack.c.l.b16 %v1496
      %v1597 = vunpack.c.l.b16 %v1497
      %v1598 = vunpack.c.l.b16 %v1498
      %v1599 = vpack.c.b16 %v1552, %v1551
      %v1600 = vpack.c.b16 %v1554, %v1553
      %v1601 = vpack.c.b16 %v1556, %v1555
      %v1602 = vpack.c.b16 %v1558, %v1557
      %v1603 = vpack.c.b16 %v1560, %v1559
      %v1604 = vpack.c.b16 %v1562, %v1561
      %v1605 = vpack.c.b16 %v1564, %v1563
      %v1606 = vpack.c.b16 %v1566, %v1565
      %v1607 = vpack.c.b16 %v1568, %v1567
      %v1608 = vpack.c.b16 %v1570, %v1569
      %v1609 = vpack.c.b16 %v1572, %v1571
      %v1610 = vpack.c.b16 %v1574, %v1573
      %v1611 = vpack.c.b16 %v1576, %v1575
      %v1612 = vpack.c.b16 %v1578, %v1577
      %v1613 = vpack.c.b16 %v1580, %v1579
      %v1614 = vpack.c.b16 %v1582, %v1581
      %v1615 = vpack.c.b16 %v1584, %v1583
      %v1616 = vpack.c.b16 %v1586, %v1585
      %v1617 = vpack.c.b16 %v1588, %v1587
      %v1618 = vpack.c.b16 %v1590, %v1589
      %v1619 = vpack.c.b16 %v1592, %v1591
      %v1620 = vpack.c.b16 %v1594, %v1593
      %v1621 = vpack.c.b16 %v1596, %v1595
      %v1622 = vpack.c.b16 %v1598, %v1597
      %v1626 = vunpack.c.l.b16 %v1500
      %v1627 = vunpack.c.l.b16 %v1501
      %v1628 = vunpack.c.l.b16 %v1502
      %v1629 = vpack.c.b16 %v1627, %v1626
      %v1630 = vpack.c.b16 %v1628, %v1628
      %v1633 = vsel %vm466, %v1599, 0
      %v1636 = vsel %vm466, %v1600, 0
      %v1639 = vsel %vm466, %v1601, 0
      %v1642 = vsel %vm466, %v1602, 0
      %v1645 = vsel %vm466, %v1603, 0
      %v1648 = vsel %vm466, %v1604, 0
      %v1651 = vsel %vm466, %v1605, 0
      %v1654 = vsel %vm466, %v1606, 0
      %v1657 = vsel %vm466, %v1607, 0
      %v1660 = vsel %vm466, %v1608, 0
      %v1663 = vsel %vm466, %v1609, 0
      %v1666 = vsel %vm466, %v1610, 0
      %v1669 = vsel %vm466, %v1611, 0
      %v1672 = vsel %vm466, %v1612, 0
      %v1675 = vsel %vm466, %v1613, 0
      %v1678 = vsel %vm466, %v1614, 0
      %v1681 = vsel %vm466, %v1615, 0
      %v1684 = vsel %vm466, %v1616, 0
      %v1687 = vsel %vm466, %v1617, 0
      %v1690 = vsel %vm466, %v1618, 0
      %v1693 = vsel %vm466, %v1619, 0
      %v1696 = vsel %vm466, %v1620, 0
      %v1699 = vsel %vm466, %v1621, 0
      %v1702 = vsel %vm466, %v1622, 0
      %v1705 = vsel %vm539, %v1630, 0
      %1707 = vmatprep.subr.bf16.mxu0 0
      %1708 = vmatpush1.bf16.msra.mxu0 0
      %1709 = vmatprep.subr.bf16.mxu0 0
      %1710 = vmatpush1.bf16.msra.mxu0 0
      %1711 = vmatprep.subr.bf16.mxu0 0
      %1712 = vmatpush1.bf16.msra.mxu0 0
      %1713 = vmatprep.subr.bf16.mxu0 0
      %1714 = vmatpush1.bf16.msra.mxu0 0
      %1715 = vmatprep.subr.bf16.mxu0 0
      %1716 = vmatpush1.bf16.msra.mxu0 0
      %1717 = vmatprep.subr.bf16.mxu0 0
      %1718 = vmatpush1.bf16.msra.mxu0 0
      %1719 = vmatprep.subr.bf16.mxu0 0
      %1720 = vmatpush1.bf16.msra.mxu0 %v1705
      %1721 = vmatprep.subr.bf16.mxu0 0
      %1722 = vmatpush1.bf16.msra.mxu0 %v1629
      %1723 = vmatprep.subr.bf16.mxu0 0
      %1724 = vmatpush2.bf16.msra.mxu0 0
      %1725 = vmatprep.subr.bf16.mxu0 0
      %1726 = vmatpush2.bf16.msra.mxu0 0
      %1727 = vmatprep.subr.bf16.mxu0 0
      %1728 = vmatpush2.bf16.msra.mxu0 0
      %1729 = vmatprep.subr.bf16.mxu0 0
      %1730 = vmatpush2.bf16.msra.mxu0 0
      %1731 = vmatprep.subr.bf16.mxu0 0
      %1732 = vmatpush2.bf16.msra.mxu0 0
      %1733 = vmatprep.subr.bf16.mxu0 0
      %1734 = vmatpush2.bf16.msra.mxu0 0
      %1735 = vmatprep.subr.bf16.mxu0 0
      %1736 = vmatpush2.bf16.msra.mxu0 0
      %1737 = vmatprep.subr.bf16.mxu0 0
      %1738 = vmatpush2.bf16.msra.mxu0 0
      %1739 = vmatprep.mubr.bf16.mxu0 0
      %1740 = vmatmul.mubr.bf16.gmra.mxu0 %v1633
      %v1741 = vpop.f32.mrf.mxu0
      %v1742 = vadd.f32 0.0, %v1741
      %v1743 = vpop.f32.mrf.mxu0
      %v1744 = vpop.f32.mrf.mxu0
      %v1745 = vadd.f32 0.0, %v1744
      %v1746 = vpop.f32.mrf.mxu0
      %1747 = vmatprep.mubr.bf16.mxu0 0
      %1748 = vmatmul.mubr.bf16.gmra.mxu0 %v1636
      %v1749 = vpop.f32.mrf.mxu0
      %v1750 = vadd.f32 0.0, %v1749
      %v1751 = vpop.f32.mrf.mxu0
      %v1752 = vpop.f32.mrf.mxu0
      %v1753 = vadd.f32 0.0, %v1752
      %v1754 = vpop.f32.mrf.mxu0
      %1755 = vmatprep.mubr.bf16.mxu0 0
      %1756 = vmatmul.mubr.bf16.gmra.mxu0 %v1639
      %v1757 = vpop.f32.mrf.mxu0
      %v1758 = vadd.f32 0.0, %v1757
      %v1759 = vpop.f32.mrf.mxu0
      %v1760 = vpop.f32.mrf.mxu0
      %v1761 = vadd.f32 0.0, %v1760
      %v1762 = vpop.f32.mrf.mxu0
      %1763 = vmatprep.mubr.bf16.mxu0 0
      %1764 = vmatmul.mubr.bf16.gmra.mxu0 %v1642
      %v1765 = vpop.f32.mrf.mxu0
      %v1766 = vadd.f32 0.0, %v1765
      %v1767 = vpop.f32.mrf.mxu0
      %v1768 = vpop.f32.mrf.mxu0
      %v1769 = vadd.f32 0.0, %v1768
      %v1770 = vpop.f32.mrf.mxu0
      %1771 = vmatprep.mubr.bf16.mxu0 0
      %1772 = vmatmul.mubr.bf16.gmra.mxu0 %v1645
      %v1773 = vpop.f32.mrf.mxu0
      %v1774 = vadd.f32 0.0, %v1773
      %v1775 = vpop.f32.mrf.mxu0
      %v1776 = vpop.f32.mrf.mxu0
      %v1777 = vadd.f32 0.0, %v1776
      %v1778 = vpop.f32.mrf.mxu0
      %1779 = vmatprep.mubr.bf16.mxu0 0
      %1780 = vmatmul.mubr.bf16.gmra.mxu0 %v1648
      %v1781 = vpop.f32.mrf.mxu0
      %v1782 = vadd.f32 0.0, %v1781
      %v1783 = vpop.f32.mrf.mxu0
      %v1784 = vpop.f32.mrf.mxu0
      %v1785 = vadd.f32 0.0, %v1784
      %v1786 = vpop.f32.mrf.mxu0
      %1787 = vmatprep.mubr.bf16.mxu0 0
      %1788 = vmatmul.mubr.bf16.gmra.mxu0 %v1651
      %v1789 = vpop.f32.mrf.mxu0
      %v1790 = vadd.f32 0.0, %v1789
      %v1791 = vpop.f32.mrf.mxu0
      %v1792 = vpop.f32.mrf.mxu0
      %v1793 = vadd.f32 0.0, %v1792
      %v1794 = vpop.f32.mrf.mxu0
      %1795 = vmatprep.mubr.bf16.mxu0 0
      %1796 = vmatmul.mubr.bf16.gmra.mxu0 %v1654
      %v1797 = vpop.f32.mrf.mxu0
      %v1798 = vadd.f32 0.0, %v1797
      %v1799 = vpop.f32.mrf.mxu0
      %v1800 = vpop.f32.mrf.mxu0
      %v1801 = vadd.f32 0.0, %v1800
      %v1802 = vpop.f32.mrf.mxu0
      %1803 = vmatprep.mubr.bf16.mxu0 0
      %1804 = vmatmul.mubr.bf16.gmra.mxu0 %v1657
      %v1805 = vpop.f32.mrf.mxu0
      %v1806 = vadd.f32 0.0, %v1805
      %v1807 = vpop.f32.mrf.mxu0
      %v1808 = vpop.f32.mrf.mxu0
      %v1809 = vadd.f32 0.0, %v1808
      %v1810 = vpop.f32.mrf.mxu0
      %1811 = vmatprep.mubr.bf16.mxu0 0
      %1812 = vmatmul.mubr.bf16.gmra.mxu0 %v1660
      %v1813 = vpop.f32.mrf.mxu0
      %v1814 = vadd.f32 0.0, %v1813
      %v1815 = vpop.f32.mrf.mxu0
      %v1816 = vpop.f32.mrf.mxu0
      %v1817 = vadd.f32 0.0, %v1816
      %v1818 = vpop.f32.mrf.mxu0
      %1819 = vmatprep.mubr.bf16.mxu0 0
      %1820 = vmatmul.mubr.bf16.gmra.mxu0 %v1663
      %v1821 = vpop.f32.mrf.mxu0
      %v1822 = vadd.f32 0.0, %v1821
      %v1823 = vpop.f32.mrf.mxu0
      %v1824 = vpop.f32.mrf.mxu0
      %v1825 = vadd.f32 0.0, %v1824
      %v1826 = vpop.f32.mrf.mxu0
      %1827 = vmatprep.mubr.bf16.mxu0 0
      %1828 = vmatmul.mubr.bf16.gmra.mxu0 %v1666
      %v1829 = vpop.f32.mrf.mxu0
      %v1830 = vadd.f32 0.0, %v1829
      %v1831 = vpop.f32.mrf.mxu0
      %v1832 = vpop.f32.mrf.mxu0
      %v1833 = vadd.f32 0.0, %v1832
      %v1834 = vpop.f32.mrf.mxu0
      %1835 = vmatprep.mubr.bf16.mxu0 0
      %1836 = vmatmul.mubr.bf16.gmra.mxu0 %v1669
      %v1837 = vpop.f32.mrf.mxu0
      %v1838 = vadd.f32 0.0, %v1837
      %v1839 = vpop.f32.mrf.mxu0
      %v1840 = vpop.f32.mrf.mxu0
      %v1841 = vadd.f32 0.0, %v1840
      %v1842 = vpop.f32.mrf.mxu0
      %1843 = vmatprep.mubr.bf16.mxu0 0
      %1844 = vmatmul.mubr.bf16.gmra.mxu0 %v1672
      %v1845 = vpop.f32.mrf.mxu0
      %v1846 = vadd.f32 0.0, %v1845
      %v1847 = vpop.f32.mrf.mxu0
      %v1848 = vpop.f32.mrf.mxu0
      %v1849 = vadd.f32 0.0, %v1848
      %v1850 = vpop.f32.mrf.mxu0
      %1851 = vmatprep.mubr.bf16.mxu0 0
      %1852 = vmatmul.mubr.bf16.gmra.mxu0 %v1675
      %v1853 = vpop.f32.mrf.mxu0
      %v1854 = vadd.f32 0.0, %v1853
      %v1855 = vpop.f32.mrf.mxu0
      %v1856 = vpop.f32.mrf.mxu0
      %v1857 = vadd.f32 0.0, %v1856
      %v1858 = vpop.f32.mrf.mxu0
      %1859 = vmatprep.mubr.bf16.mxu0 0
      %1860 = vmatmul.mubr.bf16.gmra.mxu0 %v1678
      %v1861 = vpop.f32.mrf.mxu0
      %v1862 = vadd.f32 0.0, %v1861
      %v1863 = vpop.f32.mrf.mxu0
      %v1864 = vpop.f32.mrf.mxu0
      %v1865 = vadd.f32 0.0, %v1864
      %v1866 = vpop.f32.mrf.mxu0
      %1867 = vmatprep.mubr.bf16.mxu0 0
      %1868 = vmatmul.mubr.bf16.gmra.mxu0 %v1681
      %v1869 = vpop.f32.mrf.mxu0
      %v1870 = vadd.f32 0.0, %v1869
      %v1871 = vpop.f32.mrf.mxu0
      %v1872 = vpop.f32.mrf.mxu0
      %v1873 = vadd.f32 0.0, %v1872
      %v1874 = vpop.f32.mrf.mxu0
      %1875 = vmatprep.mubr.bf16.mxu0 0
      %1876 = vmatmul.mubr.bf16.gmra.mxu0 %v1684
      %v1877 = vpop.f32.mrf.mxu0
      %v1878 = vadd.f32 0.0, %v1877
      %v1879 = vpop.f32.mrf.mxu0
      %v1880 = vpop.f32.mrf.mxu0
      %v1881 = vadd.f32 0.0, %v1880
      %v1882 = vpop.f32.mrf.mxu0
      %1883 = vmatprep.mubr.bf16.mxu0 0
      %1884 = vmatmul.mubr.bf16.gmra.mxu0 %v1687
      %v1885 = vpop.f32.mrf.mxu0
      %v1886 = vadd.f32 0.0, %v1885
      %v1887 = vpop.f32.mrf.mxu0
      %v1888 = vpop.f32.mrf.mxu0
      %v1889 = vadd.f32 0.0, %v1888
      %v1890 = vpop.f32.mrf.mxu0
      %1891 = vmatprep.mubr.bf16.mxu0 0
      %1892 = vmatmul.mubr.bf16.gmra.mxu0 %v1690
      %v1893 = vpop.f32.mrf.mxu0
      %v1894 = vadd.f32 0.0, %v1893
      %v1895 = vpop.f32.mrf.mxu0
      %v1896 = vpop.f32.mrf.mxu0
      %v1897 = vadd.f32 0.0, %v1896
      %v1898 = vpop.f32.mrf.mxu0
      %1899 = vmatprep.mubr.bf16.mxu0 0
      %1900 = vmatmul.mubr.bf16.gmra.mxu0 %v1693
      %v1901 = vpop.f32.mrf.mxu0
      %v1902 = vadd.f32 0.0, %v1901
      %v1903 = vpop.f32.mrf.mxu0
      %v1904 = vpop.f32.mrf.mxu0
      %v1905 = vadd.f32 0.0, %v1904
      %v1906 = vpop.f32.mrf.mxu0
      %1907 = vmatprep.mubr.bf16.mxu0 0
      %1908 = vmatmul.mubr.bf16.gmra.mxu0 %v1696
      %v1909 = vpop.f32.mrf.mxu0
      %v1910 = vadd.f32 0.0, %v1909
      %v1911 = vpop.f32.mrf.mxu0
      %v1912 = vpop.f32.mrf.mxu0
      %v1913 = vadd.f32 0.0, %v1912
      %v1914 = vpop.f32.mrf.mxu0
      %1915 = vmatprep.mubr.bf16.mxu0 0
      %1916 = vmatmul.mubr.bf16.gmra.mxu0 %v1699
      %v1917 = vpop.f32.mrf.mxu0
      %v1918 = vadd.f32 0.0, %v1917
      %v1919 = vpop.f32.mrf.mxu0
      %v1920 = vpop.f32.mrf.mxu0
      %v1921 = vadd.f32 0.0, %v1920
      %v1922 = vpop.f32.mrf.mxu0
      %1923 = vmatprep.mubr.bf16.mxu0 0
      %1924 = vmatmul.mubr.bf16.gmra.mxu0 %v1702
      %v1925 = vpop.f32.mrf.mxu0
      %v1926 = vadd.f32 0.0, %v1925
      %v1927 = vpop.f32.mrf.mxu0
      %v1928 = vpop.f32.mrf.mxu0
      %v1929 = vadd.f32 0.0, %v1928
      %v1930 = vpop.f32.mrf.mxu0
      %1931 = vdwg.mxu0
      %v1932 = vld [vmem:[#allocation2] sm:$0xff]
      %v1933 = vld [vmem:[#allocation2 + $0x8] sm:$0xff]
      %v1934 = vld [vmem:[#allocation2 + $0x10] sm:$0xff]
      %v1935 = vld [vmem:[#allocation2 + $0x18] sm:$0xff]
      %v1936 = vld [vmem:[#allocation2 + $0x20] sm:$0xff]
      %v1937 = vld [vmem:[#allocation2 + $0x28] sm:$0xff]
      %v1938 = vld [vmem:[#allocation2 + $0x30] sm:$0xff]
      %v1939 = vld [vmem:[#allocation2 + $0x38] sm:$0xff]
      %v1940 = vld [vmem:[#allocation2 + $0x40] sm:$0xff]
      %v1941 = vld [vmem:[#allocation2 + $0x48] sm:$0xff]
      %v1942 = vld [vmem:[#allocation2 + $0x50] sm:$0xff]
      %v1943 = vld [vmem:[#allocation2 + $0x58] sm:$0xff]
      %v1944 = vld [vmem:[#allocation2 + $0x60] sm:$0xff]
      %v1945 = vld [vmem:[#allocation2 + $0x68] sm:$0xff]
      %v1946 = vld [vmem:[#allocation2 + $0x70] sm:$0xff]
      %v1947 = vld [vmem:[#allocation2 + $0x78] sm:$0xff]
      %v1948 = vld [vmem:[#allocation2 + $0x80] sm:$0xff]
      %v1949 = vld [vmem:[#allocation2 + $0x88] sm:$0xff]
      %v1950 = vld [vmem:[#allocation2 + $0x90] sm:$0xff]
      %v1951 = vld [vmem:[#allocation2 + $0x98] sm:$0xff]
      %v1952 = vld [vmem:[#allocation2 + $0xa0] sm:$0xff]
      %v1953 = vld [vmem:[#allocation2 + $0xa8] sm:$0xff]
      %v1954 = vld [vmem:[#allocation2 + $0xb0] sm:$0xff]
      %v1955 = vld [vmem:[#allocation2 + $0xb8] sm:$0xff]
      %v1956 = vld [vmem:[#allocation2 + $0xc0] sm:$0xff]
      %v1957 = vld [vmem:[#allocation2 + $0xc8] sm:$0xff]
      %v1958 = vld [vmem:[#allocation2 + $0xd0] sm:$0xff]
      %v1959 = vld [vmem:[#allocation2 + $0xd8] sm:$0xff]
      %v1960 = vld [vmem:[#allocation2 + $0xe0] sm:$0xff]
      %v1961 = vld [vmem:[#allocation2 + $0xe8] sm:$0xff]
      %v1962 = vld [vmem:[#allocation2 + $0xf0] sm:$0xff]
      %v1963 = vld [vmem:[#allocation2 + $0xf8] sm:$0xff]
      %v1964 = vld [vmem:[#allocation2 + $0x100] sm:$0xff]
      %v1965 = vld [vmem:[#allocation2 + $0x108] sm:$0xff]
      %v1966 = vld [vmem:[#allocation2 + $0x110] sm:$0xff]
      %v1967 = vld [vmem:[#allocation2 + $0x118] sm:$0xff]
      %v1968 = vld [vmem:[#allocation2 + $0x120] sm:$0xff]
      %v1969 = vld [vmem:[#allocation2 + $0x128] sm:$0xff]
      %v1970 = vld [vmem:[#allocation2 + $0x130] sm:$0xff]
      %v1971 = vld [vmem:[#allocation2 + $0x138] sm:$0xff]
      %v1972 = vld [vmem:[#allocation2 + $0x140] sm:$0xff]
      %v1973 = vld [vmem:[#allocation2 + $0x148] sm:$0xff]
      %v1974 = vld [vmem:[#allocation2 + $0x150] sm:$0xff]
      %v1975 = vld [vmem:[#allocation2 + $0x158] sm:$0xff]
      %v1976 = vld [vmem:[#allocation2 + $0x160] sm:$0xff]
      %v1977 = vld [vmem:[#allocation2 + $0x168] sm:$0xff]
      %v1978 = vld [vmem:[#allocation2 + $0x170] sm:$0xff]
      %v1979 = vld [vmem:[#allocation2 + $0x178] sm:$0xff]
      %v1980 = vadd.f32 %v1932, %v1742
      %v1981 = vadd.f32 %v1933, %v1745
      %v1982 = vadd.f32 %v1934, %v1750
      %v1983 = vadd.f32 %v1935, %v1753
      %v1984 = vadd.f32 %v1936, %v1758
      %v1985 = vadd.f32 %v1937, %v1761
      %v1986 = vadd.f32 %v1938, %v1766
      %v1987 = vadd.f32 %v1939, %v1769
      %v1988 = vadd.f32 %v1940, %v1774
      %v1989 = vadd.f32 %v1941, %v1777
      %v1990 = vadd.f32 %v1942, %v1782
      %v1991 = vadd.f32 %v1943, %v1785
      %v1992 = vadd.f32 %v1944, %v1790
      %v1993 = vadd.f32 %v1945, %v1793
      %v1994 = vadd.f32 %v1946, %v1798
      %v1995 = vadd.f32 %v1947, %v1801
      %v1996 = vadd.f32 %v1948, %v1806
      %v1997 = vadd.f32 %v1949, %v1809
      %v1998 = vadd.f32 %v1950, %v1814
      %v1999 = vadd.f32 %v1951, %v1817
      %v2000 = vadd.f32 %v1952, %v1822
      %v2001 = vadd.f32 %v1953, %v1825
      %v2002 = vadd.f32 %v1954, %v1830
      %v2003 = vadd.f32 %v1955, %v1833
      %v2004 = vadd.f32 %v1956, %v1838
      %v2005 = vadd.f32 %v1957, %v1841
      %v2006 = vadd.f32 %v1958, %v1846
      %v2007 = vadd.f32 %v1959, %v1849
      %v2008 = vadd.f32 %v1960, %v1854
      %v2009 = vadd.f32 %v1961, %v1857
      %v2010 = vadd.f32 %v1962, %v1862
      %v2011 = vadd.f32 %v1963, %v1865
      %v2012 = vadd.f32 %v1964, %v1870
      %v2013 = vadd.f32 %v1965, %v1873
      %v2014 = vadd.f32 %v1966, %v1878
      %v2015 = vadd.f32 %v1967, %v1881
      %v2016 = vadd.f32 %v1968, %v1886
      %v2017 = vadd.f32 %v1969, %v1889
      %v2018 = vadd.f32 %v1970, %v1894
      %v2019 = vadd.f32 %v1971, %v1897
      %v2020 = vadd.f32 %v1972, %v1902
      %v2021 = vadd.f32 %v1973, %v1905
      %v2022 = vadd.f32 %v1974, %v1910
      %v2023 = vadd.f32 %v1975, %v1913
      %v2024 = vadd.f32 %v1976, %v1918
      %v2025 = vadd.f32 %v1977, %v1921
      %v2026 = vadd.f32 %v1978, %v1926
      %v2027 = vadd.f32 %v1979, %v1929
      %2028 = vst [vmem:[#allocation2] sm:$0xff] %v1980
      %2029 = vst [vmem:[#allocation2 + $0x8] sm:$0xff] %v1981
      %2030 = vst [vmem:[#allocation2 + $0x10] sm:$0xff] %v1982
      %2031 = vst [vmem:[#allocation2 + $0x18] sm:$0xff] %v1983
      %2032 = vst [vmem:[#allocation2 + $0x20] sm:$0xff] %v1984
      %2033 = vst [vmem:[#allocation2 + $0x28] sm:$0xff] %v1985
      %2034 = vst [vmem:[#allocation2 + $0x30] sm:$0xff] %v1986
      %2035 = vst [vmem:[#allocation2 + $0x38] sm:$0xff] %v1987
      %2036 = vst [vmem:[#allocation2 + $0x40] sm:$0xff] %v1988
      %2037 = vst [vmem:[#allocation2 + $0x48] sm:$0xff] %v1989
      %2038 = vst [vmem:[#allocation2 + $0x50] sm:$0xff] %v1990
      %2039 = vst [vmem:[#allocation2 + $0x58] sm:$0xff] %v1991
      %2040 = vst [vmem:[#allocation2 + $0x60] sm:$0xff] %v1992
      %2041 = vst [vmem:[#allocation2 + $0x68] sm:$0xff] %v1993
      %2042 = vst [vmem:[#allocation2 + $0x70] sm:$0xff] %v1994
      %2043 = vst [vmem:[#allocation2 + $0x78] sm:$0xff] %v1995
      %2044 = vst [vmem:[#allocation2 + $0x80] sm:$0xff] %v1996
      %2045 = vst [vmem:[#allocation2 + $0x88] sm:$0xff] %v1997
      %2046 = vst [vmem:[#allocation2 + $0x90] sm:$0xff] %v1998
      %2047 = vst [vmem:[#allocation2 + $0x98] sm:$0xff] %v1999
      %2048 = vst [vmem:[#allocation2 + $0xa0] sm:$0xff] %v2000
      %2049 = vst [vmem:[#allocation2 + $0xa8] sm:$0xff] %v2001
      %2050 = vst [vmem:[#allocation2 + $0xb0] sm:$0xff] %v2002
      %2051 = vst [vmem:[#allocation2 + $0xb8] sm:$0xff] %v2003
      %2052 = vst [vmem:[#allocation2 + $0xc0] sm:$0xff] %v2004
      %2053 = vst [vmem:[#allocation2 + $0xc8] sm:$0xff] %v2005
      %2054 = vst [vmem:[#allocation2 + $0xd0] sm:$0xff] %v2006
      %2055 = vst [vmem:[#allocation2 + $0xd8] sm:$0xff] %v2007
      %2056 = vst [vmem:[#allocation2 + $0xe0] sm:$0xff] %v2008
      %2057 = vst [vmem:[#allocation2 + $0xe8] sm:$0xff] %v2009
      %2058 = vst [vmem:[#allocation2 + $0xf0] sm:$0xff] %v2010
      %2059 = vst [vmem:[#allocation2 + $0xf8] sm:$0xff] %v2011
      %2060 = vst [vmem:[#allocation2 + $0x100] sm:$0xff] %v2012
      %2061 = vst [vmem:[#allocation2 + $0x108] sm:$0xff] %v2013
      %2062 = vst [vmem:[#allocation2 + $0x110] sm:$0xff] %v2014
      %2063 = vst [vmem:[#allocation2 + $0x118] sm:$0xff] %v2015
      %2064 = vst [vmem:[#allocation2 + $0x120] sm:$0xff] %v2016
      %2065 = vst [vmem:[#allocation2 + $0x128] sm:$0xff] %v2017
      %2066 = vst [vmem:[#allocation2 + $0x130] sm:$0xff] %v2018
      %2067 = vst [vmem:[#allocation2 + $0x138] sm:$0xff] %v2019
      %2068 = vst [vmem:[#allocation2 + $0x140] sm:$0xff] %v2020
      %2069 = vst [vmem:[#allocation2 + $0x148] sm:$0xff] %v2021
      %2070 = vst [vmem:[#allocation2 + $0x150] sm:$0xff] %v2022
      %2071 = vst [vmem:[#allocation2 + $0x158] sm:$0xff] %v2023
      %2072 = vst [vmem:[#allocation2 + $0x160] sm:$0xff] %v2024
      %2073 = vst [vmem:[#allocation2 + $0x168] sm:$0xff] %v2025
      %2074 = vst [vmem:[#allocation2 + $0x170] sm:$0xff] %v2026
      %2075 = vst [vmem:[#allocation2 + $0x178] sm:$0xff] %v2027
      %v2076 = vld [vmem:[#allocation2] sm:$0xff]
      %v2077 = vld [vmem:[#allocation2 + $0x8] sm:$0xff]
      %v2078 = vld [vmem:[#allocation2 + $0x10] sm:$0xff]
      %v2079 = vld [vmem:[#allocation2 + $0x18] sm:$0xff]
      %v2080 = vld [vmem:[#allocation2 + $0x20] sm:$0xff]
      %v2081 = vld [vmem:[#allocation2 + $0x28] sm:$0xff]
      %v2082 = vld [vmem:[#allocation2 + $0x30] sm:$0xff]
      %v2083 = vld [vmem:[#allocation2 + $0x38] sm:$0xff]
      %v2084 = vld [vmem:[#allocation2 + $0x40] sm:$0xff]
      %v2085 = vld [vmem:[#allocation2 + $0x48] sm:$0xff]
      %v2086 = vld [vmem:[#allocation2 + $0x50] sm:$0xff]
      %v2087 = vld [vmem:[#allocation2 + $0x58] sm:$0xff]
      %v2088 = vld [vmem:[#allocation2 + $0x60] sm:$0xff]
      %v2089 = vld [vmem:[#allocation2 + $0x68] sm:$0xff]
      %v2090 = vld [vmem:[#allocation2 + $0x70] sm:$0xff]
      %v2091 = vld [vmem:[#allocation2 + $0x78] sm:$0xff]
      %v2092 = vld [vmem:[#allocation2 + $0x80] sm:$0xff]
      %v2093 = vld [vmem:[#allocation2 + $0x88] sm:$0xff]
      %v2094 = vld [vmem:[#allocation2 + $0x90] sm:$0xff]
      %v2095 = vld [vmem:[#allocation2 + $0x98] sm:$0xff]
      %v2096 = vld [vmem:[#allocation2 + $0xa0] sm:$0xff]
      %v2097 = vld [vmem:[#allocation2 + $0xa8] sm:$0xff]
      %v2098 = vld [vmem:[#allocation2 + $0xb0] sm:$0xff]
      %v2099 = vld [vmem:[#allocation2 + $0xb8] sm:$0xff]
      %v2100 = vld [vmem:[#allocation2 + $0xc0] sm:$0xff]
      %v2101 = vld [vmem:[#allocation2 + $0xc8] sm:$0xff]
      %v2102 = vld [vmem:[#allocation2 + $0xd0] sm:$0xff]
      %v2103 = vld [vmem:[#allocation2 + $0xd8] sm:$0xff]
      %v2104 = vld [vmem:[#allocation2 + $0xe0] sm:$0xff]
      %v2105 = vld [vmem:[#allocation2 + $0xe8] sm:$0xff]
      %v2106 = vld [vmem:[#allocation2 + $0xf0] sm:$0xff]
      %v2107 = vld [vmem:[#allocation2 + $0xf8] sm:$0xff]
      %v2108 = vld [vmem:[#allocation2 + $0x100] sm:$0xff]
      %v2109 = vld [vmem:[#allocation2 + $0x108] sm:$0xff]
      %v2110 = vld [vmem:[#allocation2 + $0x110] sm:$0xff]
      %v2111 = vld [vmem:[#allocation2 + $0x118] sm:$0xff]
      %v2112 = vld [vmem:[#allocation2 + $0x120] sm:$0xff]
      %v2113 = vld [vmem:[#allocation2 + $0x128] sm:$0xff]
      %v2114 = vld [vmem:[#allocation2 + $0x130] sm:$0xff]
      %v2115 = vld [vmem:[#allocation2 + $0x138] sm:$0xff]
      %v2116 = vld [vmem:[#allocation2 + $0x140] sm:$0xff]
      %v2117 = vld [vmem:[#allocation2 + $0x148] sm:$0xff]
      %v2118 = vld [vmem:[#allocation2 + $0x150] sm:$0xff]
      %v2119 = vld [vmem:[#allocation2 + $0x158] sm:$0xff]
      %v2120 = vld [vmem:[#allocation2 + $0x160] sm:$0xff]
      %v2121 = vld [vmem:[#allocation2 + $0x168] sm:$0xff]
      %v2122 = vld [vmem:[#allocation2 + $0x170] sm:$0xff]
      %v2123 = vld [vmem:[#allocation2 + $0x178] sm:$0xff]
      %v2124 = vld [vmem:[%s2] sm:$0xff]
      %v2125 = vld [vmem:[%s2 + $0x8] sm:$0xff]
      %v2126 = vld [vmem:[%s2 + $0x10] sm:$0xff]
      %v2127 = vld [vmem:[%s2 + $0x18] sm:$0xff]
      %v2128 = vld [vmem:[%s2 + $0x20] sm:$0xff]
      %v2129 = vld [vmem:[%s2 + $0x28] sm:$0xff]
      %v2130 = vld [vmem:[%s2 + $0x30] sm:$0xff]
      %v2131 = vld [vmem:[%s2 + $0x38] sm:$0xff]
      %v2132 = vld [vmem:[%s2 + $0x40] sm:$0xff]
      %v2133 = vld [vmem:[%s2 + $0x48] sm:$0xff]
      %v2134 = vld [vmem:[%s2 + $0x50] sm:$0xff]
      %v2135 = vld [vmem:[%s2 + $0x58] sm:$0xff]
      %v2136 = vld [vmem:[%s2 + $0x60] sm:$0xff]
      %v2137 = vld [vmem:[%s2 + $0x68] sm:$0xff]
      %v2138 = vld [vmem:[%s2 + $0x70] sm:$0xff]
      %v2139 = vld [vmem:[%s2 + $0x78] sm:$0xff]
      %v2140 = vld [vmem:[%s2 + $0x80] sm:$0xff]
      %v2141 = vld [vmem:[%s2 + $0x88] sm:$0xff]
      %v2142 = vld [vmem:[%s2 + $0x90] sm:$0xff]
      %v2143 = vld [vmem:[%s2 + $0x98] sm:$0xff]
      %v2144 = vld [vmem:[%s2 + $0xa0] sm:$0xff]
      %v2145 = vld [vmem:[%s2 + $0xa8] sm:$0xff]
      %v2146 = vld [vmem:[%s2 + $0xb0] sm:$0xff]
      %v2147 = vld [vmem:[%s2 + $0xb8] sm:$0xff]
      %v2148 = vld [vmem:[%s2 + $0xc0] sm:$0xff]
      %v2149 = vld [vmem:[%s2 + $0xc8] sm:$0xff]
      %v2150 = vld [vmem:[%s2 + $0xd0] sm:$0xff]
      %v2151 = vld [vmem:[%s2 + $0xd8] sm:$0xff]
      %v2152 = vld [vmem:[%s2 + $0xe0] sm:$0xff]
      %v2153 = vld [vmem:[%s2 + $0xe8] sm:$0xff]
      %v2154 = vld [vmem:[%s2 + $0xf0] sm:$0xff]
      %v2155 = vld [vmem:[%s2 + $0xf8] sm:$0xff]
      %v2156 = vld [vmem:[%s2 + $0x100] sm:$0xff]
      %v2157 = vld [vmem:[%s2 + $0x108] sm:$0xff]
      %v2158 = vld [vmem:[%s2 + $0x110] sm:$0xff]
      %v2159 = vld [vmem:[%s2 + $0x118] sm:$0xff]
      %v2160 = vld [vmem:[%s2 + $0x120] sm:$0xff]
      %v2161 = vld [vmem:[%s2 + $0x128] sm:$0xff]
      %v2162 = vld [vmem:[%s2 + $0x130] sm:$0xff]
      %v2163 = vld [vmem:[%s2 + $0x138] sm:$0xff]
      %v2164 = vld [vmem:[%s2 + $0x140] sm:$0xff]
      %v2165 = vld [vmem:[%s2 + $0x148] sm:$0xff]
      %v2166 = vld [vmem:[%s2 + $0x150] sm:$0xff]
      %v2167 = vld [vmem:[%s2 + $0x158] sm:$0xff]
      %v2168 = vld [vmem:[%s2 + $0x160] sm:$0xff]
      %v2169 = vld [vmem:[%s2 + $0x168] sm:$0xff]
      %v2170 = vld [vmem:[%s2 + $0x170] sm:$0xff]
      %v2171 = vld [vmem:[%s2 + $0x178] sm:$0xff]
      %2173 = vset.pattern.permute.xlu0 0
      %2174 = vperm.xlu0 %2173, %v2124
      %v2175 = vpop.permute.xlu0 %2174
      %2178 = vset.pattern.permute.xlu0 0
      %2179 = vperm.xlu0 %2178, %v2125
      %v2180 = vpop.permute.xlu0 %2179
      %2183 = vset.pattern.permute.xlu0 0
      %2184 = vperm.xlu0 %2183, %v2126
      %v2185 = vpop.permute.xlu0 %2184
      %2188 = vset.pattern.permute.xlu0 0
      %2189 = vperm.xlu0 %2188, %v2127
      %v2190 = vpop.permute.xlu0 %2189
      %2193 = vset.pattern.permute.xlu0 0
      %2194 = vperm.xlu0 %2193, %v2128
      %v2195 = vpop.permute.xlu0 %2194
      %2198 = vset.pattern.permute.xlu0 0
      %2199 = vperm.xlu0 %2198, %v2129
      %v2200 = vpop.permute.xlu0 %2199
      %2203 = vset.pattern.permute.xlu0 0
      %2204 = vperm.xlu0 %2203, %v2130
      %v2205 = vpop.permute.xlu0 %2204
      %2208 = vset.pattern.permute.xlu0 0
      %2209 = vperm.xlu0 %2208, %v2131
      %v2210 = vpop.permute.xlu0 %2209
      %2213 = vset.pattern.permute.xlu0 0
      %2214 = vperm.xlu0 %2213, %v2132
      %v2215 = vpop.permute.xlu0 %2214
      %2218 = vset.pattern.permute.xlu0 0
      %2219 = vperm.xlu0 %2218, %v2133
      %v2220 = vpop.permute.xlu0 %2219
      %2223 = vset.pattern.permute.xlu0 0
      %2224 = vperm.xlu0 %2223, %v2134
      %v2225 = vpop.permute.xlu0 %2224
      %2228 = vset.pattern.permute.xlu0 0
      %2229 = vperm.xlu0 %2228, %v2135
      %v2230 = vpop.permute.xlu0 %2229
      %2233 = vset.pattern.permute.xlu0 0
      %2234 = vperm.xlu0 %2233, %v2136
      %v2235 = vpop.permute.xlu0 %2234
      %2238 = vset.pattern.permute.xlu0 0
      %2239 = vperm.xlu0 %2238, %v2137
      %v2240 = vpop.permute.xlu0 %2239
      %2243 = vset.pattern.permute.xlu0 0
      %2244 = vperm.xlu0 %2243, %v2138
      %v2245 = vpop.permute.xlu0 %2244
      %2248 = vset.pattern.permute.xlu0 0
      %2249 = vperm.xlu0 %2248, %v2139
      %v2250 = vpop.permute.xlu0 %2249
      %2253 = vset.pattern.permute.xlu0 0
      %2254 = vperm.xlu0 %2253, %v2140
      %v2255 = vpop.permute.xlu0 %2254
      %2258 = vset.pattern.permute.xlu0 0
      %2259 = vperm.xlu0 %2258, %v2141
      %v2260 = vpop.permute.xlu0 %2259
      %2263 = vset.pattern.permute.xlu0 0
      %2264 = vperm.xlu0 %2263, %v2142
      %v2265 = vpop.permute.xlu0 %2264
      %2268 = vset.pattern.permute.xlu0 0
      %2269 = vperm.xlu0 %2268, %v2143
      %v2270 = vpop.permute.xlu0 %2269
      %2273 = vset.pattern.permute.xlu0 0
      %2274 = vperm.xlu0 %2273, %v2144
      %v2275 = vpop.permute.xlu0 %2274
      %2278 = vset.pattern.permute.xlu0 0
      %2279 = vperm.xlu0 %2278, %v2145
      %v2280 = vpop.permute.xlu0 %2279
      %2283 = vset.pattern.permute.xlu0 0
      %2284 = vperm.xlu0 %2283, %v2146
      %v2285 = vpop.permute.xlu0 %2284
      %2288 = vset.pattern.permute.xlu0 0
      %2289 = vperm.xlu0 %2288, %v2147
      %v2290 = vpop.permute.xlu0 %2289
      %2293 = vset.pattern.permute.xlu0 0
      %2294 = vperm.xlu0 %2293, %v2148
      %v2295 = vpop.permute.xlu0 %2294
      %2298 = vset.pattern.permute.xlu0 0
      %2299 = vperm.xlu0 %2298, %v2149
      %v2300 = vpop.permute.xlu0 %2299
      %2303 = vset.pattern.permute.xlu0 0
      %2304 = vperm.xlu0 %2303, %v2150
      %v2305 = vpop.permute.xlu0 %2304
      %2308 = vset.pattern.permute.xlu0 0
      %2309 = vperm.xlu0 %2308, %v2151
      %v2310 = vpop.permute.xlu0 %2309
      %2313 = vset.pattern.permute.xlu0 0
      %2314 = vperm.xlu0 %2313, %v2152
      %v2315 = vpop.permute.xlu0 %2314
      %2318 = vset.pattern.permute.xlu0 0
      %2319 = vperm.xlu0 %2318, %v2153
      %v2320 = vpop.permute.xlu0 %2319
      %2323 = vset.pattern.permute.xlu0 0
      %2324 = vperm.xlu0 %2323, %v2154
      %v2325 = vpop.permute.xlu0 %2324
      %2328 = vset.pattern.permute.xlu0 0
      %2329 = vperm.xlu0 %2328, %v2155
      %v2330 = vpop.permute.xlu0 %2329
      %2333 = vset.pattern.permute.xlu0 0
      %2334 = vperm.xlu0 %2333, %v2156
      %v2335 = vpop.permute.xlu0 %2334
      %2338 = vset.pattern.permute.xlu0 0
      %2339 = vperm.xlu0 %2338, %v2157
      %v2340 = vpop.permute.xlu0 %2339
      %2343 = vset.pattern.permute.xlu0 0
      %2344 = vperm.xlu0 %2343, %v2158
      %v2345 = vpop.permute.xlu0 %2344
      %2348 = vset.pattern.permute.xlu0 0
      %2349 = vperm.xlu0 %2348, %v2159
      %v2350 = vpop.permute.xlu0 %2349
      %2353 = vset.pattern.permute.xlu0 0
      %2354 = vperm.xlu0 %2353, %v2160
      %v2355 = vpop.permute.xlu0 %2354
      %2358 = vset.pattern.permute.xlu0 0
      %2359 = vperm.xlu0 %2358, %v2161
      %v2360 = vpop.permute.xlu0 %2359
      %2363 = vset.pattern.permute.xlu0 0
      %2364 = vperm.xlu0 %2363, %v2162
      %v2365 = vpop.permute.xlu0 %2364
      %2368 = vset.pattern.permute.xlu0 0
      %2369 = vperm.xlu0 %2368, %v2163
      %v2370 = vpop.permute.xlu0 %2369
      %2373 = vset.pattern.permute.xlu0 0
      %2374 = vperm.xlu0 %2373, %v2164
      %v2375 = vpop.permute.xlu0 %2374
      %2378 = vset.pattern.permute.xlu0 0
      %2379 = vperm.xlu0 %2378, %v2165
      %v2380 = vpop.permute.xlu0 %2379
      %2383 = vset.pattern.permute.xlu0 0
      %2384 = vperm.xlu0 %2383, %v2166
      %v2385 = vpop.permute.xlu0 %2384
      %2388 = vset.pattern.permute.xlu0 0
      %2389 = vperm.xlu0 %2388, %v2167
      %v2390 = vpop.permute.xlu0 %2389
      %2393 = vset.pattern.permute.xlu0 0
      %2394 = vperm.xlu0 %2393, %v2168
      %v2395 = vpop.permute.xlu0 %2394
      %2398 = vset.pattern.permute.xlu0 0
      %2399 = vperm.xlu0 %2398, %v2169
      %v2400 = vpop.permute.xlu0 %2399
      %2403 = vset.pattern.permute.xlu0 0
      %2404 = vperm.xlu0 %2403, %v2170
      %v2405 = vpop.permute.xlu0 %2404
      %2408 = vset.pattern.permute.xlu0 0
      %2409 = vperm.xlu0 %2408, %v2171
      %v2410 = vpop.permute.xlu0 %2409
      %v2412 = vmul.f32 %v2076, %v2175
      %v2413 = vmul.f32 %v2077, %v2180
      %v2414 = vmul.f32 %v2078, %v2185
      %v2415 = vmul.f32 %v2079, %v2190
      %v2416 = vmul.f32 %v2080, %v2195
      %v2417 = vmul.f32 %v2081, %v2200
      %v2418 = vmul.f32 %v2082, %v2205
      %v2419 = vmul.f32 %v2083, %v2210
      %v2420 = vmul.f32 %v2084, %v2215
      %v2421 = vmul.f32 %v2085, %v2220
      %v2422 = vmul.f32 %v2086, %v2225
      %v2423 = vmul.f32 %v2087, %v2230
      %v2424 = vmul.f32 %v2088, %v2235
      %v2425 = vmul.f32 %v2089, %v2240
      %v2426 = vmul.f32 %v2090, %v2245
      %v2427 = vmul.f32 %v2091, %v2250
      %v2428 = vmul.f32 %v2092, %v2255
      %v2429 = vmul.f32 %v2093, %v2260
      %v2430 = vmul.f32 %v2094, %v2265
      %v2431 = vmul.f32 %v2095, %v2270
      %v2432 = vmul.f32 %v2096, %v2275
      %v2433 = vmul.f32 %v2097, %v2280
      %v2434 = vmul.f32 %v2098, %v2285
      %v2435 = vmul.f32 %v2099, %v2290
      %v2436 = vmul.f32 %v2100, %v2295
      %v2437 = vmul.f32 %v2101, %v2300
      %v2438 = vmul.f32 %v2102, %v2305
      %v2439 = vmul.f32 %v2103, %v2310
      %v2440 = vmul.f32 %v2104, %v2315
      %v2441 = vmul.f32 %v2105, %v2320
      %v2442 = vmul.f32 %v2106, %v2325
      %v2443 = vmul.f32 %v2107, %v2330
      %v2444 = vmul.f32 %v2108, %v2335
      %v2445 = vmul.f32 %v2109, %v2340
      %v2446 = vmul.f32 %v2110, %v2345
      %v2447 = vmul.f32 %v2111, %v2350
      %v2448 = vmul.f32 %v2112, %v2355
      %v2449 = vmul.f32 %v2113, %v2360
      %v2450 = vmul.f32 %v2114, %v2365
      %v2451 = vmul.f32 %v2115, %v2370
      %v2452 = vmul.f32 %v2116, %v2375
      %v2453 = vmul.f32 %v2117, %v2380
      %v2454 = vmul.f32 %v2118, %v2385
      %v2455 = vmul.f32 %v2119, %v2390
      %v2456 = vmul.f32 %v2120, %v2395
      %v2457 = vmul.f32 %v2121, %v2400
      %v2458 = vmul.f32 %v2122, %v2405
      %v2459 = vmul.f32 %v2123, %v2410
      %v2460 = vadd.f32 %v2412, %v2413
      %v2461 = vadd.f32 %v2460, %v2414
      %v2462 = vadd.f32 %v2461, %v2415
      %v2463 = vadd.f32 %v2462, %v2416
      %v2464 = vadd.f32 %v2463, %v2417
      %v2465 = vadd.f32 %v2464, %v2418
      %v2466 = vadd.f32 %v2465, %v2419
      %v2467 = vadd.f32 %v2466, %v2420
      %v2468 = vadd.f32 %v2467, %v2421
      %v2469 = vadd.f32 %v2468, %v2422
      %v2470 = vadd.f32 %v2469, %v2423
      %v2471 = vadd.f32 %v2470, %v2424
      %v2472 = vadd.f32 %v2471, %v2425
      %v2473 = vadd.f32 %v2472, %v2426
      %v2474 = vadd.f32 %v2473, %v2427
      %v2475 = vadd.f32 %v2474, %v2428
      %v2476 = vadd.f32 %v2475, %v2429
      %v2477 = vadd.f32 %v2476, %v2430
      %v2478 = vadd.f32 %v2477, %v2431
      %v2479 = vadd.f32 %v2478, %v2432
      %v2480 = vadd.f32 %v2479, %v2433
      %v2481 = vadd.f32 %v2480, %v2434
      %v2482 = vadd.f32 %v2481, %v2435
      %v2483 = vadd.f32 %v2482, %v2436
      %v2484 = vadd.f32 %v2483, %v2437
      %v2485 = vadd.f32 %v2484, %v2438
      %v2486 = vadd.f32 %v2485, %v2439
      %v2487 = vadd.f32 %v2486, %v2440
      %v2488 = vadd.f32 %v2487, %v2441
      %v2489 = vadd.f32 %v2488, %v2442
      %v2490 = vadd.f32 %v2489, %v2443
      %v2491 = vadd.f32 %v2490, %v2444
      %v2492 = vadd.f32 %v2491, %v2445
      %v2493 = vadd.f32 %v2492, %v2446
      %v2494 = vadd.f32 %v2493, %v2447
      %v2495 = vadd.f32 %v2494, %v2448
      %v2496 = vadd.f32 %v2495, %v2449
      %v2497 = vadd.f32 %v2496, %v2450
      %v2498 = vadd.f32 %v2497, %v2451
      %v2499 = vadd.f32 %v2498, %v2452
      %v2500 = vadd.f32 %v2499, %v2453
      %v2501 = vadd.f32 %v2500, %v2454
      %v2502 = vadd.f32 %v2501, %v2455
      %v2503 = vadd.f32 %v2502, %v2456
      %v2504 = vadd.f32 %v2503, %v2457
      %v2505 = vadd.f32 %v2504, %v2458
      %v2506 = vadd.f32 %v2505, %v2459
      %v2507 = vrot.slane %v2506, 4
      %v2508 = vadd.f32 %v2506, %v2507
      %v2509 = vrot.slane %v2508, 2
      %v2510 = vadd.f32 %v2508, %v2509
      %v2511 = vrot.slane %v2510, 1
      %v2512 = vadd.f32 %v2510, %v2511
      %2513 = vst [vmem:[%s279] sm:$0x1] %v2512
      %v2514 = vmul.f32 %v2412, %v2076
      %v2515 = vmul.f32 %v2413, %v2077
      %v2516 = vmul.f32 %v2414, %v2078
      %v2517 = vmul.f32 %v2415, %v2079
      %v2518 = vmul.f32 %v2416, %v2080
      %v2519 = vmul.f32 %v2417, %v2081
      %v2520 = vmul.f32 %v2418, %v2082
      %v2521 = vmul.f32 %v2419, %v2083
      %v2522 = vmul.f32 %v2420, %v2084
      %v2523 = vmul.f32 %v2421, %v2085
      %v2524 = vmul.f32 %v2422, %v2086
      %v2525 = vmul.f32 %v2423, %v2087
      %v2526 = vmul.f32 %v2424, %v2088
      %v2527 = vmul.f32 %v2425, %v2089
      %v2528 = vmul.f32 %v2426, %v2090
      %v2529 = vmul.f32 %v2427, %v2091
      %v2530 = vmul.f32 %v2428, %v2092
      %v2531 = vmul.f32 %v2429, %v2093
      %v2532 = vmul.f32 %v2430, %v2094
      %v2533 = vmul.f32 %v2431, %v2095
      %v2534 = vmul.f32 %v2432, %v2096
      %v2535 = vmul.f32 %v2433, %v2097
      %v2536 = vmul.f32 %v2434, %v2098
      %v2537 = vmul.f32 %v2435, %v2099
      %v2538 = vmul.f32 %v2436, %v2100
      %v2539 = vmul.f32 %v2437, %v2101
      %v2540 = vmul.f32 %v2438, %v2102
      %v2541 = vmul.f32 %v2439, %v2103
      %v2542 = vmul.f32 %v2440, %v2104
      %v2543 = vmul.f32 %v2441, %v2105
      %v2544 = vmul.f32 %v2442, %v2106
      %v2545 = vmul.f32 %v2443, %v2107
      %v2546 = vmul.f32 %v2444, %v2108
      %v2547 = vmul.f32 %v2445, %v2109
      %v2548 = vmul.f32 %v2446, %v2110
      %v2549 = vmul.f32 %v2447, %v2111
      %v2550 = vmul.f32 %v2448, %v2112
      %v2551 = vmul.f32 %v2449, %v2113
      %v2552 = vmul.f32 %v2450, %v2114
      %v2553 = vmul.f32 %v2451, %v2115
      %v2554 = vmul.f32 %v2452, %v2116
      %v2555 = vmul.f32 %v2453, %v2117
      %v2556 = vmul.f32 %v2454, %v2118
      %v2557 = vmul.f32 %v2455, %v2119
      %v2558 = vmul.f32 %v2456, %v2120
      %v2559 = vmul.f32 %v2457, %v2121
      %v2560 = vmul.f32 %v2458, %v2122
      %v2561 = vmul.f32 %v2459, %v2123
      %v2562 = vadd.f32 %v2514, %v2515
      %v2563 = vadd.f32 %v2562, %v2516
      %v2564 = vadd.f32 %v2563, %v2517
      %v2565 = vadd.f32 %v2564, %v2518
      %v2566 = vadd.f32 %v2565, %v2519
      %v2567 = vadd.f32 %v2566, %v2520
      %v2568 = vadd.f32 %v2567, %v2521
      %v2569 = vadd.f32 %v2568, %v2522
      %v2570 = vadd.f32 %v2569, %v2523
      %v2571 = vadd.f32 %v2570, %v2524
      %v2572 = vadd.f32 %v2571, %v2525
      %v2573 = vadd.f32 %v2572, %v2526
      %v2574 = vadd.f32 %v2573, %v2527
      %v2575 = vadd.f32 %v2574, %v2528
      %v2576 = vadd.f32 %v2575, %v2529
      %v2577 = vadd.f32 %v2576, %v2530
      %v2578 = vadd.f32 %v2577, %v2531
      %v2579 = vadd.f32 %v2578, %v2532
      %v2580 = vadd.f32 %v2579, %v2533
      %v2581 = vadd.f32 %v2580, %v2534
      %v2582 = vadd.f32 %v2581, %v2535
      %v2583 = vadd.f32 %v2582, %v2536
      %v2584 = vadd.f32 %v2583, %v2537
      %v2585 = vadd.f32 %v2584, %v2538
      %v2586 = vadd.f32 %v2585, %v2539
      %v2587 = vadd.f32 %v2586, %v2540
      %v2588 = vadd.f32 %v2587, %v2541
      %v2589 = vadd.f32 %v2588, %v2542
      %v2590 = vadd.f32 %v2589, %v2543
      %v2591 = vadd.f32 %v2590, %v2544
      %v2592 = vadd.f32 %v2591, %v2545
      %v2593 = vadd.f32 %v2592, %v2546
      %v2594 = vadd.f32 %v2593, %v2547
      %v2595 = vadd.f32 %v2594, %v2548
      %v2596 = vadd.f32 %v2595, %v2549
      %v2597 = vadd.f32 %v2596, %v2550
      %v2598 = vadd.f32 %v2597, %v2551
      %v2599 = vadd.f32 %v2598, %v2552
      %v2600 = vadd.f32 %v2599, %v2553
      %v2601 = vadd.f32 %v2600, %v2554
      %v2602 = vadd.f32 %v2601, %v2555
      %v2603 = vadd.f32 %v2602, %v2556
      %v2604 = vadd.f32 %v2603, %v2557
      %v2605 = vadd.f32 %v2604, %v2558
      %v2606 = vadd.f32 %v2605, %v2559
      %v2607 = vadd.f32 %v2606, %v2560
      %v2608 = vadd.f32 %v2607, %v2561
      %v2609 = vrot.slane %v2608, 4
      %v2610 = vadd.f32 %v2608, %v2609
      %v2611 = vrot.slane %v2610, 2
      %v2612 = vadd.f32 %v2610, %v2611
      %v2613 = vrot.slane %v2612, 1
      %v2614 = vadd.f32 %v2612, %v2613
      %2615 = vst [vmem:[%s279 + $0x1] sm:$0x1] %v2614
      %v2616 = vpack.c.bf16 %v2077, %v2076
      %v2617 = vpack.c.bf16 %v2079, %v2078
      %v2618 = vpack.c.bf16 %v2081, %v2080
      %v2619 = vpack.c.bf16 %v2083, %v2082
      %v2620 = vpack.c.bf16 %v2085, %v2084
      %v2621 = vpack.c.bf16 %v2087, %v2086
      %v2622 = vpack.c.bf16 %v2089, %v2088
      %v2623 = vpack.c.bf16 %v2091, %v2090
      %v2624 = vpack.c.bf16 %v2093, %v2092
      %v2625 = vpack.c.bf16 %v2095, %v2094
      %v2626 = vpack.c.bf16 %v2097, %v2096
      %v2627 = vpack.c.bf16 %v2099, %v2098
      %v2628 = vpack.c.bf16 %v2101, %v2100
      %v2629 = vpack.c.bf16 %v2103, %v2102
      %v2630 = vpack.c.bf16 %v2105, %v2104
      %v2631 = vpack.c.bf16 %v2107, %v2106
      %v2632 = vpack.c.bf16 %v2109, %v2108
      %v2633 = vpack.c.bf16 %v2111, %v2110
      %v2634 = vpack.c.bf16 %v2113, %v2112
      %v2635 = vpack.c.bf16 %v2115, %v2114
      %v2636 = vpack.c.bf16 %v2117, %v2116
      %v2637 = vpack.c.bf16 %v2119, %v2118
      %v2638 = vpack.c.bf16 %v2121, %v2120
      %v2639 = vpack.c.bf16 %v2123, %v2122
      %v2664 = vunpack.c.l.b16 %v2616
      %v2665 = vunpack.c.h.b16 %v2616
      %v2666 = vunpack.c.l.b16 %v2617
      %v2667 = vunpack.c.h.b16 %v2617
      %v2668 = vunpack.c.l.b16 %v2618
      %v2669 = vunpack.c.h.b16 %v2618
      %v2670 = vunpack.c.l.b16 %v2619
      %v2671 = vunpack.c.h.b16 %v2619
      %v2672 = vunpack.c.l.b16 %v2620
      %v2673 = vunpack.c.h.b16 %v2620
      %v2674 = vunpack.c.l.b16 %v2621
      %v2675 = vunpack.c.h.b16 %v2621
      %v2676 = vunpack.c.l.b16 %v2622
      %v2677 = vunpack.c.h.b16 %v2622
      %v2678 = vunpack.c.l.b16 %v2623
      %v2679 = vunpack.c.h.b16 %v2623
      %v2680 = vunpack.c.l.b16 %v2624
      %v2681 = vunpack.c.h.b16 %v2624
      %v2682 = vunpack.c.l.b16 %v2625
      %v2683 = vunpack.c.h.b16 %v2625
      %v2684 = vunpack.c.l.b16 %v2626
      %v2685 = vunpack.c.h.b16 %v2626
      %v2686 = vunpack.c.l.b16 %v2627
      %v2687 = vunpack.c.h.b16 %v2627
      %v2688 = vunpack.c.l.b16 %v2628
      %v2689 = vunpack.c.h.b16 %v2628
      %v2690 = vunpack.c.l.b16 %v2629
      %v2691 = vunpack.c.h.b16 %v2629
      %v2692 = vunpack.c.l.b16 %v2630
      %v2693 = vunpack.c.h.b16 %v2630
      %v2694 = vunpack.c.l.b16 %v2631
      %v2695 = vunpack.c.h.b16 %v2631
      %v2696 = vunpack.c.l.b16 %v2632
      %v2697 = vunpack.c.h.b16 %v2632
      %v2698 = vunpack.c.l.b16 %v2633
      %v2699 = vunpack.c.h.b16 %v2633
      %v2700 = vunpack.c.l.b16 %v2634
      %v2701 = vunpack.c.h.b16 %v2634
      %v2702 = vunpack.c.l.b16 %v2635
      %v2703 = vunpack.c.h.b16 %v2635
      %v2704 = vunpack.c.l.b16 %v2636
      %v2705 = vunpack.c.h.b16 %v2636
      %v2706 = vunpack.c.l.b16 %v2637
      %v2707 = vunpack.c.h.b16 %v2637
      %v2708 = vunpack.c.l.b16 %v2638
      %v2709 = vunpack.c.h.b16 %v2638
      %v2710 = vunpack.c.l.b16 %v2639
      %v2711 = vunpack.c.h.b16 %v2639
      %v2712 = vpack.c.b16 %v2664, %v2664
      %v2713 = vpack.c.b16 %v2665, %v2665
      %v2714 = vpack.c.b16 %v2666, %v2666
      %v2715 = vpack.c.b16 %v2667, %v2667
      %v2716 = vpack.c.b16 %v2668, %v2668
      %v2717 = vpack.c.b16 %v2669, %v2669
      %v2718 = vpack.c.b16 %v2670, %v2670
      %v2719 = vpack.c.b16 %v2671, %v2671
      %v2720 = vpack.c.b16 %v2672, %v2672
      %v2721 = vpack.c.b16 %v2673, %v2673
      %v2722 = vpack.c.b16 %v2674, %v2674
      %v2723 = vpack.c.b16 %v2675, %v2675
      %v2724 = vpack.c.b16 %v2676, %v2676
      %v2725 = vpack.c.b16 %v2677, %v2677
      %v2726 = vpack.c.b16 %v2678, %v2678
      %v2727 = vpack.c.b16 %v2679, %v2679
      %v2728 = vpack.c.b16 %v2680, %v2680
      %v2729 = vpack.c.b16 %v2681, %v2681
      %v2730 = vpack.c.b16 %v2682, %v2682
      %v2731 = vpack.c.b16 %v2683, %v2683
      %v2732 = vpack.c.b16 %v2684, %v2684
      %v2733 = vpack.c.b16 %v2685, %v2685
      %v2734 = vpack.c.b16 %v2686, %v2686
      %v2735 = vpack.c.b16 %v2687, %v2687
      %v2736 = vpack.c.b16 %v2688, %v2688
      %v2737 = vpack.c.b16 %v2689, %v2689
      %v2738 = vpack.c.b16 %v2690, %v2690
      %v2739 = vpack.c.b16 %v2691, %v2691
      %v2740 = vpack.c.b16 %v2692, %v2692
      %v2741 = vpack.c.b16 %v2693, %v2693
      %v2742 = vpack.c.b16 %v2694, %v2694
      %v2743 = vpack.c.b16 %v2695, %v2695
      %v2744 = vpack.c.b16 %v2696, %v2696
      %v2745 = vpack.c.b16 %v2697, %v2697
      %v2746 = vpack.c.b16 %v2698, %v2698
      %v2747 = vpack.c.b16 %v2699, %v2699
      %v2748 = vpack.c.b16 %v2700, %v2700
      %v2749 = vpack.c.b16 %v2701, %v2701
      %v2750 = vpack.c.b16 %v2702, %v2702
      %v2751 = vpack.c.b16 %v2703, %v2703
      %v2752 = vpack.c.b16 %v2704, %v2704
      %v2753 = vpack.c.b16 %v2705, %v2705
      %v2754 = vpack.c.b16 %v2706, %v2706
      %v2755 = vpack.c.b16 %v2707, %v2707
      %v2756 = vpack.c.b16 %v2708, %v2708
      %v2757 = vpack.c.b16 %v2709, %v2709
      %v2758 = vpack.c.b16 %v2710, %v2710
      %v2759 = vpack.c.b16 %v2711, %v2711
      %2808 = vst [vmem:[%s268] sm:$0xf] %v2712
      %2809 = vst [vmem:[%s268 + $0x4] sm:$0xf] %v2713
      %2810 = vst [vmem:[%s268 + $0x8] sm:$0xf] %v2714
      %2811 = vst [vmem:[%s268 + $0xc] sm:$0xf] %v2715
      %2812 = vst [vmem:[%s268 + $0x10] sm:$0xf] %v2716
      %2813 = vst [vmem:[%s268 + $0x14] sm:$0xf] %v2717
      %2814 = vst [vmem:[%s268 + $0x18] sm:$0xf] %v2718
      %2815 = vst [vmem:[%s268 + $0x1c] sm:$0xf] %v2719
      %2816 = vst [vmem:[%s268 + $0x20] sm:$0xf] %v2720
      %2817 = vst [vmem:[%s268 + $0x24] sm:$0xf] %v2721
      %2818 = vst [vmem:[%s268 + $0x28] sm:$0xf] %v2722
      %2819 = vst [vmem:[%s268 + $0x2c] sm:$0xf] %v2723
      %2820 = vst [vmem:[%s268 + $0x30] sm:$0xf] %v2724
      %2821 = vst [vmem:[%s268 + $0x34] sm:$0xf] %v2725
      %2822 = vst [vmem:[%s268 + $0x38] sm:$0xf] %v2726
      %2823 = vst [vmem:[%s268 + $0x3c] sm:$0xf] %v2727
      %2824 = vst [vmem:[%s268 + $0x40] sm:$0xf] %v2728
      %2825 = vst [vmem:[%s268 + $0x44] sm:$0xf] %v2729
      %2826 = vst [vmem:[%s268 + $0x48] sm:$0xf] %v2730
      %2827 = vst [vmem:[%s268 + $0x4c] sm:$0xf] %v2731
      %2828 = vst [vmem:[%s268 + $0x50] sm:$0xf] %v2732
      %2829 = vst [vmem:[%s268 + $0x54] sm:$0xf] %v2733
      %2830 = vst [vmem:[%s268 + $0x58] sm:$0xf] %v2734
      %2831 = vst [vmem:[%s268 + $0x5c] sm:$0xf] %v2735
      %2832 = vst [vmem:[%s268 + $0x60] sm:$0xf] %v2736
      %2833 = vst [vmem:[%s268 + $0x64] sm:$0xf] %v2737
      %2834 = vst [vmem:[%s268 + $0x68] sm:$0xf] %v2738
      %2835 = vst [vmem:[%s268 + $0x6c] sm:$0xf] %v2739
      %2836 = vst [vmem:[%s268 + $0x70] sm:$0xf] %v2740
      %2837 = vst [vmem:[%s268 + $0x74] sm:$0xf] %v2741
      %2838 = vst [vmem:[%s268 + $0x78] sm:$0xf] %v2742
      %2839 = vst [vmem:[%s268 + $0x7c] sm:$0xf] %v2743
      %2840 = vst [vmem:[%s268 + $0x80] sm:$0xf] %v2744
      %2841 = vst [vmem:[%s268 + $0x84] sm:$0xf] %v2745
      %2842 = vst [vmem:[%s268 + $0x88] sm:$0xf] %v2746
      %2843 = vst [vmem:[%s268 + $0x8c] sm:$0xf] %v2747
      %2844 = vst [vmem:[%s268 + $0x90] sm:$0xf] %v2748
      %2845 = vst [vmem:[%s268 + $0x94] sm:$0xf] %v2749
      %2846 = vst [vmem:[%s268 + $0x98] sm:$0xf] %v2750
      %2847 = vst [vmem:[%s268 + $0x9c] sm:$0xf] %v2751
      %2848 = vst [vmem:[%s268 + $0xa0] sm:$0xf] %v2752
      %2849 = vst [vmem:[%s268 + $0xa4] sm:$0xf] %v2753
      %2850 = vst [vmem:[%s268 + $0xa8] sm:$0xf] %v2754
      %2851 = vst [vmem:[%s268 + $0xac] sm:$0xf] %v2755
      %2852 = vst [vmem:[%s268 + $0xb0] sm:$0xf] %v2756
      %2853 = vst [vmem:[%s268 + $0xb4] sm:$0xf] %v2757
      %2854 = vst [vmem:[%s268 + $0xb8] sm:$0xf] %v2758
      %2855 = vst [vmem:[%s268 + $0xbc] sm:$0xf] %v2759
      %s2856 = smul.u32 48, %s23
      %p2857 = scmp.lt.s32.totalorder %s21, 1
      %s2858 = scalar_select %p2857, %s21, 1
      %p2859 = scmp.lt.s32.totalorder %s2856, 47
      %s2860 = scalar_select %p2859, %s2856, 47
      %p2861 = scmp.lt.s32.totalorder %s22, 0
      %s2862 = scalar_select %p2861, %s22, 0
      %s2863 = sadd.s32 %s2862, %s2860
      %s2864 = smul.addr %s2858, 48
      %s2865 = sadd.s32 %s2863, %s2864
      %s2866 = smul.addr %s2865, 4
      %s2867 = scalar_lea.vmem %s3, %s2866
      %p2868 = scmp.lt.s32.totalorder %s21, 1
      %s2869 = scalar_select %p2868, %s21, 1
      %p2870 = scmp.lt.s32.totalorder %s23, 0
      %s2871 = scalar_select %p2870, %s23, 0
      %p2872 = scmp.lt.s32.totalorder %s22, 0
      %s2873 = scalar_select %p2872, %s22, 0
      %s2874 = sadd.s32 %s2873, %s2871
      %s2875 = sadd.s32 %s2874, %s2869
      %s2876 = smul.addr %s2875, 2
      %s2877 = scalar_lea.vmem %s4, %s2876
      // Predicated region
      $region33: #{conv_block_forward.2} parent=31 // pred_check
        %p2878 = pneg %p130
      $region34: #{conv_block_forward.2} parent=31 // pred_check_branch
        %2880 = sbr.rel (%p2878) target = $region36
      $region35: #{conv_block_forward.2} parent=31 // pred_region
        %s2881 = smul.u32 48, %s23
      $region36: #{conv_block_forward.2} parent=31 // pred_fallthru
        _
      // Predicated region
      $region37: #{conv_block_forward.2} parent=31 // pred_check
        %p2882 = pneg %p160
      $region38: #{conv_block_forward.2} parent=31 // pred_check_branch
        %2884 = sbr.rel (%p2882) target = $region40
      $region39: #{conv_block_forward.2} parent=31 // pred_region
        _
      $region40: #{conv_block_forward.2} parent=31 // pred_fallthru
        _
    $region32: #{conv_block_forward.2} parent=5 // pred_fallthru
      _
    %p2885 = scmp.le.s32.totalorder 2, %s11
    // Predicated region
    $region41: #{conv_block_forward.2} parent=5 // pred_check
      %p2886 = pneg %p2885
    $region42: #{conv_block_forward.2} parent=5 // pred_check_branch
      %2888 = sbr.rel (%p2886) target = $region44
    $region43: #{conv_block_forward.2} parent=5 // pred_region
      %s2889 = ssub.s32 %s11, 2
      // Predicated region
      $region45: #{conv_block_forward.2} parent=43 // pred_check
        %p2890 = pneg %p136
      $region46: #{conv_block_forward.2} parent=43 // pred_check_branch
        %2892 = sbr.rel (%p2890) target = $region48
      $region47: #{conv_block_forward.2} parent=43 // pred_region
        %s2893 = smul.u32 48, %s26
        %p2894 = scmp.lt.s32.totalorder %s24, 1
        %s2895 = scalar_select %p2894, %s24, 1
        %p2896 = scmp.lt.s32.totalorder %s2893, 47
        %s2897 = scalar_select %p2896, %s2893, 47
        %p2898 = scmp.lt.s32.totalorder %s25, 0
        %s2899 = scalar_select %p2898, %s25, 0
        %s2900 = sadd.s32 %s2899, %s2897
        %s2901 = smul.addr %s2895, 48
        %s2902 = sadd.s32 %s2900, %s2901
        %s2903 = smul.addr %s2902, 4
        %s2904 = scalar_lea.vmem %s3, %s2903
      $region48: #{conv_block_forward.2} parent=43 // pred_fallthru
        _
      // Predicated region
      $region49: #{conv_block_forward.2} parent=43 // pred_check
        %p2905 = pneg %p166
      $region50: #{conv_block_forward.2} parent=43 // pred_check_branch
        %2907 = sbr.rel (%p2905) target = $region52
      $region51: #{conv_block_forward.2} parent=43 // pred_region
        %p2908 = scmp.lt.s32.totalorder %s24, 1
        %s2909 = scalar_select %p2908, %s24, 1
        %p2910 = scmp.lt.s32.totalorder %s26, 0
        %s2911 = scalar_select %p2910, %s26, 0
        %p2912 = scmp.lt.s32.totalorder %s25, 0
        %s2913 = scalar_select %p2912, %s25, 0
        %s2914 = sadd.s32 %s2913, %s2911
        %s2915 = sadd.s32 %s2914, %s2909
        %s2916 = smul.addr %s2915, 2
        %s2917 = scalar_lea.vmem %s4, %s2916
      $region52: #{conv_block_forward.2} parent=43 // pred_fallthru
        _
    $region44: #{conv_block_forward.2} parent=5 // pred_fallthru
      _
  $region6: #{conv_block_forward.2} parent=0 // loop_footer
    %s15 = sadd.s32 1, %s11
  $region7: #{conv_block_forward.2} parent=0 // loop_footer_branch
    %10 = sbr.rel target = $region3
  $region8: #{conv_block_forward.2} parent=0 // loop_exit
    _

</llo_original>
